<compile_context>
chip_gen: v7x
topology: tpu7x:2x2x1
jax: 0.10.0
libtpu: 0.0.40
codegen_flags: <defaults>
</compile_context>

<pallas_src>
from functools import partial

import numpy as np
import jax
import jax.numpy as jnp
from jax.experimental import pallas as pl
from jax.experimental.pallas import tpu as pltpu


def lstm_autoencoder_kernel(src_ref,
                            w_ih_e_ref, w_hh_e_ref, b_e_ref,
                            w_hh_d_ref, b_d_ref,
                            w_comb_ref, b_comb_ref,
                            w_fc_ref, b_fc_ref,
                            out_ref,
                            x_proj_ref, h_all_ref,
                            *, seq_len, batch):
    S, B = seq_len, batch
    H = w_hh_e_ref.shape[0]

    # ---- Encoder input projection, batched over all (S*B) rows: one big
    #      bf16 MXU matmul off the recurrent critical path, bias folded in,
    #      result parked in VMEM scratch (per-step slices loaded in the loop).
    x_proj_ref[...] = (jnp.dot(src_ref[...], w_ih_e_ref[...],
                               preferred_element_type=jnp.float32)
                       + b_e_ref[...])                     # (S*B, 4H) f32

    # ---- Hoisted bias broadcasts (JAX does not CSE broadcast_in_dim).
    b_d_b = jnp.broadcast_to(b_d_ref[...], (B, 4 * H))
    b_comb_b = jnp.broadcast_to(b_comb_ref[...], (B, 4 * H))

    def sigmoid(x):
        # One tanh per sigmoid (EUP) instead of exp + divide.
        return 0.5 * jnp.tanh(0.5 * x) + 0.5

    def cell_from_gates(gates, c):
        # PyTorch gate order: input, forget, cell(g), output
        i = sigmoid(gates[:, 0 * H:1 * H])
        f = sigmoid(gates[:, 1 * H:2 * H])
        g = jnp.tanh(gates[:, 2 * H:3 * H])
        o = sigmoid(gates[:, 3 * H:4 * H])
        c_new = f * c + i * g
        h_new = o * jnp.tanh(c_new)
        return h_new, c_new

    h = jnp.zeros((B, H), jnp.float32)
    c = jnp.zeros((B, H), jnp.float32)

    # ---- Encoder: one recurrent bf16 (B,H)@(H,4H) matmul per step.
    #      Weight ref indexed at use site (no register hoist of the weights).
    for t in range(S):
        gates = (x_proj_ref[t * B:(t + 1) * B, :]
                 + jnp.dot(h.astype(jnp.bfloat16), w_hh_e_ref[...],
                           preferred_element_type=jnp.float32))
        h, c = cell_from_gates(gates, c)

    # ---- Decoder: fc folded into the recurrence -> one matmul per step.
    #      h_all row-block s holds the hidden state whose fc output lands at
    #      out row-block s (already time-reversed, matching [:, inv_idx, :]).
    # step 0: autoregressive input is zeros, so use plain w_hh_d / b_d.
    gates = (jnp.dot(h.astype(jnp.bfloat16), w_hh_d_ref[...],
                     preferred_element_type=jnp.float32) + b_d_b)
    h, c = cell_from_gates(gates, c)
    h_all_ref[(S - 1) * B:S * B, :] = h
    for t in range(1, S):
        gates = (jnp.dot(h.astype(jnp.bfloat16), w_comb_ref[...],
                         preferred_element_type=jnp.float32) + b_comb_b)
        h, c = cell_from_gates(gates, c)
        h_all_ref[(S - 1 - t) * B:(S - t) * B, :] = h

    # ---- Output projection: one batched bf16 (S*B, H) @ (H, D) matmul and a
    #      single lane-dense full-tile f32 store.
    out_ref[...] = (jnp.dot(h_all_ref[...].astype(jnp.bfloat16), w_fc_ref[...],
                            preferred_element_type=jnp.float32)
                    + b_fc_ref[...])


def lstm_autoencoder_forward(src, params):
    B, S, D = src.shape
    H = params["w_hh_e_t"].shape[0]

    # Fold the decoder fc into the recurrent weight (valid for steps t >= 1,
    # where x_t = h_t @ w_fc^T + b_fc feeds the next step's input projection).
    # Fold done in f32, cast once to bf16 for the MXU.
    hi = jax.lax.Precision.HIGHEST
    w_comb = (jnp.dot(params["w_fc_t"], params["w_ih_d_t"], precision=hi)
              + params["w_hh_d_t"])                        # (H, 4H)
    b_comb = (jnp.dot(params["b_fc"], params["w_ih_d_t"], precision=hi)
              + params["b_d"])                             # (1, 4H)

    # Time-major, flattened: row block t*B:(t+1)*B is timestep t.
    src_tm = jnp.transpose(src, (1, 0, 2)).reshape(S * B, D)

    bf = jnp.bfloat16
    vmem = pl.BlockSpec(memory_space=pltpu.MemorySpace.VMEM)
    out_flat = pl.pallas_call(
        partial(lstm_autoencoder_kernel, seq_len=S, batch=B),
        out_shape=jax.ShapeDtypeStruct((S * B, D), jnp.float32),
        in_specs=[vmem] * 10,
        out_specs=vmem,
        scratch_shapes=[pltpu.VMEM((S * B, 4 * H), jnp.float32),   # x_proj
                        pltpu.VMEM((S * B, H), jnp.float32)],      # decoder h
    )(src_tm.astype(bf),
      params["w_ih_e_t"].astype(bf), params["w_hh_e_t"].astype(bf),
      params["b_e"],
      params["w_hh_d_t"].astype(bf), params["b_d"],
      w_comb.astype(bf), b_comb,
      params["w_fc_t"].astype(bf), params["b_fc"])

    recon = jnp.transpose(out_flat.reshape(S, B, D), (1, 0, 2))  # (B, S, D)
    # Module returns [reconstruct_output, src, pred]; pred (IsolationForest) omitted.
    return recon, src


def init_params(key, input_dim, latent_dim):
    """Deterministic PyTorch-style init: U(-k, k) with k = 1/sqrt(hidden)."""
    k = 1.0 / np.sqrt(latent_dim)
    ks = jax.random.split(key, 10)

    def u(kk, shape):
        return jax.random.uniform(kk, shape, jnp.float32, -k, k)

    # Encoder LSTM (layer 0)
    w_ih_e = u(ks[0], (4 * latent_dim, input_dim))
    w_hh_e = u(ks[1], (4 * latent_dim, latent_dim))
    b_ih_e = u(ks[2], (4 * latent_dim,))
    b_hh_e = u(ks[3], (4 * latent_dim,))
    # Decoder LSTM (layer 0)
    w_ih_d = u(ks[4], (4 * latent_dim, input_dim))
    w_hh_d = u(ks[5], (4 * latent_dim, latent_dim))
    b_ih_d = u(ks[6], (4 * latent_dim,))
    b_hh_d = u(ks[7], (4 * latent_dim,))
    # Decoder fc: Linear(latent_dim, input_dim)
    w_fc = u(ks[8], (input_dim, latent_dim))
    b_fc = u(ks[9], (input_dim,))

    return {
        "w_ih_e_t": w_ih_e.T, "w_hh_e_t": w_hh_e.T,
        "b_e": (b_ih_e + b_hh_e)[None, :],
        "w_ih_d_t": w_ih_d.T, "w_hh_d_t": w_hh_d.T,
        "b_d": (b_ih_d + b_hh_d)[None, :],
        "w_fc_t": w_fc.T, "b_fc": b_fc[None, :],
    }


def reference_forward(src, params):
    """Pure-JAX f32 reference with the original (unfused) semantics."""
    B, S, D = src.shape
    H = params["w_hh_e_t"].shape[0]

    def cell(x, h, c, w_ih_t, w_hh_t, b):
        gates = x @ w_ih_t + h @ w_hh_t + b
        i = jax.nn.sigmoid(gates[:, 0 * H:1 * H])
        f = jax.nn.sigmoid(gates[:, 1 * H:2 * H])
        g = jnp.tanh(gates[:, 2 * H:3 * H])
        o = jax.nn.sigmoid(gates[:, 3 * H:4 * H])
        c = f * c + i * g
        h = o * jnp.tanh(c)
        return h, c

    h = jnp.zeros((B, H), jnp.float32)
    c = jnp.zeros((B, H), jnp.float32)
    for t in range(S):
        h, c = cell(src[:, t, :], h, c,
                    params["w_ih_e_t"], params["w_hh_e_t"], params["b_e"])
    x = jnp.zeros((B, D), jnp.float32)
    outs = []
    for t in range(S):
        h, c = cell(x, h, c,
                    params["w_ih_d_t"], params["w_hh_d_t"], params["b_d"])
        x = h @ params["w_fc_t"] + params["b_fc"]
        outs.append(x)
    out = jnp.stack(outs, axis=1)        # (B, S, D), decode order
    return out[:, ::-1, :]               # reversed along seq


if __name__ == "__main__":
    B, S, D, H = 8, 8, 128, 128   # batch, seq, input_dim, latent_dim

    key = jax.random.PRNGKey(0)
    k_x, k_p = jax.random.split(key)
    src = jax.random.normal(k_x, (B, S, D), jnp.float32)
    params = init_params(k_p, D, H)

    recon, src_out = jax.block_until_ready(lstm_autoencoder_forward(src, params))

    ref = reference_forward(src, params)
    # Tolerance relaxed vs pure f32: matmul operands are bf16 (MXU-native) and
    # the fc-into-recurrence fold reassociates matmuls; error compounds over
    # the 16 serial recurrent steps but stays well inside 3e-2.
    np.testing.assert_allclose(np.asarray(recon), np.asarray(ref),
                               rtol=3e-2, atol=3e-2)
    print("KERNEL_OK")
</pallas_src>

<mosaic_0001>
module attributes {stable_mosaic.version = 11 : i64} {
  func.func @lstm_autoencoder_kernel(%arg0: memref<64x128xbf16, #tpu.memory_space<vmem>>, %arg1: memref<128x512xbf16, #tpu.memory_space<vmem>>, %arg2: memref<128x512xbf16, #tpu.memory_space<vmem>>, %arg3: memref<1x512xf32, #tpu.memory_space<vmem>>, %arg4: memref<128x512xbf16, #tpu.memory_space<vmem>>, %arg5: memref<1x512xf32, #tpu.memory_space<vmem>>, %arg6: memref<128x512xbf16, #tpu.memory_space<vmem>>, %arg7: memref<1x512xf32, #tpu.memory_space<vmem>>, %arg8: memref<128x128xbf16, #tpu.memory_space<vmem>>, %arg9: memref<1x128xf32, #tpu.memory_space<vmem>>, %arg10: memref<64x128xf32, #tpu.memory_space<vmem>>, %arg11: memref<64x512xf32, #tpu.memory_space<vmem>>, %arg12: memref<64x128xf32, #tpu.memory_space<vmem>>) attributes {dimension_semantics = [], scalar_prefetch = 0 : i64, scratch_operands = 2 : i64, tpu.core_type = #tpu.core_type<tc>} {
    %c0 = arith.constant 0 : index
    %c0_0 = arith.constant 0 : index
    %0 = vector.load %arg0[%c0, %c0_0] : memref<64x128xbf16, #tpu.memory_space<vmem>>, vector<64x128xbf16>
    %c0_1 = arith.constant 0 : index
    %c0_2 = arith.constant 0 : index
    %1 = vector.load %arg1[%c0_1, %c0_2] : memref<128x512xbf16, #tpu.memory_space<vmem>>, vector<128x512xbf16>
    %cst = arith.constant dense<0.000000e+00> : vector<64x512xf32>
    %2 = tpu.matmul %0, %1, %cst {dimension_numbers = #tpu.dot_dimension_numbers<[1], [0], [0], [1], [0, 0, 1, 1], [], []>} : vector<64x128xbf16>, vector<128x512xbf16>, vector<64x512xf32> -> vector<64x512xf32>
    %c0_3 = arith.constant 0 : index
    %c0_4 = arith.constant 0 : index
    %3 = vector.load %arg3[%c0_3, %c0_4] : memref<1x512xf32, #tpu.memory_space<vmem>>, vector<1x512xf32>
    %4 = vector.broadcast %3 : vector<1x512xf32> to vector<64x512xf32>
    %5 = arith.addf %2, %4 : vector<64x512xf32>
    %c0_5 = arith.constant 0 : index
    %c0_6 = arith.constant 0 : index
    %6 = vector.load %arg11[%c0_5, %c0_6] : memref<64x512xf32, #tpu.memory_space<vmem>>, vector<64x512xf32>
    tpu.vector_store %arg11[%c0_5, %c0_6], %5 {strides = array<i32>} : memref<64x512xf32, #tpu.memory_space<vmem>>, vector<64x512xf32>,
    %c0_7 = arith.constant 0 : index
    %c0_8 = arith.constant 0 : index
    %7 = vector.load %arg5[%c0_7, %c0_8] : memref<1x512xf32, #tpu.memory_space<vmem>>, vector<1x512xf32>
    %8 = vector.shape_cast %7 : vector<1x512xf32> to vector<1x512xf32>
    %9 = vector.broadcast %8 : vector<1x512xf32> to vector<8x512xf32>
    %c0_9 = arith.constant 0 : index
    %c0_10 = arith.constant 0 : index
    %10 = vector.load %arg7[%c0_9, %c0_10] : memref<1x512xf32, #tpu.memory_space<vmem>>, vector<1x512xf32>
    %11 = vector.shape_cast %10 : vector<1x512xf32> to vector<1x512xf32>
    %12 = vector.broadcast %11 : vector<1x512xf32> to vector<8x512xf32>
    %cst_11 = arith.constant 0.000000e+00 : f32
    %13 = vector.broadcast %cst_11 : f32 to vector<8x128xf32>
    %cst_12 = arith.constant 0.000000e+00 : f32
    %14 = vector.broadcast %cst_12 : f32 to vector<8x128xf32>
    %c0_13 = arith.constant 0 : index
    %c0_14 = arith.constant 0 : index
    %15 = vector.load %arg11[%c0_13, %c0_14] : memref<64x512xf32, #tpu.memory_space<vmem>>, vector<8x512xf32>
    %16 = arith.truncf %13 : vector<8x128xf32> to vector<8x128xbf16>
    %c0_15 = arith.constant 0 : index
    %c0_16 = arith.constant 0 : index
    %17 = vector.load %arg2[%c0_15, %c0_16] : memref<128x512xbf16, #tpu.memory_space<vmem>>, vector<128x512xbf16>
    %cst_17 = arith.constant dense<0.000000e+00> : vector<8x512xf32>
    %18 = tpu.matmul %16, %17, %cst_17 {dimension_numbers = #tpu.dot_dimension_numbers<[1], [0], [0], [1], [0, 0, 1, 1], [], []>} : vector<8x128xbf16>, vector<128x512xbf16>, vector<8x512xf32> -> vector<8x512xf32>
    %19 = arith.addf %15, %18 : vector<8x512xf32>
    %20 = vector.extract_strided_slice %19 {offsets = [0, 0], sizes = [8, 128], strides = [1, 1]} : vector<8x512xf32> to vector<8x128xf32>
    %cst_18 = arith.constant 5.000000e-01 : f32
    %21 = vector.broadcast %cst_18 : f32 to vector<8x128xf32>
    %22 = arith.mulf %21, %20 : vector<8x128xf32>
    %23 = math.tanh %22 : vector<8x128xf32>
    %cst_19 = arith.constant 5.000000e-01 : f32
    %24 = vector.broadcast %cst_19 : f32 to vector<8x128xf32>
    %25 = arith.mulf %24, %23 : vector<8x128xf32>
    %cst_20 = arith.constant 5.000000e-01 : f32
    %26 = vector.broadcast %cst_20 : f32 to vector<8x128xf32>
    %27 = arith.addf %25, %26 : vector<8x128xf32>
    %28 = vector.extract_strided_slice %19 {offsets = [0, 128], sizes = [8, 128], strides = [1, 1]} : vector<8x512xf32> to vector<8x128xf32>
    %cst_21 = arith.constant 5.000000e-01 : f32
    %29 = vector.broadcast %cst_21 : f32 to vector<8x128xf32>
    %30 = arith.mulf %29, %28 : vector<8x128xf32>
    %31 = math.tanh %30 : vector<8x128xf32>
    %cst_22 = arith.constant 5.000000e-01 : f32
    %32 = vector.broadcast %cst_22 : f32 to vector<8x128xf32>
    %33 = arith.mulf %32, %31 : vector<8x128xf32>
    %cst_23 = arith.constant 5.000000e-01 : f32
    %34 = vector.broadcast %cst_23 : f32 to vector<8x128xf32>
    %35 = arith.addf %33, %34 : vector<8x128xf32>
    %36 = vector.extract_strided_slice %19 {offsets = [0, 256], sizes = [8, 128], strides = [1, 1]} : vector<8x512xf32> to vector<8x128xf32>
    %37 = math.tanh %36 : vector<8x128xf32>
    %38 = vector.extract_strided_slice %19 {offsets = [0, 384], sizes = [8, 128], strides = [1, 1]} : vector<8x512xf32> to vector<8x128xf32>
    %cst_24 = arith.constant 5.000000e-01 : f32
    %39 = vector.broadcast %cst_24 : f32 to vector<8x128xf32>
    %40 = arith.mulf %39, %38 : vector<8x128xf32>
    %41 = math.tanh %40 : vector<8x128xf32>
    %cst_25 = arith.constant 5.000000e-01 : f32
    %42 = vector.broadcast %cst_25 : f32 to vector<8x128xf32>
    %43 = arith.mulf %42, %41 : vector<8x128xf32>
    %cst_26 = arith.constant 5.000000e-01 : f32
    %44 = vector.broadcast %cst_26 : f32 to vector<8x128xf32>
    %45 = arith.addf %43, %44 : vector<8x128xf32>
    %46 = arith.mulf %35, %14 : vector<8x128xf32>
    %47 = arith.mulf %27, %37 : vector<8x128xf32>
    %48 = arith.addf %46, %47 : vector<8x128xf32>
    %49 = math.tanh %48 : vector<8x128xf32>
    %50 = arith.mulf %45, %49 : vector<8x128xf32>
    %c8 = arith.constant 8 : index
    %c0_27 = arith.constant 0 : index
    %51 = vector.load %arg11[%c8, %c0_27] : memref<64x512xf32, #tpu.memory_space<vmem>>, vector<8x512xf32>
    %52 = arith.truncf %50 : vector<8x128xf32> to vector<8x128xbf16>
    %c0_28 = arith.constant 0 : index
    %c0_29 = arith.constant 0 : index
    %53 = vector.load %arg2[%c0_28, %c0_29] : memref<128x512xbf16, #tpu.memory_space<vmem>>, vector<128x512xbf16>
    %cst_30 = arith.constant dense<0.000000e+00> : vector<8x512xf32>
    %54 = tpu.matmul %52, %53, %cst_30 {dimension_numbers = #tpu.dot_dimension_numbers<[1], [0], [0], [1], [0, 0, 1, 1], [], []>} : vector<8x128xbf16>, vector<128x512xbf16>, vector<8x512xf32> -> vector<8x512xf32>
    %55 = arith.addf %51, %54 : vector<8x512xf32>
    %56 = vector.extract_strided_slice %55 {offsets = [0, 0], sizes = [8, 128], strides = [1, 1]} : vector<8x512xf32> to vector<8x128xf32>
    %cst_31 = arith.constant 5.000000e-01 : f32
    %57 = vector.broadcast %cst_31 : f32 to vector<8x128xf32>
    %58 = arith.mulf %57, %56 : vector<8x128xf32>
    %59 = math.tanh %58 : vector<8x128xf32>
    %cst_32 = arith.constant 5.000000e-01 : f32
    %60 = vector.broadcast %cst_32 : f32 to vector<8x128xf32>
    %61 = arith.mulf %60, %59 : vector<8x128xf32>
    %cst_33 = arith.constant 5.000000e-01 : f32
    %62 = vector.broadcast %cst_33 : f32 to vector<8x128xf32>
    %63 = arith.addf %61, %62 : vector<8x128xf32>
    %64 = vector.extract_strided_slice %55 {offsets = [0, 128], sizes = [8, 128], strides = [1, 1]} : vector<8x512xf32> to vector<8x128xf32>
    %cst_34 = arith.constant 5.000000e-01 : f32
    %65 = vector.broadcast %cst_34 : f32 to vector<8x128xf32>
    %66 = arith.mulf %65, %64 : vector<8x128xf32>
    %67 = math.tanh %66 : vector<8x128xf32>
    %cst_35 = arith.constant 5.000000e-01 : f32
    %68 = vector.broadcast %cst_35 : f32 to vector<8x128xf32>
    %69 = arith.mulf %68, %67 : vector<8x128xf32>
    %cst_36 = arith.constant 5.000000e-01 : f32
    %70 = vector.broadcast %cst_36 : f32 to vector<8x128xf32>
    %71 = arith.addf %69, %70 : vector<8x128xf32>
    %72 = vector.extract_strided_slice %55 {offsets = [0, 256], sizes = [8, 128], strides = [1, 1]} : vector<8x512xf32> to vector<8x128xf32>
    %73 = math.tanh %72 : vector<8x128xf32>
    %74 = vector.extract_strided_slice %55 {offsets = [0, 384], sizes = [8, 128], strides = [1, 1]} : vector<8x512xf32> to vector<8x128xf32>
    %cst_37 = arith.constant 5.000000e-01 : f32
    %75 = vector.broadcast %cst_37 : f32 to vector<8x128xf32>
    %76 = arith.mulf %75, %74 : vector<8x128xf32>
    %77 = math.tanh %76 : vector<8x128xf32>
    %cst_38 = arith.constant 5.000000e-01 : f32
    %78 = vector.broadcast %cst_38 : f32 to vector<8x128xf32>
    %79 = arith.mulf %78, %77 : vector<8x128xf32>
    %cst_39 = arith.constant 5.000000e-01 : f32
    %80 = vector.broadcast %cst_39 : f32 to vector<8x128xf32>
    %81 = arith.addf %79, %80 : vector<8x128xf32>
    %82 = arith.mulf %71, %48 : vector<8x128xf32>
    %83 = arith.mulf %63, %73 : vector<8x128xf32>
    %84 = arith.addf %82, %83 : vector<8x128xf32>
    %85 = math.tanh %84 : vector<8x128xf32>
    %86 = arith.mulf %81, %85 : vector<8x128xf32>
    %c16 = arith.constant 16 : index
    %c0_40 = arith.constant 0 : index
    %87 = vector.load %arg11[%c16, %c0_40] : memref<64x512xf32, #tpu.memory_space<vmem>>, vector<8x512xf32>
    %88 = arith.truncf %86 : vector<8x128xf32> to vector<8x128xbf16>
    %c0_41 = arith.constant 0 : index
    %c0_42 = arith.constant 0 : index
    %89 = vector.load %arg2[%c0_41, %c0_42] : memref<128x512xbf16, #tpu.memory_space<vmem>>, vector<128x512xbf16>
    %cst_43 = arith.constant dense<0.000000e+00> : vector<8x512xf32>
    %90 = tpu.matmul %88, %89, %cst_43 {dimension_numbers = #tpu.dot_dimension_numbers<[1], [0], [0], [1], [0, 0, 1, 1], [], []>} : vector<8x128xbf16>, vector<128x512xbf16>, vector<8x512xf32> -> vector<8x512xf32>
    %91 = arith.addf %87, %90 : vector<8x512xf32>
    %92 = vector.extract_strided_slice %91 {offsets = [0, 0], sizes = [8, 128], strides = [1, 1]} : vector<8x512xf32> to vector<8x128xf32>
    %cst_44 = arith.constant 5.000000e-01 : f32
    %93 = vector.broadcast %cst_44 : f32 to vector<8x128xf32>
    %94 = arith.mulf %93, %92 : vector<8x128xf32>
    %95 = math.tanh %94 : vector<8x128xf32>
    %cst_45 = arith.constant 5.000000e-01 : f32
    %96 = vector.broadcast %cst_45 : f32 to vector<8x128xf32>
    %97 = arith.mulf %96, %95 : vector<8x128xf32>
    %cst_46 = arith.constant 5.000000e-01 : f32
    %98 = vector.broadcast %cst_46 : f32 to vector<8x128xf32>
    %99 = arith.addf %97, %98 : vector<8x128xf32>
    %100 = vector.extract_strided_slice %91 {offsets = [0, 128], sizes = [8, 128], strides = [1, 1]} : vector<8x512xf32> to vector<8x128xf32>
    %cst_47 = arith.constant 5.000000e-01 : f32
    %101 = vector.broadcast %cst_47 : f32 to vector<8x128xf32>
    %102 = arith.mulf %101, %100 : vector<8x128xf32>
    %103 = math.tanh %102 : vector<8x128xf32>
    %cst_48 = arith.constant 5.000000e-01 : f32
    %104 = vector.broadcast %cst_48 : f32 to vector<8x128xf32>
    %105 = arith.mulf %104, %103 : vector<8x128xf32>
    %cst_49 = arith.constant 5.000000e-01 : f32
    %106 = vector.broadcast %cst_49 : f32 to vector<8x128xf32>
    %107 = arith.addf %105, %106 : vector<8x128xf32>
    %108 = vector.extract_strided_slice %91 {offsets = [0, 256], sizes = [8, 128], strides = [1, 1]} : vector<8x512xf32> to vector<8x128xf32>
    %109 = math.tanh %108 : vector<8x128xf32>
    %110 = vector.extract_strided_slice %91 {offsets = [0, 384], sizes = [8, 128], strides = [1, 1]} : vector<8x512xf32> to vector<8x128xf32>
    %cst_50 = arith.constant 5.000000e-01 : f32
    %111 = vector.broadcast %cst_50 : f32 to vector<8x128xf32>
    %112 = arith.mulf %111, %110 : vector<8x128xf32>
    %113 = math.tanh %112 : vector<8x128xf32>
    %cst_51 = arith.constant 5.000000e-01 : f32
    %114 = vector.broadcast %cst_51 : f32 to vector<8x128xf32>
    %115 = arith.mulf %114, %113 : vector<8x128xf32>
    %cst_52 = arith.constant 5.000000e-01 : f32
    %116 = vector.broadcast %cst_52 : f32 to vector<8x128xf32>
    %117 = arith.addf %115, %116 : vector<8x128xf32>
    %118 = arith.mulf %107, %84 : vector<8x128xf32>
    %119 = arith.mulf %99, %109 : vector<8x128xf32>
    %120 = arith.addf %118, %119 : vector<8x128xf32>
    %121 = math.tanh %120 : vector<8x128xf32>
    %122 = arith.mulf %117, %121 : vector<8x128xf32>
    %c24 = arith.constant 24 : index
    %c0_53 = arith.constant 0 : index
    %123 = vector.load %arg11[%c24, %c0_53] : memref<64x512xf32, #tpu.memory_space<vmem>>, vector<8x512xf32>
    %124 = arith.truncf %122 : vector<8x128xf32> to vector<8x128xbf16>
    %c0_54 = arith.constant 0 : index
    %c0_55 = arith.constant 0 : index
    %125 = vector.load %arg2[%c0_54, %c0_55] : memref<128x512xbf16, #tpu.memory_space<vmem>>, vector<128x512xbf16>
    %cst_56 = arith.constant dense<0.000000e+00> : vector<8x512xf32>
    %126 = tpu.matmul %124, %125, %cst_56 {dimension_numbers = #tpu.dot_dimension_numbers<[1], [0], [0], [1], [0, 0, 1, 1], [], []>} : vector<8x128xbf16>, vector<128x512xbf16>, vector<8x512xf32> -> vector<8x512xf32>
    %127 = arith.addf %123, %126 : vector<8x512xf32>
    %128 = vector.extract_strided_slice %127 {offsets = [0, 0], sizes = [8, 128], strides = [1, 1]} : vector<8x512xf32> to vector<8x128xf32>
    %cst_57 = arith.constant 5.000000e-01 : f32
    %129 = vector.broadcast %cst_57 : f32 to vector<8x128xf32>
    %130 = arith.mulf %129, %128 : vector<8x128xf32>
    %131 = math.tanh %130 : vector<8x128xf32>
    %cst_58 = arith.constant 5.000000e-01 : f32
    %132 = vector.broadcast %cst_58 : f32 to vector<8x128xf32>
    %133 = arith.mulf %132, %131 : vector<8x128xf32>
    %cst_59 = arith.constant 5.000000e-01 : f32
    %134 = vector.broadcast %cst_59 : f32 to vector<8x128xf32>
    %135 = arith.addf %133, %134 : vector<8x128xf32>
    %136 = vector.extract_strided_slice %127 {offsets = [0, 128], sizes = [8, 128], strides = [1, 1]} : vector<8x512xf32> to vector<8x128xf32>
    %cst_60 = arith.constant 5.000000e-01 : f32
    %137 = vector.broadcast %cst_60 : f32 to vector<8x128xf32>
    %138 = arith.mulf %137, %136 : vector<8x128xf32>
    %139 = math.tanh %138 : vector<8x128xf32>
    %cst_61 = arith.constant 5.000000e-01 : f32
    %140 = vector.broadcast %cst_61 : f32 to vector<8x128xf32>
    %141 = arith.mulf %140, %139 : vector<8x128xf32>
    %cst_62 = arith.constant 5.000000e-01 : f32
    %142 = vector.broadcast %cst_62 : f32 to vector<8x128xf32>
    %143 = arith.addf %141, %142 : vector<8x128xf32>
    %144 = vector.extract_strided_slice %127 {offsets = [0, 256], sizes = [8, 128], strides = [1, 1]} : vector<8x512xf32> to vector<8x128xf32>
    %145 = math.tanh %144 : vector<8x128xf32>
    %146 = vector.extract_strided_slice %127 {offsets = [0, 384], sizes = [8, 128], strides = [1, 1]} : vector<8x512xf32> to vector<8x128xf32>
    %cst_63 = arith.constant 5.000000e-01 : f32
    %147 = vector.broadcast %cst_63 : f32 to vector<8x128xf32>
    %148 = arith.mulf %147, %146 : vector<8x128xf32>
    %149 = math.tanh %148 : vector<8x128xf32>
    %cst_64 = arith.constant 5.000000e-01 : f32
    %150 = vector.broadcast %cst_64 : f32 to vector<8x128xf32>
    %151 = arith.mulf %150, %149 : vector<8x128xf32>
    %cst_65 = arith.constant 5.000000e-01 : f32
    %152 = vector.broadcast %cst_65 : f32 to vector<8x128xf32>
    %153 = arith.addf %151, %152 : vector<8x128xf32>
    %154 = arith.mulf %143, %120 : vector<8x128xf32>
    %155 = arith.mulf %135, %145 : vector<8x128xf32>
    %156 = arith.addf %154, %155 : vector<8x128xf32>
    %157 = math.tanh %156 : vector<8x128xf32>
    %158 = arith.mulf %153, %157 : vector<8x128xf32>
    %c32 = arith.constant 32 : index
    %c0_66 = arith.constant 0 : index
    %159 = vector.load %arg11[%c32, %c0_66] : memref<64x512xf32, #tpu.memory_space<vmem>>, vector<8x512xf32>
    %160 = arith.truncf %158 : vector<8x128xf32> to vector<8x128xbf16>
    %c0_67 = arith.constant 0 : index
    %c0_68 = arith.constant 0 : index
    %161 = vector.load %arg2[%c0_67, %c0_68] : memref<128x512xbf16, #tpu.memory_space<vmem>>, vector<128x512xbf16>
    %cst_69 = arith.constant dense<0.000000e+00> : vector<8x512xf32>
    %162 = tpu.matmul %160, %161, %cst_69 {dimension_numbers = #tpu.dot_dimension_numbers<[1], [0], [0], [1], [0, 0, 1, 1], [], []>} : vector<8x128xbf16>, vector<128x512xbf16>, vector<8x512xf32> -> vector<8x512xf32>
    %163 = arith.addf %159, %162 : vector<8x512xf32>
    %164 = vector.extract_strided_slice %163 {offsets = [0, 0], sizes = [8, 128], strides = [1, 1]} : vector<8x512xf32> to vector<8x128xf32>
    %cst_70 = arith.constant 5.000000e-01 : f32
    %165 = vector.broadcast %cst_70 : f32 to vector<8x128xf32>
    %166 = arith.mulf %165, %164 : vector<8x128xf32>
    %167 = math.tanh %166 : vector<8x128xf32>
    %cst_71 = arith.constant 5.000000e-01 : f32
    %168 = vector.broadcast %cst_71 : f32 to vector<8x128xf32>
    %169 = arith.mulf %168, %167 : vector<8x128xf32>
    %cst_72 = arith.constant 5.000000e-01 : f32
    %170 = vector.broadcast %cst_72 : f32 to vector<8x128xf32>
    %171 = arith.addf %169, %170 : vector<8x128xf32>
    %172 = vector.extract_strided_slice %163 {offsets = [0, 128], sizes = [8, 128], strides = [1, 1]} : vector<8x512xf32> to vector<8x128xf32>
    %cst_73 = arith.constant 5.000000e-01 : f32
    %173 = vector.broadcast %cst_73 : f32 to vector<8x128xf32>
    %174 = arith.mulf %173, %172 : vector<8x128xf32>
    %175 = math.tanh %174 : vector<8x128xf32>
    %cst_74 = arith.constant 5.000000e-01 : f32
    %176 = vector.broadcast %cst_74 : f32 to vector<8x128xf32>
    %177 = arith.mulf %176, %175 : vector<8x128xf32>
    %cst_75 = arith.constant 5.000000e-01 : f32
    %178 = vector.broadcast %cst_75 : f32 to vector<8x128xf32>
    %179 = arith.addf %177, %178 : vector<8x128xf32>
    %180 = vector.extract_strided_slice %163 {offsets = [0, 256], sizes = [8, 128], strides = [1, 1]} : vector<8x512xf32> to vector<8x128xf32>
    %181 = math.tanh %180 : vector<8x128xf32>
    %182 = vector.extract_strided_slice %163 {offsets = [0, 384], sizes = [8, 128], strides = [1, 1]} : vector<8x512xf32> to vector<8x128xf32>
    %cst_76 = arith.constant 5.000000e-01 : f32
    %183 = vector.broadcast %cst_76 : f32 to vector<8x128xf32>
    %184 = arith.mulf %183, %182 : vector<8x128xf32>
    %185 = math.tanh %184 : vector<8x128xf32>
    %cst_77 = arith.constant 5.000000e-01 : f32
    %186 = vector.broadcast %cst_77 : f32 to vector<8x128xf32>
    %187 = arith.mulf %186, %185 : vector<8x128xf32>
    %cst_78 = arith.constant 5.000000e-01 : f32
    %188 = vector.broadcast %cst_78 : f32 to vector<8x128xf32>
    %189 = arith.addf %187, %188 : vector<8x128xf32>
    %190 = arith.mulf %179, %156 : vector<8x128xf32>
    %191 = arith.mulf %171, %181 : vector<8x128xf32>
    %192 = arith.addf %190, %191 : vector<8x128xf32>
    %193 = math.tanh %192 : vector<8x128xf32>
    %194 = arith.mulf %189, %193 : vector<8x128xf32>
    %c40 = arith.constant 40 : index
    %c0_79 = arith.constant 0 : index
    %195 = vector.load %arg11[%c40, %c0_79] : memref<64x512xf32, #tpu.memory_space<vmem>>, vector<8x512xf32>
    %196 = arith.truncf %194 : vector<8x128xf32> to vector<8x128xbf16>
    %c0_80 = arith.constant 0 : index
    %c0_81 = arith.constant 0 : index
    %197 = vector.load %arg2[%c0_80, %c0_81] : memref<128x512xbf16, #tpu.memory_space<vmem>>, vector<128x512xbf16>
    %cst_82 = arith.constant dense<0.000000e+00> : vector<8x512xf32>
    %198 = tpu.matmul %196, %197, %cst_82 {dimension_numbers = #tpu.dot_dimension_numbers<[1], [0], [0], [1], [0, 0, 1, 1], [], []>} : vector<8x128xbf16>, vector<128x512xbf16>, vector<8x512xf32> -> vector<8x512xf32>
    %199 = arith.addf %195, %198 : vector<8x512xf32>
    %200 = vector.extract_strided_slice %199 {offsets = [0, 0], sizes = [8, 128], strides = [1, 1]} : vector<8x512xf32> to vector<8x128xf32>
    %cst_83 = arith.constant 5.000000e-01 : f32
    %201 = vector.broadcast %cst_83 : f32 to vector<8x128xf32>
    %202 = arith.mulf %201, %200 : vector<8x128xf32>
    %203 = math.tanh %202 : vector<8x128xf32>
    %cst_84 = arith.constant 5.000000e-01 : f32
    %204 = vector.broadcast %cst_84 : f32 to vector<8x128xf32>
    %205 = arith.mulf %204, %203 : vector<8x128xf32>
    %cst_85 = arith.constant 5.000000e-01 : f32
    %206 = vector.broadcast %cst_85 : f32 to vector<8x128xf32>
    %207 = arith.addf %205, %206 : vector<8x128xf32>
    %208 = vector.extract_strided_slice %199 {offsets = [0, 128], sizes = [8, 128], strides = [1, 1]} : vector<8x512xf32> to vector<8x128xf32>
    %cst_86 = arith.constant 5.000000e-01 : f32
    %209 = vector.broadcast %cst_86 : f32 to vector<8x128xf32>
    %210 = arith.mulf %209, %208 : vector<8x128xf32>
    %211 = math.tanh %210 : vector<8x128xf32>
    %cst_87 = arith.constant 5.000000e-01 : f32
    %212 = vector.broadcast %cst_87 : f32 to vector<8x128xf32>
    %213 = arith.mulf %212, %211 : vector<8x128xf32>
    %cst_88 = arith.constant 5.000000e-01 : f32
    %214 = vector.broadcast %cst_88 : f32 to vector<8x128xf32>
    %215 = arith.addf %213, %214 : vector<8x128xf32>
    %216 = vector.extract_strided_slice %199 {offsets = [0, 256], sizes = [8, 128], strides = [1, 1]} : vector<8x512xf32> to vector<8x128xf32>
    %217 = math.tanh %216 : vector<8x128xf32>
    %218 = vector.extract_strided_slice %199 {offsets = [0, 384], sizes = [8, 128], strides = [1, 1]} : vector<8x512xf32> to vector<8x128xf32>
    %cst_89 = arith.constant 5.000000e-01 : f32
    %219 = vector.broadcast %cst_89 : f32 to vector<8x128xf32>
    %220 = arith.mulf %219, %218 : vector<8x128xf32>
    %221 = math.tanh %220 : vector<8x128xf32>
    %cst_90 = arith.constant 5.000000e-01 : f32
    %222 = vector.broadcast %cst_90 : f32 to vector<8x128xf32>
    %223 = arith.mulf %222, %221 : vector<8x128xf32>
    %cst_91 = arith.constant 5.000000e-01 : f32
    %224 = vector.broadcast %cst_91 : f32 to vector<8x128xf32>
    %225 = arith.addf %223, %224 : vector<8x128xf32>
    %226 = arith.mulf %215, %192 : vector<8x128xf32>
    %227 = arith.mulf %207, %217 : vector<8x128xf32>
    %228 = arith.addf %226, %227 : vector<8x128xf32>
    %229 = math.tanh %228 : vector<8x128xf32>
    %230 = arith.mulf %225, %229 : vector<8x128xf32>
    %c48 = arith.constant 48 : index
    %c0_92 = arith.constant 0 : index
    %231 = vector.load %arg11[%c48, %c0_92] : memref<64x512xf32, #tpu.memory_space<vmem>>, vector<8x512xf32>
    %232 = arith.truncf %230 : vector<8x128xf32> to vector<8x128xbf16>
    %c0_93 = arith.constant 0 : index
    %c0_94 = arith.constant 0 : index
    %233 = vector.load %arg2[%c0_93, %c0_94] : memref<128x512xbf16, #tpu.memory_space<vmem>>, vector<128x512xbf16>
    %cst_95 = arith.constant dense<0.000000e+00> : vector<8x512xf32>
    %234 = tpu.matmul %232, %233, %cst_95 {dimension_numbers = #tpu.dot_dimension_numbers<[1], [0], [0], [1], [0, 0, 1, 1], [], []>} : vector<8x128xbf16>, vector<128x512xbf16>, vector<8x512xf32> -> vector<8x512xf32>
    %235 = arith.addf %231, %234 : vector<8x512xf32>
    %236 = vector.extract_strided_slice %235 {offsets = [0, 0], sizes = [8, 128], strides = [1, 1]} : vector<8x512xf32> to vector<8x128xf32>
    %cst_96 = arith.constant 5.000000e-01 : f32
    %237 = vector.broadcast %cst_96 : f32 to vector<8x128xf32>
    %238 = arith.mulf %237, %236 : vector<8x128xf32>
    %239 = math.tanh %238 : vector<8x128xf32>
    %cst_97 = arith.constant 5.000000e-01 : f32
    %240 = vector.broadcast %cst_97 : f32 to vector<8x128xf32>
    %241 = arith.mulf %240, %239 : vector<8x128xf32>
    %cst_98 = arith.constant 5.000000e-01 : f32
    %242 = vector.broadcast %cst_98 : f32 to vector<8x128xf32>
    %243 = arith.addf %241, %242 : vector<8x128xf32>
    %244 = vector.extract_strided_slice %235 {offsets = [0, 128], sizes = [8, 128], strides = [1, 1]} : vector<8x512xf32> to vector<8x128xf32>
    %cst_99 = arith.constant 5.000000e-01 : f32
    %245 = vector.broadcast %cst_99 : f32 to vector<8x128xf32>
    %246 = arith.mulf %245, %244 : vector<8x128xf32>
    %247 = math.tanh %246 : vector<8x128xf32>
    %cst_100 = arith.constant 5.000000e-01 : f32
    %248 = vector.broadcast %cst_100 : f32 to vector<8x128xf32>
    %249 = arith.mulf %248, %247 : vector<8x128xf32>
    %cst_101 = arith.constant 5.000000e-01 : f32
    %250 = vector.broadcast %cst_101 : f32 to vector<8x128xf32>
    %251 = arith.addf %249, %250 : vector<8x128xf32>
    %252 = vector.extract_strided_slice %235 {offsets = [0, 256], sizes = [8, 128], strides = [1, 1]} : vector<8x512xf32> to vector<8x128xf32>
    %253 = math.tanh %252 : vector<8x128xf32>
    %254 = vector.extract_strided_slice %235 {offsets = [0, 384], sizes = [8, 128], strides = [1, 1]} : vector<8x512xf32> to vector<8x128xf32>
    %cst_102 = arith.constant 5.000000e-01 : f32
    %255 = vector.broadcast %cst_102 : f32 to vector<8x128xf32>
    %256 = arith.mulf %255, %254 : vector<8x128xf32>
    %257 = math.tanh %256 : vector<8x128xf32>
    %cst_103 = arith.constant 5.000000e-01 : f32
    %258 = vector.broadcast %cst_103 : f32 to vector<8x128xf32>
    %259 = arith.mulf %258, %257 : vector<8x128xf32>
    %cst_104 = arith.constant 5.000000e-01 : f32
    %260 = vector.broadcast %cst_104 : f32 to vector<8x128xf32>
    %261 = arith.addf %259, %260 : vector<8x128xf32>
    %262 = arith.mulf %251, %228 : vector<8x128xf32>
    %263 = arith.mulf %243, %253 : vector<8x128xf32>
    %264 = arith.addf %262, %263 : vector<8x128xf32>
    %265 = math.tanh %264 : vector<8x128xf32>
    %266 = arith.mulf %261, %265 : vector<8x128xf32>
    %c56 = arith.constant 56 : index
    %c0_105 = arith.constant 0 : index
    %267 = vector.load %arg11[%c56, %c0_105] : memref<64x512xf32, #tpu.memory_space<vmem>>, vector<8x512xf32>
    %268 = arith.truncf %266 : vector<8x128xf32> to vector<8x128xbf16>
    %c0_106 = arith.constant 0 : index
    %c0_107 = arith.constant 0 : index
    %269 = vector.load %arg2[%c0_106, %c0_107] : memref<128x512xbf16, #tpu.memory_space<vmem>>, vector<128x512xbf16>
    %cst_108 = arith.constant dense<0.000000e+00> : vector<8x512xf32>
    %270 = tpu.matmul %268, %269, %cst_108 {dimension_numbers = #tpu.dot_dimension_numbers<[1], [0], [0], [1], [0, 0, 1, 1], [], []>} : vector<8x128xbf16>, vector<128x512xbf16>, vector<8x512xf32> -> vector<8x512xf32>
    %271 = arith.addf %267, %270 : vector<8x512xf32>
    %272 = vector.extract_strided_slice %271 {offsets = [0, 0], sizes = [8, 128], strides = [1, 1]} : vector<8x512xf32> to vector<8x128xf32>
    %cst_109 = arith.constant 5.000000e-01 : f32
    %273 = vector.broadcast %cst_109 : f32 to vector<8x128xf32>
    %274 = arith.mulf %273, %272 : vector<8x128xf32>
    %275 = math.tanh %274 : vector<8x128xf32>
    %cst_110 = arith.constant 5.000000e-01 : f32
    %276 = vector.broadcast %cst_110 : f32 to vector<8x128xf32>
    %277 = arith.mulf %276, %275 : vector<8x128xf32>
    %cst_111 = arith.constant 5.000000e-01 : f32
    %278 = vector.broadcast %cst_111 : f32 to vector<8x128xf32>
    %279 = arith.addf %277, %278 : vector<8x128xf32>
    %280 = vector.extract_strided_slice %271 {offsets = [0, 128], sizes = [8, 128], strides = [1, 1]} : vector<8x512xf32> to vector<8x128xf32>
    %cst_112 = arith.constant 5.000000e-01 : f32
    %281 = vector.broadcast %cst_112 : f32 to vector<8x128xf32>
    %282 = arith.mulf %281, %280 : vector<8x128xf32>
    %283 = math.tanh %282 : vector<8x128xf32>
    %cst_113 = arith.constant 5.000000e-01 : f32
    %284 = vector.broadcast %cst_113 : f32 to vector<8x128xf32>
    %285 = arith.mulf %284, %283 : vector<8x128xf32>
    %cst_114 = arith.constant 5.000000e-01 : f32
    %286 = vector.broadcast %cst_114 : f32 to vector<8x128xf32>
    %287 = arith.addf %285, %286 : vector<8x128xf32>
    %288 = vector.extract_strided_slice %271 {offsets = [0, 256], sizes = [8, 128], strides = [1, 1]} : vector<8x512xf32> to vector<8x128xf32>
    %289 = math.tanh %288 : vector<8x128xf32>
    %290 = vector.extract_strided_slice %271 {offsets = [0, 384], sizes = [8, 128], strides = [1, 1]} : vector<8x512xf32> to vector<8x128xf32>
    %cst_115 = arith.constant 5.000000e-01 : f32
    %291 = vector.broadcast %cst_115 : f32 to vector<8x128xf32>
    %292 = arith.mulf %291, %290 : vector<8x128xf32>
    %293 = math.tanh %292 : vector<8x128xf32>
    %cst_116 = arith.constant 5.000000e-01 : f32
    %294 = vector.broadcast %cst_116 : f32 to vector<8x128xf32>
    %295 = arith.mulf %294, %293 : vector<8x128xf32>
    %cst_117 = arith.constant 5.000000e-01 : f32
    %296 = vector.broadcast %cst_117 : f32 to vector<8x128xf32>
    %297 = arith.addf %295, %296 : vector<8x128xf32>
    %298 = arith.mulf %287, %264 : vector<8x128xf32>
    %299 = arith.mulf %279, %289 : vector<8x128xf32>
    %300 = arith.addf %298, %299 : vector<8x128xf32>
    %301 = math.tanh %300 : vector<8x128xf32>
    %302 = arith.mulf %297, %301 : vector<8x128xf32>
    %303 = arith.truncf %302 : vector<8x128xf32> to vector<8x128xbf16>
    %c0_118 = arith.constant 0 : index
    %c0_119 = arith.constant 0 : index
    %304 = vector.load %arg4[%c0_118, %c0_119] : memref<128x512xbf16, #tpu.memory_space<vmem>>, vector<128x512xbf16>
    %cst_120 = arith.constant dense<0.000000e+00> : vector<8x512xf32>
    %305 = tpu.matmul %303, %304, %cst_120 {dimension_numbers = #tpu.dot_dimension_numbers<[1], [0], [0], [1], [0, 0, 1, 1], [], []>} : vector<8x128xbf16>, vector<128x512xbf16>, vector<8x512xf32> -> vector<8x512xf32>
    %306 = arith.addf %305, %9 : vector<8x512xf32>
    %307 = vector.extract_strided_slice %306 {offsets = [0, 0], sizes = [8, 128], strides = [1, 1]} : vector<8x512xf32> to vector<8x128xf32>
    %cst_121 = arith.constant 5.000000e-01 : f32
    %308 = vector.broadcast %cst_121 : f32 to vector<8x128xf32>
    %309 = arith.mulf %308, %307 : vector<8x128xf32>
    %310 = math.tanh %309 : vector<8x128xf32>
    %cst_122 = arith.constant 5.000000e-01 : f32
    %311 = vector.broadcast %cst_122 : f32 to vector<8x128xf32>
    %312 = arith.mulf %311, %310 : vector<8x128xf32>
    %cst_123 = arith.constant 5.000000e-01 : f32
    %313 = vector.broadcast %cst_123 : f32 to vector<8x128xf32>
    %314 = arith.addf %312, %313 : vector<8x128xf32>
    %315 = vector.extract_strided_slice %306 {offsets = [0, 128], sizes = [8, 128], strides = [1, 1]} : vector<8x512xf32> to vector<8x128xf32>
    %cst_124 = arith.constant 5.000000e-01 : f32
    %316 = vector.broadcast %cst_124 : f32 to vector<8x128xf32>
    %317 = arith.mulf %316, %315 : vector<8x128xf32>
    %318 = math.tanh %317 : vector<8x128xf32>
    %cst_125 = arith.constant 5.000000e-01 : f32
    %319 = vector.broadcast %cst_125 : f32 to vector<8x128xf32>
    %320 = arith.mulf %319, %318 : vector<8x128xf32>
    %cst_126 = arith.constant 5.000000e-01 : f32
    %321 = vector.broadcast %cst_126 : f32 to vector<8x128xf32>
    %322 = arith.addf %320, %321 : vector<8x128xf32>
    %323 = vector.extract_strided_slice %306 {offsets = [0, 256], sizes = [8, 128], strides = [1, 1]} : vector<8x512xf32> to vector<8x128xf32>
    %324 = math.tanh %323 : vector<8x128xf32>
    %325 = vector.extract_strided_slice %306 {offsets = [0, 384], sizes = [8, 128], strides = [1, 1]} : vector<8x512xf32> to vector<8x128xf32>
    %cst_127 = arith.constant 5.000000e-01 : f32
    %326 = vector.broadcast %cst_127 : f32 to vector<8x128xf32>
    %327 = arith.mulf %326, %325 : vector<8x128xf32>
    %328 = math.tanh %327 : vector<8x128xf32>
    %cst_128 = arith.constant 5.000000e-01 : f32
    %329 = vector.broadcast %cst_128 : f32 to vector<8x128xf32>
    %330 = arith.mulf %329, %328 : vector<8x128xf32>
    %cst_129 = arith.constant 5.000000e-01 : f32
    %331 = vector.broadcast %cst_129 : f32 to vector<8x128xf32>
    %332 = arith.addf %330, %331 : vector<8x128xf32>
    %333 = arith.mulf %322, %300 : vector<8x128xf32>
    %334 = arith.mulf %314, %324 : vector<8x128xf32>
    %335 = arith.addf %333, %334 : vector<8x128xf32>
    %336 = math.tanh %335 : vector<8x128xf32>
    %337 = arith.mulf %332, %336 : vector<8x128xf32>
    %c56_130 = arith.constant 56 : index
    %c0_131 = arith.constant 0 : index
    %338 = vector.load %arg12[%c56_130, %c0_131] : memref<64x128xf32, #tpu.memory_space<vmem>>, vector<8x128xf32>
    tpu.vector_store %arg12[%c56_130, %c0_131], %337 {strides = array<i32>} : memref<64x128xf32, #tpu.memory_space<vmem>>, vector<8x128xf32>,
    %339 = arith.truncf %337 : vector<8x128xf32> to vector<8x128xbf16>
    %c0_132 = arith.constant 0 : index
    %c0_133 = arith.constant 0 : index
    %340 = vector.load %arg6[%c0_132, %c0_133] : memref<128x512xbf16, #tpu.memory_space<vmem>>, vector<128x512xbf16>
    %cst_134 = arith.constant dense<0.000000e+00> : vector<8x512xf32>
    %341 = tpu.matmul %339, %340, %cst_134 {dimension_numbers = #tpu.dot_dimension_numbers<[1], [0], [0], [1], [0, 0, 1, 1], [], []>} : vector<8x128xbf16>, vector<128x512xbf16>, vector<8x512xf32> -> vector<8x512xf32>
    %342 = arith.addf %341, %12 : vector<8x512xf32>
    %343 = vector.extract_strided_slice %342 {offsets = [0, 0], sizes = [8, 128], strides = [1, 1]} : vector<8x512xf32> to vector<8x128xf32>
    %cst_135 = arith.constant 5.000000e-01 : f32
    %344 = vector.broadcast %cst_135 : f32 to vector<8x128xf32>
    %345 = arith.mulf %344, %343 : vector<8x128xf32>
    %346 = math.tanh %345 : vector<8x128xf32>
    %cst_136 = arith.constant 5.000000e-01 : f32
    %347 = vector.broadcast %cst_136 : f32 to vector<8x128xf32>
    %348 = arith.mulf %347, %346 : vector<8x128xf32>
    %cst_137 = arith.constant 5.000000e-01 : f32
    %349 = vector.broadcast %cst_137 : f32 to vector<8x128xf32>
    %350 = arith.addf %348, %349 : vector<8x128xf32>
    %351 = vector.extract_strided_slice %342 {offsets = [0, 128], sizes = [8, 128], strides = [1, 1]} : vector<8x512xf32> to vector<8x128xf32>
    %cst_138 = arith.constant 5.000000e-01 : f32
    %352 = vector.broadcast %cst_138 : f32 to vector<8x128xf32>
    %353 = arith.mulf %352, %351 : vector<8x128xf32>
    %354 = math.tanh %353 : vector<8x128xf32>
    %cst_139 = arith.constant 5.000000e-01 : f32
    %355 = vector.broadcast %cst_139 : f32 to vector<8x128xf32>
    %356 = arith.mulf %355, %354 : vector<8x128xf32>
    %cst_140 = arith.constant 5.000000e-01 : f32
    %357 = vector.broadcast %cst_140 : f32 to vector<8x128xf32>
    %358 = arith.addf %356, %357 : vector<8x128xf32>
    %359 = vector.extract_strided_slice %342 {offsets = [0, 256], sizes = [8, 128], strides = [1, 1]} : vector<8x512xf32> to vector<8x128xf32>
    %360 = math.tanh %359 : vector<8x128xf32>
    %361 = vector.extract_strided_slice %342 {offsets = [0, 384], sizes = [8, 128], strides = [1, 1]} : vector<8x512xf32> to vector<8x128xf32>
    %cst_141 = arith.constant 5.000000e-01 : f32
    %362 = vector.broadcast %cst_141 : f32 to vector<8x128xf32>
    %363 = arith.mulf %362, %361 : vector<8x128xf32>
    %364 = math.tanh %363 : vector<8x128xf32>
    %cst_142 = arith.constant 5.000000e-01 : f32
    %365 = vector.broadcast %cst_142 : f32 to vector<8x128xf32>
    %366 = arith.mulf %365, %364 : vector<8x128xf32>
    %cst_143 = arith.constant 5.000000e-01 : f32
    %367 = vector.broadcast %cst_143 : f32 to vector<8x128xf32>
    %368 = arith.addf %366, %367 : vector<8x128xf32>
    %369 = arith.mulf %358, %335 : vector<8x128xf32>
    %370 = arith.mulf %350, %360 : vector<8x128xf32>
    %371 = arith.addf %369, %370 : vector<8x128xf32>
    %372 = math.tanh %371 : vector<8x128xf32>
    %373 = arith.mulf %368, %372 : vector<8x128xf32>
    %c48_144 = arith.constant 48 : index
    %c0_145 = arith.constant 0 : index
    %374 = vector.load %arg12[%c48_144, %c0_145] : memref<64x128xf32, #tpu.memory_space<vmem>>, vector<8x128xf32>
    tpu.vector_store %arg12[%c48_144, %c0_145], %373 {strides = array<i32>} : memref<64x128xf32, #tpu.memory_space<vmem>>, vector<8x128xf32>,
    %375 = arith.truncf %373 : vector<8x128xf32> to vector<8x128xbf16>
    %c0_146 = arith.constant 0 : index
    %c0_147 = arith.constant 0 : index
    %376 = vector.load %arg6[%c0_146, %c0_147] : memref<128x512xbf16, #tpu.memory_space<vmem>>, vector<128x512xbf16>
    %cst_148 = arith.constant dense<0.000000e+00> : vector<8x512xf32>
    %377 = tpu.matmul %375, %376, %cst_148 {dimension_numbers = #tpu.dot_dimension_numbers<[1], [0], [0], [1], [0, 0, 1, 1], [], []>} : vector<8x128xbf16>, vector<128x512xbf16>, vector<8x512xf32> -> vector<8x512xf32>
    %378 = arith.addf %377, %12 : vector<8x512xf32>
    %379 = vector.extract_strided_slice %378 {offsets = [0, 0], sizes = [8, 128], strides = [1, 1]} : vector<8x512xf32> to vector<8x128xf32>
    %cst_149 = arith.constant 5.000000e-01 : f32
    %380 = vector.broadcast %cst_149 : f32 to vector<8x128xf32>
    %381 = arith.mulf %380, %379 : vector<8x128xf32>
    %382 = math.tanh %381 : vector<8x128xf32>
    %cst_150 = arith.constant 5.000000e-01 : f32
    %383 = vector.broadcast %cst_150 : f32 to vector<8x128xf32>
    %384 = arith.mulf %383, %382 : vector<8x128xf32>
    %cst_151 = arith.constant 5.000000e-01 : f32
    %385 = vector.broadcast %cst_151 : f32 to vector<8x128xf32>
    %386 = arith.addf %384, %385 : vector<8x128xf32>
    %387 = vector.extract_strided_slice %378 {offsets = [0, 128], sizes = [8, 128], strides = [1, 1]} : vector<8x512xf32> to vector<8x128xf32>
    %cst_152 = arith.constant 5.000000e-01 : f32
    %388 = vector.broadcast %cst_152 : f32 to vector<8x128xf32>
    %389 = arith.mulf %388, %387 : vector<8x128xf32>
    %390 = math.tanh %389 : vector<8x128xf32>
    %cst_153 = arith.constant 5.000000e-01 : f32
    %391 = vector.broadcast %cst_153 : f32 to vector<8x128xf32>
    %392 = arith.mulf %391, %390 : vector<8x128xf32>
    %cst_154 = arith.constant 5.000000e-01 : f32
    %393 = vector.broadcast %cst_154 : f32 to vector<8x128xf32>
    %394 = arith.addf %392, %393 : vector<8x128xf32>
    %395 = vector.extract_strided_slice %378 {offsets = [0, 256], sizes = [8, 128], strides = [1, 1]} : vector<8x512xf32> to vector<8x128xf32>
    %396 = math.tanh %395 : vector<8x128xf32>
    %397 = vector.extract_strided_slice %378 {offsets = [0, 384], sizes = [8, 128], strides = [1, 1]} : vector<8x512xf32> to vector<8x128xf32>
    %cst_155 = arith.constant 5.000000e-01 : f32
    %398 = vector.broadcast %cst_155 : f32 to vector<8x128xf32>
    %399 = arith.mulf %398, %397 : vector<8x128xf32>
    %400 = math.tanh %399 : vector<8x128xf32>
    %cst_156 = arith.constant 5.000000e-01 : f32
    %401 = vector.broadcast %cst_156 : f32 to vector<8x128xf32>
    %402 = arith.mulf %401, %400 : vector<8x128xf32>
    %cst_157 = arith.constant 5.000000e-01 : f32
    %403 = vector.broadcast %cst_157 : f32 to vector<8x128xf32>
    %404 = arith.addf %402, %403 : vector<8x128xf32>
    %405 = arith.mulf %394, %371 : vector<8x128xf32>
    %406 = arith.mulf %386, %396 : vector<8x128xf32>
    %407 = arith.addf %405, %406 : vector<8x128xf32>
    %408 = math.tanh %407 : vector<8x128xf32>
    %409 = arith.mulf %404, %408 : vector<8x128xf32>
    %c40_158 = arith.constant 40 : index
    %c0_159 = arith.constant 0 : index
    %410 = vector.load %arg12[%c40_158, %c0_159] : memref<64x128xf32, #tpu.memory_space<vmem>>, vector<8x128xf32>
    tpu.vector_store %arg12[%c40_158, %c0_159], %409 {strides = array<i32>} : memref<64x128xf32, #tpu.memory_space<vmem>>, vector<8x128xf32>,
    %411 = arith.truncf %409 : vector<8x128xf32> to vector<8x128xbf16>
    %c0_160 = arith.constant 0 : index
    %c0_161 = arith.constant 0 : index
    %412 = vector.load %arg6[%c0_160, %c0_161] : memref<128x512xbf16, #tpu.memory_space<vmem>>, vector<128x512xbf16>
    %cst_162 = arith.constant dense<0.000000e+00> : vector<8x512xf32>
    %413 = tpu.matmul %411, %412, %cst_162 {dimension_numbers = #tpu.dot_dimension_numbers<[1], [0], [0], [1], [0, 0, 1, 1], [], []>} : vector<8x128xbf16>, vector<128x512xbf16>, vector<8x512xf32> -> vector<8x512xf32>
    %414 = arith.addf %413, %12 : vector<8x512xf32>
    %415 = vector.extract_strided_slice %414 {offsets = [0, 0], sizes = [8, 128], strides = [1, 1]} : vector<8x512xf32> to vector<8x128xf32>
    %cst_163 = arith.constant 5.000000e-01 : f32
    %416 = vector.broadcast %cst_163 : f32 to vector<8x128xf32>
    %417 = arith.mulf %416, %415 : vector<8x128xf32>
    %418 = math.tanh %417 : vector<8x128xf32>
    %cst_164 = arith.constant 5.000000e-01 : f32
    %419 = vector.broadcast %cst_164 : f32 to vector<8x128xf32>
    %420 = arith.mulf %419, %418 : vector<8x128xf32>
    %cst_165 = arith.constant 5.000000e-01 : f32
    %421 = vector.broadcast %cst_165 : f32 to vector<8x128xf32>
    %422 = arith.addf %420, %421 : vector<8x128xf32>
    %423 = vector.extract_strided_slice %414 {offsets = [0, 128], sizes = [8, 128], strides = [1, 1]} : vector<8x512xf32> to vector<8x128xf32>
    %cst_166 = arith.constant 5.000000e-01 : f32
    %424 = vector.broadcast %cst_166 : f32 to vector<8x128xf32>
    %425 = arith.mulf %424, %423 : vector<8x128xf32>
    %426 = math.tanh %425 : vector<8x128xf32>
    %cst_167 = arith.constant 5.000000e-01 : f32
    %427 = vector.broadcast %cst_167 : f32 to vector<8x128xf32>
    %428 = arith.mulf %427, %426 : vector<8x128xf32>
    %cst_168 = arith.constant 5.000000e-01 : f32
    %429 = vector.broadcast %cst_168 : f32 to vector<8x128xf32>
    %430 = arith.addf %428, %429 : vector<8x128xf32>
    %431 = vector.extract_strided_slice %414 {offsets = [0, 256], sizes = [8, 128], strides = [1, 1]} : vector<8x512xf32> to vector<8x128xf32>
    %432 = math.tanh %431 : vector<8x128xf32>
    %433 = vector.extract_strided_slice %414 {offsets = [0, 384], sizes = [8, 128], strides = [1, 1]} : vector<8x512xf32> to vector<8x128xf32>
    %cst_169 = arith.constant 5.000000e-01 : f32
    %434 = vector.broadcast %cst_169 : f32 to vector<8x128xf32>
    %435 = arith.mulf %434, %433 : vector<8x128xf32>
    %436 = math.tanh %435 : vector<8x128xf32>
    %cst_170 = arith.constant 5.000000e-01 : f32
    %437 = vector.broadcast %cst_170 : f32 to vector<8x128xf32>
    %438 = arith.mulf %437, %436 : vector<8x128xf32>
    %cst_171 = arith.constant 5.000000e-01 : f32
    %439 = vector.broadcast %cst_171 : f32 to vector<8x128xf32>
    %440 = arith.addf %438, %439 : vector<8x128xf32>
    %441 = arith.mulf %430, %407 : vector<8x128xf32>
    %442 = arith.mulf %422, %432 : vector<8x128xf32>
    %443 = arith.addf %441, %442 : vector<8x128xf32>
    %444 = math.tanh %443 : vector<8x128xf32>
    %445 = arith.mulf %440, %444 : vector<8x128xf32>
    %c32_172 = arith.constant 32 : index
    %c0_173 = arith.constant 0 : index
    %446 = vector.load %arg12[%c32_172, %c0_173] : memref<64x128xf32, #tpu.memory_space<vmem>>, vector<8x128xf32>
    tpu.vector_store %arg12[%c32_172, %c0_173], %445 {strides = array<i32>} : memref<64x128xf32, #tpu.memory_space<vmem>>, vector<8x128xf32>,
    %447 = arith.truncf %445 : vector<8x128xf32> to vector<8x128xbf16>
    %c0_174 = arith.constant 0 : index
    %c0_175 = arith.constant 0 : index
    %448 = vector.load %arg6[%c0_174, %c0_175] : memref<128x512xbf16, #tpu.memory_space<vmem>>, vector<128x512xbf16>
    %cst_176 = arith.constant dense<0.000000e+00> : vector<8x512xf32>
    %449 = tpu.matmul %447, %448, %cst_176 {dimension_numbers = #tpu.dot_dimension_numbers<[1], [0], [0], [1], [0, 0, 1, 1], [], []>} : vector<8x128xbf16>, vector<128x512xbf16>, vector<8x512xf32> -> vector<8x512xf32>
    %450 = arith.addf %449, %12 : vector<8x512xf32>
    %451 = vector.extract_strided_slice %450 {offsets = [0, 0], sizes = [8, 128], strides = [1, 1]} : vector<8x512xf32> to vector<8x128xf32>
    %cst_177 = arith.constant 5.000000e-01 : f32
    %452 = vector.broadcast %cst_177 : f32 to vector<8x128xf32>
    %453 = arith.mulf %452, %451 : vector<8x128xf32>
    %454 = math.tanh %453 : vector<8x128xf32>
    %cst_178 = arith.constant 5.000000e-01 : f32
    %455 = vector.broadcast %cst_178 : f32 to vector<8x128xf32>
    %456 = arith.mulf %455, %454 : vector<8x128xf32>
    %cst_179 = arith.constant 5.000000e-01 : f32
    %457 = vector.broadcast %cst_179 : f32 to vector<8x128xf32>
    %458 = arith.addf %456, %457 : vector<8x128xf32>
    %459 = vector.extract_strided_slice %450 {offsets = [0, 128], sizes = [8, 128], strides = [1, 1]} : vector<8x512xf32> to vector<8x128xf32>
    %cst_180 = arith.constant 5.000000e-01 : f32
    %460 = vector.broadcast %cst_180 : f32 to vector<8x128xf32>
    %461 = arith.mulf %460, %459 : vector<8x128xf32>
    %462 = math.tanh %461 : vector<8x128xf32>
    %cst_181 = arith.constant 5.000000e-01 : f32
    %463 = vector.broadcast %cst_181 : f32 to vector<8x128xf32>
    %464 = arith.mulf %463, %462 : vector<8x128xf32>
    %cst_182 = arith.constant 5.000000e-01 : f32
    %465 = vector.broadcast %cst_182 : f32 to vector<8x128xf32>
    %466 = arith.addf %464, %465 : vector<8x128xf32>
    %467 = vector.extract_strided_slice %450 {offsets = [0, 256], sizes = [8, 128], strides = [1, 1]} : vector<8x512xf32> to vector<8x128xf32>
    %468 = math.tanh %467 : vector<8x128xf32>
    %469 = vector.extract_strided_slice %450 {offsets = [0, 384], sizes = [8, 128], strides = [1, 1]} : vector<8x512xf32> to vector<8x128xf32>
    %cst_183 = arith.constant 5.000000e-01 : f32
    %470 = vector.broadcast %cst_183 : f32 to vector<8x128xf32>
    %471 = arith.mulf %470, %469 : vector<8x128xf32>
    %472 = math.tanh %471 : vector<8x128xf32>
    %cst_184 = arith.constant 5.000000e-01 : f32
    %473 = vector.broadcast %cst_184 : f32 to vector<8x128xf32>
    %474 = arith.mulf %473, %472 : vector<8x128xf32>
    %cst_185 = arith.constant 5.000000e-01 : f32
    %475 = vector.broadcast %cst_185 : f32 to vector<8x128xf32>
    %476 = arith.addf %474, %475 : vector<8x128xf32>
    %477 = arith.mulf %466, %443 : vector<8x128xf32>
    %478 = arith.mulf %458, %468 : vector<8x128xf32>
    %479 = arith.addf %477, %478 : vector<8x128xf32>
    %480 = math.tanh %479 : vector<8x128xf32>
    %481 = arith.mulf %476, %480 : vector<8x128xf32>
    %c24_186 = arith.constant 24 : index
    %c0_187 = arith.constant 0 : index
    %482 = vector.load %arg12[%c24_186, %c0_187] : memref<64x128xf32, #tpu.memory_space<vmem>>, vector<8x128xf32>
    tpu.vector_store %arg12[%c24_186, %c0_187], %481 {strides = array<i32>} : memref<64x128xf32, #tpu.memory_space<vmem>>, vector<8x128xf32>,
    %483 = arith.truncf %481 : vector<8x128xf32> to vector<8x128xbf16>
    %c0_188 = arith.constant 0 : index
    %c0_189 = arith.constant 0 : index
    %484 = vector.load %arg6[%c0_188, %c0_189] : memref<128x512xbf16, #tpu.memory_space<vmem>>, vector<128x512xbf16>
    %cst_190 = arith.constant dense<0.000000e+00> : vector<8x512xf32>
    %485 = tpu.matmul %483, %484, %cst_190 {dimension_numbers = #tpu.dot_dimension_numbers<[1], [0], [0], [1], [0, 0, 1, 1], [], []>} : vector<8x128xbf16>, vector<128x512xbf16>, vector<8x512xf32> -> vector<8x512xf32>
    %486 = arith.addf %485, %12 : vector<8x512xf32>
    %487 = vector.extract_strided_slice %486 {offsets = [0, 0], sizes = [8, 128], strides = [1, 1]} : vector<8x512xf32> to vector<8x128xf32>
    %cst_191 = arith.constant 5.000000e-01 : f32
    %488 = vector.broadcast %cst_191 : f32 to vector<8x128xf32>
    %489 = arith.mulf %488, %487 : vector<8x128xf32>
    %490 = math.tanh %489 : vector<8x128xf32>
    %cst_192 = arith.constant 5.000000e-01 : f32
    %491 = vector.broadcast %cst_192 : f32 to vector<8x128xf32>
    %492 = arith.mulf %491, %490 : vector<8x128xf32>
    %cst_193 = arith.constant 5.000000e-01 : f32
    %493 = vector.broadcast %cst_193 : f32 to vector<8x128xf32>
    %494 = arith.addf %492, %493 : vector<8x128xf32>
    %495 = vector.extract_strided_slice %486 {offsets = [0, 128], sizes = [8, 128], strides = [1, 1]} : vector<8x512xf32> to vector<8x128xf32>
    %cst_194 = arith.constant 5.000000e-01 : f32
    %496 = vector.broadcast %cst_194 : f32 to vector<8x128xf32>
    %497 = arith.mulf %496, %495 : vector<8x128xf32>
    %498 = math.tanh %497 : vector<8x128xf32>
    %cst_195 = arith.constant 5.000000e-01 : f32
    %499 = vector.broadcast %cst_195 : f32 to vector<8x128xf32>
    %500 = arith.mulf %499, %498 : vector<8x128xf32>
    %cst_196 = arith.constant 5.000000e-01 : f32
    %501 = vector.broadcast %cst_196 : f32 to vector<8x128xf32>
    %502 = arith.addf %500, %501 : vector<8x128xf32>
    %503 = vector.extract_strided_slice %486 {offsets = [0, 256], sizes = [8, 128], strides = [1, 1]} : vector<8x512xf32> to vector<8x128xf32>
    %504 = math.tanh %503 : vector<8x128xf32>
    %505 = vector.extract_strided_slice %486 {offsets = [0, 384], sizes = [8, 128], strides = [1, 1]} : vector<8x512xf32> to vector<8x128xf32>
    %cst_197 = arith.constant 5.000000e-01 : f32
    %506 = vector.broadcast %cst_197 : f32 to vector<8x128xf32>
    %507 = arith.mulf %506, %505 : vector<8x128xf32>
    %508 = math.tanh %507 : vector<8x128xf32>
    %cst_198 = arith.constant 5.000000e-01 : f32
    %509 = vector.broadcast %cst_198 : f32 to vector<8x128xf32>
    %510 = arith.mulf %509, %508 : vector<8x128xf32>
    %cst_199 = arith.constant 5.000000e-01 : f32
    %511 = vector.broadcast %cst_199 : f32 to vector<8x128xf32>
    %512 = arith.addf %510, %511 : vector<8x128xf32>
    %513 = arith.mulf %502, %479 : vector<8x128xf32>
    %514 = arith.mulf %494, %504 : vector<8x128xf32>
    %515 = arith.addf %513, %514 : vector<8x128xf32>
    %516 = math.tanh %515 : vector<8x128xf32>
    %517 = arith.mulf %512, %516 : vector<8x128xf32>
    %c16_200 = arith.constant 16 : index
    %c0_201 = arith.constant 0 : index
    %518 = vector.load %arg12[%c16_200, %c0_201] : memref<64x128xf32, #tpu.memory_space<vmem>>, vector<8x128xf32>
    tpu.vector_store %arg12[%c16_200, %c0_201], %517 {strides = array<i32>} : memref<64x128xf32, #tpu.memory_space<vmem>>, vector<8x128xf32>,
    %519 = arith.truncf %517 : vector<8x128xf32> to vector<8x128xbf16>
    %c0_202 = arith.constant 0 : index
    %c0_203 = arith.constant 0 : index
    %520 = vector.load %arg6[%c0_202, %c0_203] : memref<128x512xbf16, #tpu.memory_space<vmem>>, vector<128x512xbf16>
    %cst_204 = arith.constant dense<0.000000e+00> : vector<8x512xf32>
    %521 = tpu.matmul %519, %520, %cst_204 {dimension_numbers = #tpu.dot_dimension_numbers<[1], [0], [0], [1], [0, 0, 1, 1], [], []>} : vector<8x128xbf16>, vector<128x512xbf16>, vector<8x512xf32> -> vector<8x512xf32>
    %522 = arith.addf %521, %12 : vector<8x512xf32>
    %523 = vector.extract_strided_slice %522 {offsets = [0, 0], sizes = [8, 128], strides = [1, 1]} : vector<8x512xf32> to vector<8x128xf32>
    %cst_205 = arith.constant 5.000000e-01 : f32
    %524 = vector.broadcast %cst_205 : f32 to vector<8x128xf32>
    %525 = arith.mulf %524, %523 : vector<8x128xf32>
    %526 = math.tanh %525 : vector<8x128xf32>
    %cst_206 = arith.constant 5.000000e-01 : f32
    %527 = vector.broadcast %cst_206 : f32 to vector<8x128xf32>
    %528 = arith.mulf %527, %526 : vector<8x128xf32>
    %cst_207 = arith.constant 5.000000e-01 : f32
    %529 = vector.broadcast %cst_207 : f32 to vector<8x128xf32>
    %530 = arith.addf %528, %529 : vector<8x128xf32>
    %531 = vector.extract_strided_slice %522 {offsets = [0, 128], sizes = [8, 128], strides = [1, 1]} : vector<8x512xf32> to vector<8x128xf32>
    %cst_208 = arith.constant 5.000000e-01 : f32
    %532 = vector.broadcast %cst_208 : f32 to vector<8x128xf32>
    %533 = arith.mulf %532, %531 : vector<8x128xf32>
    %534 = math.tanh %533 : vector<8x128xf32>
    %cst_209 = arith.constant 5.000000e-01 : f32
    %535 = vector.broadcast %cst_209 : f32 to vector<8x128xf32>
    %536 = arith.mulf %535, %534 : vector<8x128xf32>
    %cst_210 = arith.constant 5.000000e-01 : f32
    %537 = vector.broadcast %cst_210 : f32 to vector<8x128xf32>
    %538 = arith.addf %536, %537 : vector<8x128xf32>
    %539 = vector.extract_strided_slice %522 {offsets = [0, 256], sizes = [8, 128], strides = [1, 1]} : vector<8x512xf32> to vector<8x128xf32>
    %540 = math.tanh %539 : vector<8x128xf32>
    %541 = vector.extract_strided_slice %522 {offsets = [0, 384], sizes = [8, 128], strides = [1, 1]} : vector<8x512xf32> to vector<8x128xf32>
    %cst_211 = arith.constant 5.000000e-01 : f32
    %542 = vector.broadcast %cst_211 : f32 to vector<8x128xf32>
    %543 = arith.mulf %542, %541 : vector<8x128xf32>
    %544 = math.tanh %543 : vector<8x128xf32>
    %cst_212 = arith.constant 5.000000e-01 : f32
    %545 = vector.broadcast %cst_212 : f32 to vector<8x128xf32>
    %546 = arith.mulf %545, %544 : vector<8x128xf32>
    %cst_213 = arith.constant 5.000000e-01 : f32
    %547 = vector.broadcast %cst_213 : f32 to vector<8x128xf32>
    %548 = arith.addf %546, %547 : vector<8x128xf32>
    %549 = arith.mulf %538, %515 : vector<8x128xf32>
    %550 = arith.mulf %530, %540 : vector<8x128xf32>
    %551 = arith.addf %549, %550 : vector<8x128xf32>
    %552 = math.tanh %551 : vector<8x128xf32>
    %553 = arith.mulf %548, %552 : vector<8x128xf32>
    %c8_214 = arith.constant 8 : index
    %c0_215 = arith.constant 0 : index
    %554 = vector.load %arg12[%c8_214, %c0_215] : memref<64x128xf32, #tpu.memory_space<vmem>>, vector<8x128xf32>
    tpu.vector_store %arg12[%c8_214, %c0_215], %553 {strides = array<i32>} : memref<64x128xf32, #tpu.memory_space<vmem>>, vector<8x128xf32>,
    %555 = arith.truncf %553 : vector<8x128xf32> to vector<8x128xbf16>
    %c0_216 = arith.constant 0 : index
    %c0_217 = arith.constant 0 : index
    %556 = vector.load %arg6[%c0_216, %c0_217] : memref<128x512xbf16, #tpu.memory_space<vmem>>, vector<128x512xbf16>
    %cst_218 = arith.constant dense<0.000000e+00> : vector<8x512xf32>
    %557 = tpu.matmul %555, %556, %cst_218 {dimension_numbers = #tpu.dot_dimension_numbers<[1], [0], [0], [1], [0, 0, 1, 1], [], []>} : vector<8x128xbf16>, vector<128x512xbf16>, vector<8x512xf32> -> vector<8x512xf32>
    %558 = arith.addf %557, %12 : vector<8x512xf32>
    %559 = vector.extract_strided_slice %558 {offsets = [0, 0], sizes = [8, 128], strides = [1, 1]} : vector<8x512xf32> to vector<8x128xf32>
    %cst_219 = arith.constant 5.000000e-01 : f32
    %560 = vector.broadcast %cst_219 : f32 to vector<8x128xf32>
    %561 = arith.mulf %560, %559 : vector<8x128xf32>
    %562 = math.tanh %561 : vector<8x128xf32>
    %cst_220 = arith.constant 5.000000e-01 : f32
    %563 = vector.broadcast %cst_220 : f32 to vector<8x128xf32>
    %564 = arith.mulf %563, %562 : vector<8x128xf32>
    %cst_221 = arith.constant 5.000000e-01 : f32
    %565 = vector.broadcast %cst_221 : f32 to vector<8x128xf32>
    %566 = arith.addf %564, %565 : vector<8x128xf32>
    %567 = vector.extract_strided_slice %558 {offsets = [0, 128], sizes = [8, 128], strides = [1, 1]} : vector<8x512xf32> to vector<8x128xf32>
    %cst_222 = arith.constant 5.000000e-01 : f32
    %568 = vector.broadcast %cst_222 : f32 to vector<8x128xf32>
    %569 = arith.mulf %568, %567 : vector<8x128xf32>
    %570 = math.tanh %569 : vector<8x128xf32>
    %cst_223 = arith.constant 5.000000e-01 : f32
    %571 = vector.broadcast %cst_223 : f32 to vector<8x128xf32>
    %572 = arith.mulf %571, %570 : vector<8x128xf32>
    %cst_224 = arith.constant 5.000000e-01 : f32
    %573 = vector.broadcast %cst_224 : f32 to vector<8x128xf32>
    %574 = arith.addf %572, %573 : vector<8x128xf32>
    %575 = vector.extract_strided_slice %558 {offsets = [0, 256], sizes = [8, 128], strides = [1, 1]} : vector<8x512xf32> to vector<8x128xf32>
    %576 = math.tanh %575 : vector<8x128xf32>
    %577 = vector.extract_strided_slice %558 {offsets = [0, 384], sizes = [8, 128], strides = [1, 1]} : vector<8x512xf32> to vector<8x128xf32>
    %cst_225 = arith.constant 5.000000e-01 : f32
    %578 = vector.broadcast %cst_225 : f32 to vector<8x128xf32>
    %579 = arith.mulf %578, %577 : vector<8x128xf32>
    %580 = math.tanh %579 : vector<8x128xf32>
    %cst_226 = arith.constant 5.000000e-01 : f32
    %581 = vector.broadcast %cst_226 : f32 to vector<8x128xf32>
    %582 = arith.mulf %581, %580 : vector<8x128xf32>
    %cst_227 = arith.constant 5.000000e-01 : f32
    %583 = vector.broadcast %cst_227 : f32 to vector<8x128xf32>
    %584 = arith.addf %582, %583 : vector<8x128xf32>
    %585 = arith.mulf %574, %551 : vector<8x128xf32>
    %586 = arith.mulf %566, %576 : vector<8x128xf32>
    %587 = arith.addf %585, %586 : vector<8x128xf32>
    %588 = math.tanh %587 : vector<8x128xf32>
    %589 = arith.mulf %584, %588 : vector<8x128xf32>
    %c0_228 = arith.constant 0 : index
    %c0_229 = arith.constant 0 : index
    %590 = vector.load %arg12[%c0_228, %c0_229] : memref<64x128xf32, #tpu.memory_space<vmem>>, vector<8x128xf32>
    tpu.vector_store %arg12[%c0_228, %c0_229], %589 {strides = array<i32>} : memref<64x128xf32, #tpu.memory_space<vmem>>, vector<8x128xf32>,
    %c0_230 = arith.constant 0 : index
    %c0_231 = arith.constant 0 : index
    %591 = vector.load %arg12[%c0_230, %c0_231] : memref<64x128xf32, #tpu.memory_space<vmem>>, vector<64x128xf32>
    %592 = arith.truncf %591 : vector<64x128xf32> to vector<64x128xbf16>
    %c0_232 = arith.constant 0 : index
    %c0_233 = arith.constant 0 : index
    %593 = vector.load %arg8[%c0_232, %c0_233] : memref<128x128xbf16, #tpu.memory_space<vmem>>, vector<128x128xbf16>
    %cst_234 = arith.constant dense<0.000000e+00> : vector<64x128xf32>
    %594 = tpu.matmul %592, %593, %cst_234 {dimension_numbers = #tpu.dot_dimension_numbers<[1], [0], [0], [1], [0, 0, 1, 1], [], []>} : vector<64x128xbf16>, vector<128x128xbf16>, vector<64x128xf32> -> vector<64x128xf32>
    %c0_235 = arith.constant 0 : index
    %c0_236 = arith.constant 0 : index
    %595 = vector.load %arg9[%c0_235, %c0_236] : memref<1x128xf32, #tpu.memory_space<vmem>>, vector<1x128xf32>
    %596 = vector.broadcast %595 : vector<1x128xf32> to vector<64x128xf32>
    %597 = arith.addf %594, %596 : vector<64x128xf32>
    %c0_237 = arith.constant 0 : index
    %c0_238 = arith.constant 0 : index
    %598 = vector.load %arg10[%c0_237, %c0_238] : memref<64x128xf32, #tpu.memory_space<vmem>>, vector<64x128xf32>
    tpu.vector_store %arg10[%c0_237, %c0_238], %597 {strides = array<i32>} : memref<64x128xf32, #tpu.memory_space<vmem>>, vector<64x128xf32>,
    return
  }
}

</mosaic_0001>

<llo_original>
// kernel: tpu_custom_call.1
$region0: #{tpu_custom_call.1}
  #allocation0 [shape = 'u32[]', space=smem, size = 0x4, offset = 0x4, fixed_abs, tag = 'smem constant byte address 0x4 - core index']
  #allocation1 [shape = 'u32[144,128]{1,0:T(1,128)}', space=vmem, size = 0x12000, scoped, tag = 'internal scratch']
  #allocation2 [shape = 'f32[64,512]{1,0:T(8,128)}', space=vmem, size = 0x20000, scoped, tag = 'scratch operand']
  #allocation3 [shape = 'f32[64,128]{1,0:T(8,128)}', space=vmem, size = 0x8000, scoped, tag = 'scratch operand']
  %s0 = inlined_call_operand.hbm [shape: bf16[64,128], index: 0, kind: input, shape index: {}]
  %s1 = inlined_call_operand.hbm [shape: bf16[128,512], index: 1, kind: input, shape index: {}]
  %s2 = inlined_call_operand.hbm [shape: bf16[128,512], index: 2, kind: input, shape index: {}]
  %s3 = inlined_call_operand.vmem [shape: f32[1,512], index: 3, kind: input, shape index: {}]
  %s4 = inlined_call_operand.hbm [shape: bf16[128,512], index: 4, kind: input, shape index: {}]
  %s5 = inlined_call_operand.vmem [shape: f32[1,512], index: 5, kind: input, shape index: {}]
  %s6 = inlined_call_operand.hbm [shape: bf16[128,512], index: 6, kind: input, shape index: {}]
  %s7 = inlined_call_operand.vmem [shape: f32[1,512], index: 7, kind: input, shape index: {}]
  %s8 = inlined_call_operand.hbm [shape: bf16[128,128], index: 8, kind: input, shape index: {}]
  %s9 = inlined_call_operand.vmem [shape: f32[1,128], index: 9, kind: input, shape index: {}]
  %s10 = inlined_call_operand.hbm [shape: f32[64,128], index: 10, kind: output, shape index: {}]
  %s11 = sld [smem:[#allocation0]]
  $region74: #{tpu_custom_call.1} parent=0
    _
  %s13 = ssub.s32 1, %s11
  %s14 = scalar_select 0, %s13, %s11
  $region1: #{tpu_custom_call.1} parent=0
    #allocation4 [shape = 'u8[16384]{0}', space=vmem, size = 0x4000, scoped, tag = 'input window, operand 0, single buffered']
    #allocation5 [shape = 's32[1]{0}', space=sflag, size = 0x4, scoped, tag = 'scoped memory for tpu_custom_call.1']
    #allocation6 [shape = 's32[1]{0}', space=sflag, size = 0x4, scoped, tag = 'scoped memory for tpu_custom_call.1']
    #allocation7 [shape = 'u8[131072]{0}', space=vmem, size = 0x20000, scoped, tag = 'input window, operand 1, single buffered']
    #allocation8 [shape = 's32[1]{0}', space=sflag, size = 0x4, scoped, tag = 'scoped memory for tpu_custom_call.1']
    #allocation9 [shape = 'u8[131072]{0}', space=vmem, size = 0x20000, scoped, tag = 'input window, operand 2, single buffered']
    #allocation10 [shape = 'u8[131072]{0}', space=vmem, size = 0x20000, scoped, tag = 'input window, operand 4, single buffered']
    #allocation11 [shape = 's32[1]{0}', space=sflag, size = 0x4, scoped, tag = 'scoped memory for tpu_custom_call.1']
    #allocation12 [shape = 'u8[131072]{0}', space=vmem, size = 0x20000, scoped, tag = 'input window, operand 6, single buffered']
    #allocation13 [shape = 'u8[32768]{0}', space=vmem, size = 0x8000, scoped, tag = 'input window, operand 8, single buffered']
    #allocation14 [shape = 's32[1]{0}', space=sflag, size = 0x4, scoped, tag = 'scoped memory for tpu_custom_call.1']
    #allocation15 [shape = 'u8[32768]{0}', space=vmem, size = 0x8000, scoped, tag = 'output window, operand 0, single buffered']
    %15 = vsyncpa [#allocation5], 0
    %16 = vsyncpa [#allocation8], 0
    %17 = vsyncpa [#allocation11], 0
    %18 = vsyncpa [#allocation14], 0
    %19 = vsyncpa [#allocation6], 0
    // Predicated region
    $region2: #{tpu_custom_call.1} parent=1 // pred_check
      _
    $region3: #{tpu_custom_call.1} parent=1 // pred_check_branch
      %21 = sbr.rel (0) target = $region5
    $region4: #{tpu_custom_call.1} parent=1 // pred_region
      %s23 = ssub.s32 512, 512
      %24 = vsyncadd [#allocation5], %s23
      %s25 = sshll.u32 [#allocation4], 4
      %s26 = int_to_ptr.vmem [resolvable:$true] %s25
      %31 = dma.hbm_to_vmem [thread:$0]  %s0, 512, %s26, [#allocation5], 64, 64, 4
    $region5: #{tpu_custom_call.1} parent=1 // pred_fallthru
      _
    // Predicated region
    $region6: #{tpu_custom_call.1} parent=1 // pred_check
      _
    $region7: #{tpu_custom_call.1} parent=1 // pred_check_branch
      %33 = sbr.rel (0) target = $region9
    $region8: #{tpu_custom_call.1} parent=1 // pred_region
      %s35 = ssub.s32 4096, 4096
      %36 = vsyncadd [#allocation8], %s35
      %s37 = sshll.u32 [#allocation7], 4
      %s38 = int_to_ptr.vmem [resolvable:$true] %s37
      %43 = dma.hbm_to_vmem [thread:$0]  %s1, 4096, %s38, [#allocation8], 256, 256, 16
    $region9: #{tpu_custom_call.1} parent=1 // pred_fallthru
      _
    // Predicated region
    $region10: #{tpu_custom_call.1} parent=1 // pred_check
      _
    $region11: #{tpu_custom_call.1} parent=1 // pred_check_branch
      %45 = sbr.rel (0) target = $region13
    $region12: #{tpu_custom_call.1} parent=1 // pred_region
      %s47 = ssub.s32 4096, 4096
      %48 = vsyncadd [#allocation8], %s47
      %s49 = sshll.u32 [#allocation9], 4
      %s50 = int_to_ptr.vmem [resolvable:$true] %s49
      %55 = dma.hbm_to_vmem [thread:$0]  %s2, 4096, %s50, [#allocation8], 256, 256, 16
    $region13: #{tpu_custom_call.1} parent=1 // pred_fallthru
      _
    // Predicated region
    $region14: #{tpu_custom_call.1} parent=1 // pred_check
      _
    $region15: #{tpu_custom_call.1} parent=1 // pred_check_branch
      %57 = sbr.rel (0) target = $region17
    $region16: #{tpu_custom_call.1} parent=1 // pred_region
      _
    $region17: #{tpu_custom_call.1} parent=1 // pred_fallthru
      _
    // Predicated region
    $region18: #{tpu_custom_call.1} parent=1 // pred_check
      _
    $region19: #{tpu_custom_call.1} parent=1 // pred_check_branch
      %59 = sbr.rel (0) target = $region21
    $region20: #{tpu_custom_call.1} parent=1 // pred_region
      %s61 = ssub.s32 4096, 4096
      %62 = vsyncadd [#allocation11], %s61
      %s63 = sshll.u32 [#allocation10], 4
      %s64 = int_to_ptr.vmem [resolvable:$true] %s63
      %69 = dma.hbm_to_vmem [thread:$0]  %s4, 4096, %s64, [#allocation11], 256, 256, 16
    $region21: #{tpu_custom_call.1} parent=1 // pred_fallthru
      _
    // Predicated region
    $region22: #{tpu_custom_call.1} parent=1 // pred_check
      _
    $region23: #{tpu_custom_call.1} parent=1 // pred_check_branch
      %71 = sbr.rel (0) target = $region25
    $region24: #{tpu_custom_call.1} parent=1 // pred_region
      _
    $region25: #{tpu_custom_call.1} parent=1 // pred_fallthru
      _
    // Predicated region
    $region26: #{tpu_custom_call.1} parent=1 // pred_check
      _
    $region27: #{tpu_custom_call.1} parent=1 // pred_check_branch
      %73 = sbr.rel (0) target = $region29
    $region28: #{tpu_custom_call.1} parent=1 // pred_region
      %s75 = ssub.s32 4096, 4096
      %76 = vsyncadd [#allocation11], %s75
      %s77 = sshll.u32 [#allocation12], 4
      %s78 = int_to_ptr.vmem [resolvable:$true] %s77
      %83 = dma.hbm_to_vmem [thread:$0]  %s6, 4096, %s78, [#allocation11], 256, 256, 16
    $region29: #{tpu_custom_call.1} parent=1 // pred_fallthru
      _
    // Predicated region
    $region30: #{tpu_custom_call.1} parent=1 // pred_check
      _
    $region31: #{tpu_custom_call.1} parent=1 // pred_check_branch
      %85 = sbr.rel (0) target = $region33
    $region32: #{tpu_custom_call.1} parent=1 // pred_region
      _
    $region33: #{tpu_custom_call.1} parent=1 // pred_fallthru
      _
    // Predicated region
    $region34: #{tpu_custom_call.1} parent=1 // pred_check
      _
    $region35: #{tpu_custom_call.1} parent=1 // pred_check_branch
      %87 = sbr.rel (0) target = $region37
    $region36: #{tpu_custom_call.1} parent=1 // pred_region
      %s89 = ssub.s32 1024, 1024
      %90 = vsyncadd [#allocation14], %s89
      %s91 = sshll.u32 [#allocation13], 4
      %s92 = int_to_ptr.vmem [resolvable:$true] %s91
      %97 = dma.hbm_to_vmem [thread:$0]  %s8, 1024, %s92, [#allocation14], 64, 64, 4
    $region37: #{tpu_custom_call.1} parent=1 // pred_fallthru
      _
    // Predicated region
    $region38: #{tpu_custom_call.1} parent=1 // pred_check
      _
    $region39: #{tpu_custom_call.1} parent=1 // pred_check_branch
      %99 = sbr.rel (0) target = $region41
    $region40: #{tpu_custom_call.1} parent=1 // pred_region
      _
    $region41: #{tpu_custom_call.1} parent=1 // pred_fallthru
      _
    // Predicated region
    $region42: #{tpu_custom_call.1} parent=1 // pred_check
      _
    $region43: #{tpu_custom_call.1} parent=1 // pred_check_branch
      %101 = sbr.rel (0) target = $region45
    $region44: #{tpu_custom_call.1} parent=1 // pred_region
      %102 = dma.done [#allocation5], 512
    $region45: #{tpu_custom_call.1} parent=1 // pred_fallthru
      _
    // Predicated region
    $region46: #{tpu_custom_call.1} parent=1 // pred_check
      _
    $region47: #{tpu_custom_call.1} parent=1 // pred_check_branch
      %104 = sbr.rel (0) target = $region49
    $region48: #{tpu_custom_call.1} parent=1 // pred_region
      %105 = dma.done [#allocation8], 4096
    $region49: #{tpu_custom_call.1} parent=1 // pred_fallthru
      _
    // Predicated region
    $region50: #{tpu_custom_call.1} parent=1 // pred_check
      _
    $region51: #{tpu_custom_call.1} parent=1 // pred_check_branch
      %107 = sbr.rel (0) target = $region53
    $region52: #{tpu_custom_call.1} parent=1 // pred_region
      %108 = dma.done [#allocation8], 4096
    $region53: #{tpu_custom_call.1} parent=1 // pred_fallthru
      _
    // Predicated region
    $region54: #{tpu_custom_call.1} parent=1 // pred_check
      _
    $region55: #{tpu_custom_call.1} parent=1 // pred_check_branch
      %110 = sbr.rel (0) target = $region57
    $region56: #{tpu_custom_call.1} parent=1 // pred_region
      %111 = dma.done [#allocation11], 4096
    $region57: #{tpu_custom_call.1} parent=1 // pred_fallthru
      _
    // Predicated region
    $region58: #{tpu_custom_call.1} parent=1 // pred_check
      _
    $region59: #{tpu_custom_call.1} parent=1 // pred_check_branch
      %113 = sbr.rel (0) target = $region61
    $region60: #{tpu_custom_call.1} parent=1 // pred_region
      %114 = dma.done [#allocation11], 4096
    $region61: #{tpu_custom_call.1} parent=1 // pred_fallthru
      _
    // Predicated region
    $region62: #{tpu_custom_call.1} parent=1 // pred_check
      _
    $region63: #{tpu_custom_call.1} parent=1 // pred_check_branch
      %116 = sbr.rel (0) target = $region65
    $region64: #{tpu_custom_call.1} parent=1 // pred_region
      %117 = dma.done [#allocation14], 1024
    $region65: #{tpu_custom_call.1} parent=1 // pred_fallthru
      _
    %v119 = vld [vmem:[#allocation4] sm:$0xf]
    %v120 = vld [vmem:[#allocation4 + $0x4] sm:$0xf]
    %v121 = vld [vmem:[#allocation4 + $0x8] sm:$0xf]
    %v122 = vld [vmem:[#allocation4 + $0xc] sm:$0xf]
    %v123 = vld [vmem:[#allocation4 + $0x10] sm:$0xf]
    %v124 = vld [vmem:[#allocation4 + $0x14] sm:$0xf]
    %v125 = vld [vmem:[#allocation4 + $0x18] sm:$0xf]
    %v126 = vld [vmem:[#allocation4 + $0x1c] sm:$0xf]
    %v127 = vld [vmem:[#allocation7] sm:$0xff]
    %v128 = vld [vmem:[#allocation7 + $0x8] sm:$0xff]
    %v129 = vld [vmem:[#allocation7 + $0x10] sm:$0xff]
    %v130 = vld [vmem:[#allocation7 + $0x18] sm:$0xff]
    %v131 = vld [vmem:[#allocation7 + $0x20] sm:$0xff]
    %v132 = vld [vmem:[#allocation7 + $0x28] sm:$0xff]
    %v133 = vld [vmem:[#allocation7 + $0x30] sm:$0xff]
    %v134 = vld [vmem:[#allocation7 + $0x38] sm:$0xff]
    %v135 = vld [vmem:[#allocation7 + $0x40] sm:$0xff]
    %v136 = vld [vmem:[#allocation7 + $0x48] sm:$0xff]
    %v137 = vld [vmem:[#allocation7 + $0x50] sm:$0xff]
    %v138 = vld [vmem:[#allocation7 + $0x58] sm:$0xff]
    %v139 = vld [vmem:[#allocation7 + $0x60] sm:$0xff]
    %v140 = vld [vmem:[#allocation7 + $0x68] sm:$0xff]
    %v141 = vld [vmem:[#allocation7 + $0x70] sm:$0xff]
    %v142 = vld [vmem:[#allocation7 + $0x78] sm:$0xff]
    %v143 = vld [vmem:[#allocation7 + $0x80] sm:$0xff]
    %v144 = vld [vmem:[#allocation7 + $0x88] sm:$0xff]
    %v145 = vld [vmem:[#allocation7 + $0x90] sm:$0xff]
    %v146 = vld [vmem:[#allocation7 + $0x98] sm:$0xff]
    %v147 = vld [vmem:[#allocation7 + $0xa0] sm:$0xff]
    %v148 = vld [vmem:[#allocation7 + $0xa8] sm:$0xff]
    %v149 = vld [vmem:[#allocation7 + $0xb0] sm:$0xff]
    %v150 = vld [vmem:[#allocation7 + $0xb8] sm:$0xff]
    %v151 = vld [vmem:[#allocation7 + $0xc0] sm:$0xff]
    %v152 = vld [vmem:[#allocation7 + $0xc8] sm:$0xff]
    %v153 = vld [vmem:[#allocation7 + $0xd0] sm:$0xff]
    %v154 = vld [vmem:[#allocation7 + $0xd8] sm:$0xff]
    %v155 = vld [vmem:[#allocation7 + $0xe0] sm:$0xff]
    %v156 = vld [vmem:[#allocation7 + $0xe8] sm:$0xff]
    %v157 = vld [vmem:[#allocation7 + $0xf0] sm:$0xff]
    %v158 = vld [vmem:[#allocation7 + $0xf8] sm:$0xff]
    %v159 = vld [vmem:[%s3] sm:$0xf]
    %v161 = vlaneseq
    %v162 = vshrl.u32 %v161, 7
    %v163 = vsub.s32 0, %v162
    %v164 = vrot.slane %v159, %v163
    %v165 = vlaneseq
    %v166 = vshrl.u32 %v165, 7
    %v167 = vsub.s32 1, %v166
    %v168 = vrot.slane %v159, %v167
    %v169 = vlaneseq
    %v170 = vshrl.u32 %v169, 7
    %v171 = vsub.s32 2, %v170
    %v172 = vrot.slane %v159, %v171
    %v173 = vlaneseq
    %v174 = vshrl.u32 %v173, 7
    %v175 = vsub.s32 3, %v174
    %v176 = vrot.slane %v159, %v175
    %v189 = vunpack.c.l.b16 %v119
    %v190 = vunpack.c.l.b16 %v120
    %v191 = vunpack.c.l.b16 %v121
    %v192 = vunpack.c.l.b16 %v122
    %v193 = vunpack.c.l.b16 %v123
    %v194 = vunpack.c.l.b16 %v124
    %v195 = vunpack.c.l.b16 %v125
    %v196 = vunpack.c.l.b16 %v126
    %v197 = vpack.c.b16 %v190, %v189
    %v198 = vpack.c.b16 %v192, %v191
    %v199 = vpack.c.b16 %v194, %v193
    %v200 = vpack.c.b16 %v196, %v195
    %v237 = vunpack.c.l.b16 %v127
    %v238 = vunpack.c.h.b16 %v127
    %v239 = vunpack.c.l.b16 %v128
    %v240 = vunpack.c.h.b16 %v128
    %v241 = vunpack.c.l.b16 %v129
    %v242 = vunpack.c.h.b16 %v129
    %v243 = vunpack.c.l.b16 %v130
    %v244 = vunpack.c.h.b16 %v130
    %v245 = vunpack.c.l.b16 %v131
    %v246 = vunpack.c.h.b16 %v131
    %v247 = vunpack.c.l.b16 %v132
    %v248 = vunpack.c.h.b16 %v132
    %v249 = vunpack.c.l.b16 %v133
    %v250 = vunpack.c.h.b16 %v133
    %v251 = vunpack.c.l.b16 %v134
    %v252 = vunpack.c.h.b16 %v134
    %v253 = vunpack.c.l.b16 %v135
    %v254 = vunpack.c.h.b16 %v135
    %v255 = vunpack.c.l.b16 %v136
    %v256 = vunpack.c.h.b16 %v136
    %v257 = vunpack.c.l.b16 %v137
    %v258 = vunpack.c.h.b16 %v137
    %v259 = vunpack.c.l.b16 %v138
    %v260 = vunpack.c.h.b16 %v138
    %v261 = vunpack.c.l.b16 %v139
    %v262 = vunpack.c.h.b16 %v139
    %v263 = vunpack.c.l.b16 %v140
    %v264 = vunpack.c.h.b16 %v140
    %v265 = vunpack.c.l.b16 %v141
    %v266 = vunpack.c.h.b16 %v141
    %v267 = vunpack.c.l.b16 %v142
    %v268 = vunpack.c.h.b16 %v142
    %v269 = vunpack.c.l.b16 %v143
    %v270 = vunpack.c.h.b16 %v143
    %v271 = vunpack.c.l.b16 %v144
    %v272 = vunpack.c.h.b16 %v144
    %v273 = vunpack.c.l.b16 %v145
    %v274 = vunpack.c.h.b16 %v145
    %v275 = vunpack.c.l.b16 %v146
    %v276 = vunpack.c.h.b16 %v146
    %v277 = vunpack.c.l.b16 %v147
    %v278 = vunpack.c.h.b16 %v147
    %v279 = vunpack.c.l.b16 %v148
    %v280 = vunpack.c.h.b16 %v148
    %v281 = vunpack.c.l.b16 %v149
    %v282 = vunpack.c.h.b16 %v149
    %v283 = vunpack.c.l.b16 %v150
    %v284 = vunpack.c.h.b16 %v150
    %v285 = vunpack.c.l.b16 %v151
    %v286 = vunpack.c.h.b16 %v151
    %v287 = vunpack.c.l.b16 %v152
    %v288 = vunpack.c.h.b16 %v152
    %v289 = vunpack.c.l.b16 %v153
    %v290 = vunpack.c.h.b16 %v153
    %v291 = vunpack.c.l.b16 %v154
    %v292 = vunpack.c.h.b16 %v154
    %v293 = vunpack.c.l.b16 %v155
    %v294 = vunpack.c.h.b16 %v155
    %v295 = vunpack.c.l.b16 %v156
    %v296 = vunpack.c.h.b16 %v156
    %v297 = vunpack.c.l.b16 %v157
    %v298 = vunpack.c.h.b16 %v157
    %v299 = vunpack.c.l.b16 %v158
    %v300 = vunpack.c.h.b16 %v158
    %v301 = vpack.c.b16 %v241, %v237
    %v302 = vpack.c.b16 %v242, %v238
    %v303 = vpack.c.b16 %v243, %v239
    %v304 = vpack.c.b16 %v244, %v240
    %v305 = vpack.c.b16 %v249, %v245
    %v306 = vpack.c.b16 %v250, %v246
    %v307 = vpack.c.b16 %v251, %v247
    %v308 = vpack.c.b16 %v252, %v248
    %v309 = vpack.c.b16 %v257, %v253
    %v310 = vpack.c.b16 %v258, %v254
    %v311 = vpack.c.b16 %v259, %v255
    %v312 = vpack.c.b16 %v260, %v256
    %v313 = vpack.c.b16 %v265, %v261
    %v314 = vpack.c.b16 %v266, %v262
    %v315 = vpack.c.b16 %v267, %v263
    %v316 = vpack.c.b16 %v268, %v264
    %v317 = vpack.c.b16 %v273, %v269
    %v318 = vpack.c.b16 %v274, %v270
    %v319 = vpack.c.b16 %v275, %v271
    %v320 = vpack.c.b16 %v276, %v272
    %v321 = vpack.c.b16 %v281, %v277
    %v322 = vpack.c.b16 %v282, %v278
    %v323 = vpack.c.b16 %v283, %v279
    %v324 = vpack.c.b16 %v284, %v280
    %v325 = vpack.c.b16 %v289, %v285
    %v326 = vpack.c.b16 %v290, %v286
    %v327 = vpack.c.b16 %v291, %v287
    %v328 = vpack.c.b16 %v292, %v288
    %v329 = vpack.c.b16 %v297, %v293
    %v330 = vpack.c.b16 %v298, %v294
    %v331 = vpack.c.b16 %v299, %v295
    %v332 = vpack.c.b16 %v300, %v296
    %365 = vmatprep.subr.bf16.mxu0 %v302
    %366 = vmatpush1.bf16.msra.mxu0 %v301
    %367 = vmatprep.subr.bf16.mxu0 %v306
    %368 = vmatpush1.bf16.msra.mxu0 %v305
    %369 = vmatprep.subr.bf16.mxu0 %v310
    %370 = vmatpush1.bf16.msra.mxu0 %v309
    %371 = vmatprep.subr.bf16.mxu0 %v314
    %372 = vmatpush1.bf16.msra.mxu0 %v313
    %373 = vmatprep.subr.bf16.mxu0 %v318
    %374 = vmatpush1.bf16.msra.mxu0 %v317
    %375 = vmatprep.subr.bf16.mxu0 %v322
    %376 = vmatpush1.bf16.msra.mxu0 %v321
    %377 = vmatprep.subr.bf16.mxu0 %v326
    %378 = vmatpush1.bf16.msra.mxu0 %v325
    %379 = vmatprep.subr.bf16.mxu0 %v330
    %380 = vmatpush1.bf16.msra.mxu0 %v329
    %381 = vmatprep.subr.bf16.mxu0 0
    %382 = vmatpush1.bf16.msra.mxu0 0
    %383 = vmatprep.subr.bf16.mxu0 0
    %384 = vmatpush1.bf16.msra.mxu0 0
    %385 = vmatprep.subr.bf16.mxu0 0
    %386 = vmatpush1.bf16.msra.mxu0 0
    %387 = vmatprep.subr.bf16.mxu0 0
    %388 = vmatpush1.bf16.msra.mxu0 0
    %389 = vmatprep.subr.bf16.mxu0 0
    %390 = vmatpush1.bf16.msra.mxu0 0
    %391 = vmatprep.subr.bf16.mxu0 0
    %392 = vmatpush1.bf16.msra.mxu0 0
    %393 = vmatprep.subr.bf16.mxu0 0
    %394 = vmatpush1.bf16.msra.mxu0 0
    %395 = vmatprep.subr.bf16.mxu0 0
    %396 = vmatpush1.bf16.msra.mxu0 0
    %397 = vmatprep.mubr.bf16.mxu0 0
    %398 = vmatmul.mubr.bf16.gmra.mrb[0].mxu0 %v197
    %v399 = vpop.f32.mrb[0].mxu0
    %v400 = vadd.f32 %v164, %v399
    %v401 = vpop.f32.mrb[0].mxu0
    %v402 = vadd.f32 %v168, %v401
    %v403 = vpop.f32.mrb[0].mxu0
    %v404 = vadd.f32 %v164, %v403
    %v405 = vpop.f32.mrb[0].mxu0
    %v406 = vadd.f32 %v168, %v405
    %407 = vmatprep.mubr.bf16.mxu0 0
    %408 = vmatmul.mubr.bf16.gmra.mrb[0].mxu0 %v198
    %v409 = vpop.f32.mrb[0].mxu0
    %v410 = vadd.f32 %v164, %v409
    %v411 = vpop.f32.mrb[0].mxu0
    %v412 = vadd.f32 %v168, %v411
    %v413 = vpop.f32.mrb[0].mxu0
    %v414 = vadd.f32 %v164, %v413
    %v415 = vpop.f32.mrb[0].mxu0
    %v416 = vadd.f32 %v168, %v415
    %417 = vmatprep.mubr.bf16.mxu0 0
    %418 = vmatmul.mubr.bf16.gmra.mrb[0].mxu0 %v199
    %v419 = vpop.f32.mrb[0].mxu0
    %v420 = vadd.f32 %v164, %v419
    %v421 = vpop.f32.mrb[0].mxu0
    %v422 = vadd.f32 %v168, %v421
    %v423 = vpop.f32.mrb[0].mxu0
    %v424 = vadd.f32 %v164, %v423
    %v425 = vpop.f32.mrb[0].mxu0
    %v426 = vadd.f32 %v168, %v425
    %427 = vmatprep.mubr.bf16.mxu0 0
    %428 = vmatmul.mubr.bf16.gmra.mrb[0].mxu0 %v200
    %v429 = vpop.f32.mrb[0].mxu0
    %v430 = vadd.f32 %v164, %v429
    %v431 = vpop.f32.mrb[0].mxu0
    %v432 = vadd.f32 %v168, %v431
    %v433 = vpop.f32.mrb[0].mxu0
    %v434 = vadd.f32 %v164, %v433
    %v435 = vpop.f32.mrb[0].mxu0
    %v436 = vadd.f32 %v168, %v435
    %437 = vdwg.mxu0
    %438 = vmatprep.subr.bf16.mxu0 %v304
    %439 = vmatpush1.bf16.msra.mxu0 %v303
    %440 = vmatprep.subr.bf16.mxu0 %v308
    %441 = vmatpush1.bf16.msra.mxu0 %v307
    %442 = vmatprep.subr.bf16.mxu0 %v312
    %443 = vmatpush1.bf16.msra.mxu0 %v311
    %444 = vmatprep.subr.bf16.mxu0 %v316
    %445 = vmatpush1.bf16.msra.mxu0 %v315
    %446 = vmatprep.subr.bf16.mxu0 %v320
    %447 = vmatpush1.bf16.msra.mxu0 %v319
    %448 = vmatprep.subr.bf16.mxu0 %v324
    %449 = vmatpush1.bf16.msra.mxu0 %v323
    %450 = vmatprep.subr.bf16.mxu0 %v328
    %451 = vmatpush1.bf16.msra.mxu0 %v327
    %452 = vmatprep.subr.bf16.mxu0 %v332
    %453 = vmatpush1.bf16.msra.mxu0 %v331
    %454 = vmatprep.subr.bf16.mxu0 0
    %455 = vmatpush1.bf16.msra.mxu0 0
    %456 = vmatprep.subr.bf16.mxu0 0
    %457 = vmatpush1.bf16.msra.mxu0 0
    %458 = vmatprep.subr.bf16.mxu0 0
    %459 = vmatpush1.bf16.msra.mxu0 0
    %460 = vmatprep.subr.bf16.mxu0 0
    %461 = vmatpush1.bf16.msra.mxu0 0
    %462 = vmatprep.subr.bf16.mxu0 0
    %463 = vmatpush1.bf16.msra.mxu0 0
    %464 = vmatprep.subr.bf16.mxu0 0
    %465 = vmatpush1.bf16.msra.mxu0 0
    %466 = vmatprep.subr.bf16.mxu0 0
    %467 = vmatpush1.bf16.msra.mxu0 0
    %468 = vmatprep.subr.bf16.mxu0 0
    %469 = vmatpush1.bf16.msra.mxu0 0
    %470 = vmatprep.mubr.bf16.mxu0 0
    %471 = vmatmul.mubr.bf16.gmra.mrb[0].mxu0 %v197
    %v472 = vpop.f32.mrb[0].mxu0
    %v473 = vadd.f32 %v172, %v472
    %v474 = vpop.f32.mrb[0].mxu0
    %v475 = vadd.f32 %v176, %v474
    %v476 = vpop.f32.mrb[0].mxu0
    %v477 = vadd.f32 %v172, %v476
    %v478 = vpop.f32.mrb[0].mxu0
    %v479 = vadd.f32 %v176, %v478
    %480 = vmatprep.mubr.bf16.mxu0 0
    %481 = vmatmul.mubr.bf16.gmra.mrb[0].mxu0 %v198
    %v482 = vpop.f32.mrb[0].mxu0
    %v483 = vadd.f32 %v172, %v482
    %v484 = vpop.f32.mrb[0].mxu0
    %v485 = vadd.f32 %v176, %v484
    %v486 = vpop.f32.mrb[0].mxu0
    %v487 = vadd.f32 %v172, %v486
    %v488 = vpop.f32.mrb[0].mxu0
    %v489 = vadd.f32 %v176, %v488
    %490 = vmatprep.mubr.bf16.mxu0 0
    %491 = vmatmul.mubr.bf16.gmra.mrb[0].mxu0 %v199
    %v492 = vpop.f32.mrb[0].mxu0
    %v493 = vadd.f32 %v172, %v492
    %v494 = vpop.f32.mrb[0].mxu0
    %v495 = vadd.f32 %v176, %v494
    %v496 = vpop.f32.mrb[0].mxu0
    %v497 = vadd.f32 %v172, %v496
    %v498 = vpop.f32.mrb[0].mxu0
    %v499 = vadd.f32 %v176, %v498
    %500 = vmatprep.mubr.bf16.mxu0 0
    %501 = vmatmul.mubr.bf16.gmra.mrb[0].mxu0 %v200
    %v502 = vpop.f32.mrb[0].mxu0
    %v503 = vadd.f32 %v172, %v502
    %v504 = vpop.f32.mrb[0].mxu0
    %v505 = vadd.f32 %v176, %v504
    %v506 = vpop.f32.mrb[0].mxu0
    %v507 = vadd.f32 %v172, %v506
    %v508 = vpop.f32.mrb[0].mxu0
    %v509 = vadd.f32 %v176, %v508
    %510 = vdwg.mxu0
    %511 = vst [vmem:[#allocation2] sm:$0xff] %v400
    %512 = vst [vmem:[#allocation2 + $0x8] sm:$0xff] %v402
    %513 = vst [vmem:[#allocation2 + $0x10] sm:$0xff] %v473
    %514 = vst [vmem:[#allocation2 + $0x18] sm:$0xff] %v475
    %515 = vst [vmem:[#allocation2 + $0x20] sm:$0xff] %v404
    %516 = vst [vmem:[#allocation2 + $0x28] sm:$0xff] %v406
    %517 = vst [vmem:[#allocation2 + $0x30] sm:$0xff] %v477
    %518 = vst [vmem:[#allocation2 + $0x38] sm:$0xff] %v479
    %519 = vst [vmem:[#allocation2 + $0x40] sm:$0xff] %v410
    %520 = vst [vmem:[#allocation2 + $0x48] sm:$0xff] %v412
    %521 = vst [vmem:[#allocation2 + $0x50] sm:$0xff] %v483
    %522 = vst [vmem:[#allocation2 + $0x58] sm:$0xff] %v485
    %523 = vst [vmem:[#allocation2 + $0x60] sm:$0xff] %v414
    %524 = vst [vmem:[#allocation2 + $0x68] sm:$0xff] %v416
    %525 = vst [vmem:[#allocation2 + $0x70] sm:$0xff] %v487
    %526 = vst [vmem:[#allocation2 + $0x78] sm:$0xff] %v489
    %527 = vst [vmem:[#allocation2 + $0x80] sm:$0xff] %v420
    %528 = vst [vmem:[#allocation2 + $0x88] sm:$0xff] %v422
    %529 = vst [vmem:[#allocation2 + $0x90] sm:$0xff] %v493
    %530 = vst [vmem:[#allocation2 + $0x98] sm:$0xff] %v495
    %531 = vst [vmem:[#allocation2 + $0xa0] sm:$0xff] %v424
    %532 = vst [vmem:[#allocation2 + $0xa8] sm:$0xff] %v426
    %533 = vst [vmem:[#allocation2 + $0xb0] sm:$0xff] %v497
    %534 = vst [vmem:[#allocation2 + $0xb8] sm:$0xff] %v499
    %535 = vst [vmem:[#allocation2 + $0xc0] sm:$0xff] %v430
    %536 = vst [vmem:[#allocation2 + $0xc8] sm:$0xff] %v432
    %537 = vst [vmem:[#allocation2 + $0xd0] sm:$0xff] %v503
    %538 = vst [vmem:[#allocation2 + $0xd8] sm:$0xff] %v505
    %539 = vst [vmem:[#allocation2 + $0xe0] sm:$0xff] %v434
    %540 = vst [vmem:[#allocation2 + $0xe8] sm:$0xff] %v436
    %541 = vst [vmem:[#allocation2 + $0xf0] sm:$0xff] %v507
    %542 = vst [vmem:[#allocation2 + $0xf8] sm:$0xff] %v509
    %v543 = vld [vmem:[%s5] sm:$0xf]
    %v545 = vlaneseq
    %v546 = vshrl.u32 %v545, 7
    %v547 = vsub.s32 0, %v546
    %v548 = vrot.slane %v543, %v547
    %v549 = vlaneseq
    %v550 = vshrl.u32 %v549, 7
    %v551 = vsub.s32 1, %v550
    %v552 = vrot.slane %v543, %v551
    %v553 = vlaneseq
    %v554 = vshrl.u32 %v553, 7
    %v555 = vsub.s32 2, %v554
    %v556 = vrot.slane %v543, %v555
    %v557 = vlaneseq
    %v558 = vshrl.u32 %v557, 7
    %v559 = vsub.s32 3, %v558
    %v560 = vrot.slane %v543, %v559
    %v565 = vld [vmem:[%s7] sm:$0xf]
    %v567 = vlaneseq
    %v568 = vshrl.u32 %v567, 7
    %v569 = vsub.s32 0, %v568
    %v570 = vrot.slane %v565, %v569
    %v571 = vlaneseq
    %v572 = vshrl.u32 %v571, 7
    %v573 = vsub.s32 1, %v572
    %v574 = vrot.slane %v565, %v573
    %v575 = vlaneseq
    %v576 = vshrl.u32 %v575, 7
    %v577 = vsub.s32 2, %v576
    %v578 = vrot.slane %v565, %v577
    %v579 = vlaneseq
    %v580 = vshrl.u32 %v579, 7
    %v581 = vsub.s32 3, %v580
    %v582 = vrot.slane %v565, %v581
    %v587 = vld [vmem:[#allocation2] sm:$0xff]
    %v588 = vld [vmem:[#allocation2 + $0x8] sm:$0xff]
    %v589 = vld [vmem:[#allocation2 + $0x10] sm:$0xff]
    %v590 = vld [vmem:[#allocation2 + $0x18] sm:$0xff]
    %v591 = vld [vmem:[#allocation9] sm:$0xff]
    %v592 = vld [vmem:[#allocation9 + $0x8] sm:$0xff]
    %v593 = vld [vmem:[#allocation9 + $0x10] sm:$0xff]
    %v594 = vld [vmem:[#allocation9 + $0x18] sm:$0xff]
    %v595 = vld [vmem:[#allocation9 + $0x20] sm:$0xff]
    %v596 = vld [vmem:[#allocation9 + $0x28] sm:$0xff]
    %v597 = vld [vmem:[#allocation9 + $0x30] sm:$0xff]
    %v598 = vld [vmem:[#allocation9 + $0x38] sm:$0xff]
    %v599 = vld [vmem:[#allocation9 + $0x40] sm:$0xff]
    %v600 = vld [vmem:[#allocation9 + $0x48] sm:$0xff]
    %v601 = vld [vmem:[#allocation9 + $0x50] sm:$0xff]
    %v602 = vld [vmem:[#allocation9 + $0x58] sm:$0xff]
    %v603 = vld [vmem:[#allocation9 + $0x60] sm:$0xff]
    %v604 = vld [vmem:[#allocation9 + $0x68] sm:$0xff]
    %v605 = vld [vmem:[#allocation9 + $0x70] sm:$0xff]
    %v606 = vld [vmem:[#allocation9 + $0x78] sm:$0xff]
    %v607 = vld [vmem:[#allocation9 + $0x80] sm:$0xff]
    %v608 = vld [vmem:[#allocation9 + $0x88] sm:$0xff]
    %v609 = vld [vmem:[#allocation9 + $0x90] sm:$0xff]
    %v610 = vld [vmem:[#allocation9 + $0x98] sm:$0xff]
    %v611 = vld [vmem:[#allocation9 + $0xa0] sm:$0xff]
    %v612 = vld [vmem:[#allocation9 + $0xa8] sm:$0xff]
    %v613 = vld [vmem:[#allocation9 + $0xb0] sm:$0xff]
    %v614 = vld [vmem:[#allocation9 + $0xb8] sm:$0xff]
    %v615 = vld [vmem:[#allocation9 + $0xc0] sm:$0xff]
    %v616 = vld [vmem:[#allocation9 + $0xc8] sm:$0xff]
    %v617 = vld [vmem:[#allocation9 + $0xd0] sm:$0xff]
    %v618 = vld [vmem:[#allocation9 + $0xd8] sm:$0xff]
    %v619 = vld [vmem:[#allocation9 + $0xe0] sm:$0xff]
    %v620 = vld [vmem:[#allocation9 + $0xe8] sm:$0xff]
    %v621 = vld [vmem:[#allocation9 + $0xf0] sm:$0xff]
    %v622 = vld [vmem:[#allocation9 + $0xf8] sm:$0xff]
    %v655 = vunpack.c.l.b16 %v591
    %v656 = vunpack.c.h.b16 %v591
    %v657 = vunpack.c.l.b16 %v592
    %v658 = vunpack.c.h.b16 %v592
    %v659 = vunpack.c.l.b16 %v593
    %v660 = vunpack.c.h.b16 %v593
    %v661 = vunpack.c.l.b16 %v594
    %v662 = vunpack.c.h.b16 %v594
    %v663 = vunpack.c.l.b16 %v595
    %v664 = vunpack.c.h.b16 %v595
    %v665 = vunpack.c.l.b16 %v596
    %v666 = vunpack.c.h.b16 %v596
    %v667 = vunpack.c.l.b16 %v597
    %v668 = vunpack.c.h.b16 %v597
    %v669 = vunpack.c.l.b16 %v598
    %v670 = vunpack.c.h.b16 %v598
    %v671 = vunpack.c.l.b16 %v599
    %v672 = vunpack.c.h.b16 %v599
    %v673 = vunpack.c.l.b16 %v600
    %v674 = vunpack.c.h.b16 %v600
    %v675 = vunpack.c.l.b16 %v601
    %v676 = vunpack.c.h.b16 %v601
    %v677 = vunpack.c.l.b16 %v602
    %v678 = vunpack.c.h.b16 %v602
    %v679 = vunpack.c.l.b16 %v603
    %v680 = vunpack.c.h.b16 %v603
    %v681 = vunpack.c.l.b16 %v604
    %v682 = vunpack.c.h.b16 %v604
    %v683 = vunpack.c.l.b16 %v605
    %v684 = vunpack.c.h.b16 %v605
    %v685 = vunpack.c.l.b16 %v606
    %v686 = vunpack.c.h.b16 %v606
    %v687 = vunpack.c.l.b16 %v607
    %v688 = vunpack.c.h.b16 %v607
    %v689 = vunpack.c.l.b16 %v608
    %v690 = vunpack.c.h.b16 %v608
    %v691 = vunpack.c.l.b16 %v609
    %v692 = vunpack.c.h.b16 %v609
    %v693 = vunpack.c.l.b16 %v610
    %v694 = vunpack.c.h.b16 %v610
    %v695 = vunpack.c.l.b16 %v611
    %v696 = vunpack.c.h.b16 %v611
    %v697 = vunpack.c.l.b16 %v612
    %v698 = vunpack.c.h.b16 %v612
    %v699 = vunpack.c.l.b16 %v613
    %v700 = vunpack.c.h.b16 %v613
    %v701 = vunpack.c.l.b16 %v614
    %v702 = vunpack.c.h.b16 %v614
    %v703 = vunpack.c.l.b16 %v615
    %v704 = vunpack.c.h.b16 %v615
    %v705 = vunpack.c.l.b16 %v616
    %v706 = vunpack.c.h.b16 %v616
    %v707 = vunpack.c.l.b16 %v617
    %v708 = vunpack.c.h.b16 %v617
    %v709 = vunpack.c.l.b16 %v618
    %v710 = vunpack.c.h.b16 %v618
    %v711 = vunpack.c.l.b16 %v619
    %v712 = vunpack.c.h.b16 %v619
    %v713 = vunpack.c.l.b16 %v620
    %v714 = vunpack.c.h.b16 %v620
    %v715 = vunpack.c.l.b16 %v621
    %v716 = vunpack.c.h.b16 %v621
    %v717 = vunpack.c.l.b16 %v622
    %v718 = vunpack.c.h.b16 %v622
    %v719 = vpack.c.b16 %v659, %v655
    %v720 = vpack.c.b16 %v660, %v656
    %v721 = vpack.c.b16 %v661, %v657
    %v722 = vpack.c.b16 %v662, %v658
    %v723 = vpack.c.b16 %v667, %v663
    %v724 = vpack.c.b16 %v668, %v664
    %v725 = vpack.c.b16 %v669, %v665
    %v726 = vpack.c.b16 %v670, %v666
    %v727 = vpack.c.b16 %v675, %v671
    %v728 = vpack.c.b16 %v676, %v672
    %v729 = vpack.c.b16 %v677, %v673
    %v730 = vpack.c.b16 %v678, %v674
    %v731 = vpack.c.b16 %v683, %v679
    %v732 = vpack.c.b16 %v684, %v680
    %v733 = vpack.c.b16 %v685, %v681
    %v734 = vpack.c.b16 %v686, %v682
    %v735 = vpack.c.b16 %v691, %v687
    %v736 = vpack.c.b16 %v692, %v688
    %v737 = vpack.c.b16 %v693, %v689
    %v738 = vpack.c.b16 %v694, %v690
    %v739 = vpack.c.b16 %v699, %v695
    %v740 = vpack.c.b16 %v700, %v696
    %v741 = vpack.c.b16 %v701, %v697
    %v742 = vpack.c.b16 %v702, %v698
    %v743 = vpack.c.b16 %v707, %v703
    %v744 = vpack.c.b16 %v708, %v704
    %v745 = vpack.c.b16 %v709, %v705
    %v746 = vpack.c.b16 %v710, %v706
    %v747 = vpack.c.b16 %v715, %v711
    %v748 = vpack.c.b16 %v716, %v712
    %v749 = vpack.c.b16 %v717, %v713
    %v750 = vpack.c.b16 %v718, %v714
    %783 = vmatprep.subr.bf16.mxu0 %v720
    %784 = vmatpush1.bf16.msra.mxu0 %v719
    %785 = vmatprep.subr.bf16.mxu0 %v724
    %786 = vmatpush1.bf16.msra.mxu0 %v723
    %787 = vmatprep.subr.bf16.mxu0 %v728
    %788 = vmatpush1.bf16.msra.mxu0 %v727
    %789 = vmatprep.subr.bf16.mxu0 %v732
    %790 = vmatpush1.bf16.msra.mxu0 %v731
    %791 = vmatprep.subr.bf16.mxu0 %v736
    %792 = vmatpush1.bf16.msra.mxu0 %v735
    %793 = vmatprep.subr.bf16.mxu0 %v740
    %794 = vmatpush1.bf16.msra.mxu0 %v739
    %795 = vmatprep.subr.bf16.mxu0 %v744
    %796 = vmatpush1.bf16.msra.mxu0 %v743
    %797 = vmatprep.subr.bf16.mxu0 %v748
    %798 = vmatpush1.bf16.msra.mxu0 %v747
    %799 = vmatprep.subr.bf16.mxu0 0
    %800 = vmatpush1.bf16.msra.mxu0 0
    %801 = vmatprep.subr.bf16.mxu0 0
    %802 = vmatpush1.bf16.msra.mxu0 0
    %803 = vmatprep.subr.bf16.mxu0 0
    %804 = vmatpush1.bf16.msra.mxu0 0
    %805 = vmatprep.subr.bf16.mxu0 0
    %806 = vmatpush1.bf16.msra.mxu0 0
    %807 = vmatprep.subr.bf16.mxu0 0
    %808 = vmatpush1.bf16.msra.mxu0 0
    %809 = vmatprep.subr.bf16.mxu0 0
    %810 = vmatpush1.bf16.msra.mxu0 0
    %811 = vmatprep.subr.bf16.mxu0 0
    %812 = vmatpush1.bf16.msra.mxu0 0
    %813 = vmatprep.subr.bf16.mxu0 0
    %814 = vmatpush1.bf16.msra.mxu0 0
    %815 = vmatprep.mubr.bf16.mxu0 0
    %816 = vmatmul.mubr.bf16.gmra.mrb[0].mxu0 0
    %v817 = vpop.f32.mrb[0].mxu0
    %v818 = vadd.f32 0.0, %v817
    %v819 = vpop.f32.mrb[0].mxu0
    %v820 = vadd.f32 0.0, %v819
    %v821 = vpop.f32.mrb[0].mxu0
    %v822 = vpop.f32.mrb[0].mxu0
    %823 = vdwg.mxu0
    %824 = vmatprep.subr.bf16.mxu0 %v722
    %825 = vmatpush1.bf16.msra.mxu0 %v721
    %826 = vmatprep.subr.bf16.mxu0 %v726
    %827 = vmatpush1.bf16.msra.mxu0 %v725
    %828 = vmatprep.subr.bf16.mxu0 %v730
    %829 = vmatpush1.bf16.msra.mxu0 %v729
    %830 = vmatprep.subr.bf16.mxu0 %v734
    %831 = vmatpush1.bf16.msra.mxu0 %v733
    %832 = vmatprep.subr.bf16.mxu0 %v738
    %833 = vmatpush1.bf16.msra.mxu0 %v737
    %834 = vmatprep.subr.bf16.mxu0 %v742
    %835 = vmatpush1.bf16.msra.mxu0 %v741
    %836 = vmatprep.subr.bf16.mxu0 %v746
    %837 = vmatpush1.bf16.msra.mxu0 %v745
    %838 = vmatprep.subr.bf16.mxu0 %v750
    %839 = vmatpush1.bf16.msra.mxu0 %v749
    %840 = vmatprep.subr.bf16.mxu0 0
    %841 = vmatpush1.bf16.msra.mxu0 0
    %842 = vmatprep.subr.bf16.mxu0 0
    %843 = vmatpush1.bf16.msra.mxu0 0
    %844 = vmatprep.subr.bf16.mxu0 0
    %845 = vmatpush1.bf16.msra.mxu0 0
    %846 = vmatprep.subr.bf16.mxu0 0
    %847 = vmatpush1.bf16.msra.mxu0 0
    %848 = vmatprep.subr.bf16.mxu0 0
    %849 = vmatpush1.bf16.msra.mxu0 0
    %850 = vmatprep.subr.bf16.mxu0 0
    %851 = vmatpush1.bf16.msra.mxu0 0
    %852 = vmatprep.subr.bf16.mxu0 0
    %853 = vmatpush1.bf16.msra.mxu0 0
    %854 = vmatprep.subr.bf16.mxu0 0
    %855 = vmatpush1.bf16.msra.mxu0 0
    %856 = vmatprep.mubr.bf16.mxu0 0
    %857 = vmatmul.mubr.bf16.gmra.mrb[0].mxu0 0
    %v858 = vpop.f32.mrb[0].mxu0
    %v859 = vadd.f32 0.0, %v858
    %v860 = vpop.f32.mrb[0].mxu0
    %v861 = vadd.f32 0.0, %v860
    %v862 = vpop.f32.mrb[0].mxu0
    %v863 = vpop.f32.mrb[0].mxu0
    %864 = vdwg.mxu0
    %v865 = vadd.f32 %v587, %v818
    %v866 = vadd.f32 %v588, %v820
    %v867 = vadd.f32 %v589, %v859
    %v868 = vadd.f32 %v590, %v861
    %v869 = vmul.f32 %v865, 0.5
    %v870 = vtanh.pop %v869
    %v871 = vmul.f32 %v870, 0.5
    %v872 = vadd.f32 %v871, 0.5
    %v873 = vmul.f32 %v866, 0.5
    %v874 = vtanh.pop %v873
    %v875 = vmul.f32 %v874, 0.5
    %v876 = vadd.f32 %v875, 0.5
    %v877 = vtanh.pop %v867
    %v878 = vmul.f32 %v868, 0.5
    %v879 = vtanh.pop %v878
    %v880 = vmul.f32 %v879, 0.5
    %v881 = vadd.f32 %v880, 0.5
    %v882 = vmul.f32 %v876, 0.0
    %v883 = vmul.f32 %v872, %v877
    %v884 = vadd.f32 %v882, %v883
    %v885 = vtanh.pop %v884
    %v886 = vmul.f32 %v881, %v885
    %v887 = vld [vmem:[#allocation2 + $0x20] sm:$0xff]
    %v888 = vld [vmem:[#allocation2 + $0x28] sm:$0xff]
    %v889 = vld [vmem:[#allocation2 + $0x30] sm:$0xff]
    %v890 = vld [vmem:[#allocation2 + $0x38] sm:$0xff]
    %v891 = vpack.c.bf16 %v886, %v886
    %892 = vmatprep.subr.bf16.mxu0 %v720
    %893 = vmatpush1.bf16.msra.mxu0 %v719
    %894 = vmatprep.subr.bf16.mxu0 %v724
    %895 = vmatpush1.bf16.msra.mxu0 %v723
    %896 = vmatprep.subr.bf16.mxu0 %v728
    %897 = vmatpush1.bf16.msra.mxu0 %v727
    %898 = vmatprep.subr.bf16.mxu0 %v732
    %899 = vmatpush1.bf16.msra.mxu0 %v731
    %900 = vmatprep.subr.bf16.mxu0 %v736
    %901 = vmatpush1.bf16.msra.mxu0 %v735
    %902 = vmatprep.subr.bf16.mxu0 %v740
    %903 = vmatpush1.bf16.msra.mxu0 %v739
    %904 = vmatprep.subr.bf16.mxu0 %v744
    %905 = vmatpush1.bf16.msra.mxu0 %v743
    %906 = vmatprep.subr.bf16.mxu0 %v748
    %907 = vmatpush1.bf16.msra.mxu0 %v747
    %908 = vmatprep.subr.bf16.mxu0 0
    %909 = vmatpush1.bf16.msra.mxu0 0
    %910 = vmatprep.subr.bf16.mxu0 0
    %911 = vmatpush1.bf16.msra.mxu0 0
    %912 = vmatprep.subr.bf16.mxu0 0
    %913 = vmatpush1.bf16.msra.mxu0 0
    %914 = vmatprep.subr.bf16.mxu0 0
    %915 = vmatpush1.bf16.msra.mxu0 0
    %916 = vmatprep.subr.bf16.mxu0 0
    %917 = vmatpush1.bf16.msra.mxu0 0
    %918 = vmatprep.subr.bf16.mxu0 0
    %919 = vmatpush1.bf16.msra.mxu0 0
    %920 = vmatprep.subr.bf16.mxu0 0
    %921 = vmatpush1.bf16.msra.mxu0 0
    %922 = vmatprep.subr.bf16.mxu0 0
    %923 = vmatpush1.bf16.msra.mxu0 0
    %924 = vmatprep.mubr.bf16.mxu0 0
    %925 = vmatmul.mubr.bf16.gmra.mrb[0].mxu0 %v891
    %v926 = vpop.f32.mrb[0].mxu0
    %v927 = vadd.f32 0.0, %v926
    %v928 = vpop.f32.mrb[0].mxu0
    %v929 = vadd.f32 0.0, %v928
    %v930 = vpop.f32.mrb[0].mxu0
    %v931 = vpop.f32.mrb[0].mxu0
    %932 = vdwg.mxu0
    %933 = vmatprep.subr.bf16.mxu0 %v722
    %934 = vmatpush1.bf16.msra.mxu0 %v721
    %935 = vmatprep.subr.bf16.mxu0 %v726
    %936 = vmatpush1.bf16.msra.mxu0 %v725
    %937 = vmatprep.subr.bf16.mxu0 %v730
    %938 = vmatpush1.bf16.msra.mxu0 %v729
    %939 = vmatprep.subr.bf16.mxu0 %v734
    %940 = vmatpush1.bf16.msra.mxu0 %v733
    %941 = vmatprep.subr.bf16.mxu0 %v738
    %942 = vmatpush1.bf16.msra.mxu0 %v737
    %943 = vmatprep.subr.bf16.mxu0 %v742
    %944 = vmatpush1.bf16.msra.mxu0 %v741
    %945 = vmatprep.subr.bf16.mxu0 %v746
    %946 = vmatpush1.bf16.msra.mxu0 %v745
    %947 = vmatprep.subr.bf16.mxu0 %v750
    %948 = vmatpush1.bf16.msra.mxu0 %v749
    %949 = vmatprep.subr.bf16.mxu0 0
    %950 = vmatpush1.bf16.msra.mxu0 0
    %951 = vmatprep.subr.bf16.mxu0 0
    %952 = vmatpush1.bf16.msra.mxu0 0
    %953 = vmatprep.subr.bf16.mxu0 0
    %954 = vmatpush1.bf16.msra.mxu0 0
    %955 = vmatprep.subr.bf16.mxu0 0
    %956 = vmatpush1.bf16.msra.mxu0 0
    %957 = vmatprep.subr.bf16.mxu0 0
    %958 = vmatpush1.bf16.msra.mxu0 0
    %959 = vmatprep.subr.bf16.mxu0 0
    %960 = vmatpush1.bf16.msra.mxu0 0
    %961 = vmatprep.subr.bf16.mxu0 0
    %962 = vmatpush1.bf16.msra.mxu0 0
    %963 = vmatprep.subr.bf16.mxu0 0
    %964 = vmatpush1.bf16.msra.mxu0 0
    %965 = vmatprep.mubr.bf16.mxu0 0
    %966 = vmatmul.mubr.bf16.gmra.mrb[0].mxu0 %v891
    %v967 = vpop.f32.mrb[0].mxu0
    %v968 = vadd.f32 0.0, %v967
    %v969 = vpop.f32.mrb[0].mxu0
    %v970 = vadd.f32 0.0, %v969
    %v971 = vpop.f32.mrb[0].mxu0
    %v972 = vpop.f32.mrb[0].mxu0
    %973 = vdwg.mxu0
    %v974 = vadd.f32 %v887, %v927
    %v975 = vadd.f32 %v888, %v929
    %v976 = vadd.f32 %v889, %v968
    %v977 = vadd.f32 %v890, %v970
    %v978 = vmul.f32 %v974, 0.5
    %v979 = vtanh.pop %v978
    %v980 = vmul.f32 %v979, 0.5
    %v981 = vadd.f32 %v980, 0.5
    %v982 = vmul.f32 %v975, 0.5
    %v983 = vtanh.pop %v982
    %v984 = vmul.f32 %v983, 0.5
    %v985 = vadd.f32 %v984, 0.5
    %v986 = vtanh.pop %v976
    %v987 = vmul.f32 %v977, 0.5
    %v988 = vtanh.pop %v987
    %v989 = vmul.f32 %v988, 0.5
    %v990 = vadd.f32 %v989, 0.5
    %v991 = vmul.f32 %v985, %v884
    %v992 = vmul.f32 %v981, %v986
    %v993 = vadd.f32 %v991, %v992
    %v994 = vtanh.pop %v993
    %v995 = vmul.f32 %v990, %v994
    %v996 = vld [vmem:[#allocation2 + $0x40] sm:$0xff]
    %v997 = vld [vmem:[#allocation2 + $0x48] sm:$0xff]
    %v998 = vld [vmem:[#allocation2 + $0x50] sm:$0xff]
    %v999 = vld [vmem:[#allocation2 + $0x58] sm:$0xff]
    %v1000 = vpack.c.bf16 %v995, %v995
    %1001 = vmatprep.subr.bf16.mxu0 %v720
    %1002 = vmatpush1.bf16.msra.mxu0 %v719
    %1003 = vmatprep.subr.bf16.mxu0 %v724
    %1004 = vmatpush1.bf16.msra.mxu0 %v723
    %1005 = vmatprep.subr.bf16.mxu0 %v728
    %1006 = vmatpush1.bf16.msra.mxu0 %v727
    %1007 = vmatprep.subr.bf16.mxu0 %v732
    %1008 = vmatpush1.bf16.msra.mxu0 %v731
    %1009 = vmatprep.subr.bf16.mxu0 %v736
    %1010 = vmatpush1.bf16.msra.mxu0 %v735
    %1011 = vmatprep.subr.bf16.mxu0 %v740
    %1012 = vmatpush1.bf16.msra.mxu0 %v739
    %1013 = vmatprep.subr.bf16.mxu0 %v744
    %1014 = vmatpush1.bf16.msra.mxu0 %v743
    %1015 = vmatprep.subr.bf16.mxu0 %v748
    %1016 = vmatpush1.bf16.msra.mxu0 %v747
    %1017 = vmatprep.subr.bf16.mxu0 0
    %1018 = vmatpush1.bf16.msra.mxu0 0
    %1019 = vmatprep.subr.bf16.mxu0 0
    %1020 = vmatpush1.bf16.msra.mxu0 0
    %1021 = vmatprep.subr.bf16.mxu0 0
    %1022 = vmatpush1.bf16.msra.mxu0 0
    %1023 = vmatprep.subr.bf16.mxu0 0
    %1024 = vmatpush1.bf16.msra.mxu0 0
    %1025 = vmatprep.subr.bf16.mxu0 0
    %1026 = vmatpush1.bf16.msra.mxu0 0
    %1027 = vmatprep.subr.bf16.mxu0 0
    %1028 = vmatpush1.bf16.msra.mxu0 0
    %1029 = vmatprep.subr.bf16.mxu0 0
    %1030 = vmatpush1.bf16.msra.mxu0 0
    %1031 = vmatprep.subr.bf16.mxu0 0
    %1032 = vmatpush1.bf16.msra.mxu0 0
    %1033 = vmatprep.mubr.bf16.mxu0 0
    %1034 = vmatmul.mubr.bf16.gmra.mrb[0].mxu0 %v1000
    %v1035 = vpop.f32.mrb[0].mxu0
    %v1036 = vadd.f32 0.0, %v1035
    %v1037 = vpop.f32.mrb[0].mxu0
    %v1038 = vadd.f32 0.0, %v1037
    %v1039 = vpop.f32.mrb[0].mxu0
    %v1040 = vpop.f32.mrb[0].mxu0
    %1041 = vdwg.mxu0
    %1042 = vmatprep.subr.bf16.mxu0 %v722
    %1043 = vmatpush1.bf16.msra.mxu0 %v721
    %1044 = vmatprep.subr.bf16.mxu0 %v726
    %1045 = vmatpush1.bf16.msra.mxu0 %v725
    %1046 = vmatprep.subr.bf16.mxu0 %v730
    %1047 = vmatpush1.bf16.msra.mxu0 %v729
    %1048 = vmatprep.subr.bf16.mxu0 %v734
    %1049 = vmatpush1.bf16.msra.mxu0 %v733
    %1050 = vmatprep.subr.bf16.mxu0 %v738
    %1051 = vmatpush1.bf16.msra.mxu0 %v737
    %1052 = vmatprep.subr.bf16.mxu0 %v742
    %1053 = vmatpush1.bf16.msra.mxu0 %v741
    %1054 = vmatprep.subr.bf16.mxu0 %v746
    %1055 = vmatpush1.bf16.msra.mxu0 %v745
    %1056 = vmatprep.subr.bf16.mxu0 %v750
    %1057 = vmatpush1.bf16.msra.mxu0 %v749
    %1058 = vmatprep.subr.bf16.mxu0 0
    %1059 = vmatpush1.bf16.msra.mxu0 0
    %1060 = vmatprep.subr.bf16.mxu0 0
    %1061 = vmatpush1.bf16.msra.mxu0 0
    %1062 = vmatprep.subr.bf16.mxu0 0
    %1063 = vmatpush1.bf16.msra.mxu0 0
    %1064 = vmatprep.subr.bf16.mxu0 0
    %1065 = vmatpush1.bf16.msra.mxu0 0
    %1066 = vmatprep.subr.bf16.mxu0 0
    %1067 = vmatpush1.bf16.msra.mxu0 0
    %1068 = vmatprep.subr.bf16.mxu0 0
    %1069 = vmatpush1.bf16.msra.mxu0 0
    %1070 = vmatprep.subr.bf16.mxu0 0
    %1071 = vmatpush1.bf16.msra.mxu0 0
    %1072 = vmatprep.subr.bf16.mxu0 0
    %1073 = vmatpush1.bf16.msra.mxu0 0
    %1074 = vmatprep.mubr.bf16.mxu0 0
    %1075 = vmatmul.mubr.bf16.gmra.mrb[0].mxu0 %v1000
    %v1076 = vpop.f32.mrb[0].mxu0
    %v1077 = vadd.f32 0.0, %v1076
    %v1078 = vpop.f32.mrb[0].mxu0
    %v1079 = vadd.f32 0.0, %v1078
    %v1080 = vpop.f32.mrb[0].mxu0
    %v1081 = vpop.f32.mrb[0].mxu0
    %1082 = vdwg.mxu0
    %v1083 = vadd.f32 %v996, %v1036
    %v1084 = vadd.f32 %v997, %v1038
    %v1085 = vadd.f32 %v998, %v1077
    %v1086 = vadd.f32 %v999, %v1079
    %v1087 = vmul.f32 %v1083, 0.5
    %v1088 = vtanh.pop %v1087
    %v1089 = vmul.f32 %v1088, 0.5
    %v1090 = vadd.f32 %v1089, 0.5
    %v1091 = vmul.f32 %v1084, 0.5
    %v1092 = vtanh.pop %v1091
    %v1093 = vmul.f32 %v1092, 0.5
    %v1094 = vadd.f32 %v1093, 0.5
    %v1095 = vtanh.pop %v1085
    %v1096 = vmul.f32 %v1086, 0.5
    %v1097 = vtanh.pop %v1096
    %v1098 = vmul.f32 %v1097, 0.5
    %v1099 = vadd.f32 %v1098, 0.5
    %v1100 = vmul.f32 %v1094, %v993
    %v1101 = vmul.f32 %v1090, %v1095
    %v1102 = vadd.f32 %v1100, %v1101
    %v1103 = vtanh.pop %v1102
    %v1104 = vmul.f32 %v1099, %v1103
    %v1105 = vld [vmem:[#allocation2 + $0x60] sm:$0xff]
    %v1106 = vld [vmem:[#allocation2 + $0x68] sm:$0xff]
    %v1107 = vld [vmem:[#allocation2 + $0x70] sm:$0xff]
    %v1108 = vld [vmem:[#allocation2 + $0x78] sm:$0xff]
    %v1109 = vpack.c.bf16 %v1104, %v1104
    %1110 = vmatprep.subr.bf16.mxu0 %v720
    %1111 = vmatpush1.bf16.msra.mxu0 %v719
    %1112 = vmatprep.subr.bf16.mxu0 %v724
    %1113 = vmatpush1.bf16.msra.mxu0 %v723
    %1114 = vmatprep.subr.bf16.mxu0 %v728
    %1115 = vmatpush1.bf16.msra.mxu0 %v727
    %1116 = vmatprep.subr.bf16.mxu0 %v732
    %1117 = vmatpush1.bf16.msra.mxu0 %v731
    %1118 = vmatprep.subr.bf16.mxu0 %v736
    %1119 = vmatpush1.bf16.msra.mxu0 %v735
    %1120 = vmatprep.subr.bf16.mxu0 %v740
    %1121 = vmatpush1.bf16.msra.mxu0 %v739
    %1122 = vmatprep.subr.bf16.mxu0 %v744
    %1123 = vmatpush1.bf16.msra.mxu0 %v743
    %1124 = vmatprep.subr.bf16.mxu0 %v748
    %1125 = vmatpush1.bf16.msra.mxu0 %v747
    %1126 = vmatprep.subr.bf16.mxu0 0
    %1127 = vmatpush1.bf16.msra.mxu0 0
    %1128 = vmatprep.subr.bf16.mxu0 0
    %1129 = vmatpush1.bf16.msra.mxu0 0
    %1130 = vmatprep.subr.bf16.mxu0 0
    %1131 = vmatpush1.bf16.msra.mxu0 0
    %1132 = vmatprep.subr.bf16.mxu0 0
    %1133 = vmatpush1.bf16.msra.mxu0 0
    %1134 = vmatprep.subr.bf16.mxu0 0
    %1135 = vmatpush1.bf16.msra.mxu0 0
    %1136 = vmatprep.subr.bf16.mxu0 0
    %1137 = vmatpush1.bf16.msra.mxu0 0
    %1138 = vmatprep.subr.bf16.mxu0 0
    %1139 = vmatpush1.bf16.msra.mxu0 0
    %1140 = vmatprep.subr.bf16.mxu0 0
    %1141 = vmatpush1.bf16.msra.mxu0 0
    %1142 = vmatprep.mubr.bf16.mxu0 0
    %1143 = vmatmul.mubr.bf16.gmra.mrb[0].mxu0 %v1109
    %v1144 = vpop.f32.mrb[0].mxu0
    %v1145 = vadd.f32 0.0, %v1144
    %v1146 = vpop.f32.mrb[0].mxu0
    %v1147 = vadd.f32 0.0, %v1146
    %v1148 = vpop.f32.mrb[0].mxu0
    %v1149 = vpop.f32.mrb[0].mxu0
    %1150 = vdwg.mxu0
    %1151 = vmatprep.subr.bf16.mxu0 %v722
    %1152 = vmatpush1.bf16.msra.mxu0 %v721
    %1153 = vmatprep.subr.bf16.mxu0 %v726
    %1154 = vmatpush1.bf16.msra.mxu0 %v725
    %1155 = vmatprep.subr.bf16.mxu0 %v730
    %1156 = vmatpush1.bf16.msra.mxu0 %v729
    %1157 = vmatprep.subr.bf16.mxu0 %v734
    %1158 = vmatpush1.bf16.msra.mxu0 %v733
    %1159 = vmatprep.subr.bf16.mxu0 %v738
    %1160 = vmatpush1.bf16.msra.mxu0 %v737
    %1161 = vmatprep.subr.bf16.mxu0 %v742
    %1162 = vmatpush1.bf16.msra.mxu0 %v741
    %1163 = vmatprep.subr.bf16.mxu0 %v746
    %1164 = vmatpush1.bf16.msra.mxu0 %v745
    %1165 = vmatprep.subr.bf16.mxu0 %v750
    %1166 = vmatpush1.bf16.msra.mxu0 %v749
    %1167 = vmatprep.subr.bf16.mxu0 0
    %1168 = vmatpush1.bf16.msra.mxu0 0
    %1169 = vmatprep.subr.bf16.mxu0 0
    %1170 = vmatpush1.bf16.msra.mxu0 0
    %1171 = vmatprep.subr.bf16.mxu0 0
    %1172 = vmatpush1.bf16.msra.mxu0 0
    %1173 = vmatprep.subr.bf16.mxu0 0
    %1174 = vmatpush1.bf16.msra.mxu0 0
    %1175 = vmatprep.subr.bf16.mxu0 0
    %1176 = vmatpush1.bf16.msra.mxu0 0
    %1177 = vmatprep.subr.bf16.mxu0 0
    %1178 = vmatpush1.bf16.msra.mxu0 0
    %1179 = vmatprep.subr.bf16.mxu0 0
    %1180 = vmatpush1.bf16.msra.mxu0 0
    %1181 = vmatprep.subr.bf16.mxu0 0
    %1182 = vmatpush1.bf16.msra.mxu0 0
    %1183 = vmatprep.mubr.bf16.mxu0 0
    %1184 = vmatmul.mubr.bf16.gmra.mrb[0].mxu0 %v1109
    %v1185 = vpop.f32.mrb[0].mxu0
    %v1186 = vadd.f32 0.0, %v1185
    %v1187 = vpop.f32.mrb[0].mxu0
    %v1188 = vadd.f32 0.0, %v1187
    %v1189 = vpop.f32.mrb[0].mxu0
    %v1190 = vpop.f32.mrb[0].mxu0
    %1191 = vdwg.mxu0
    %v1192 = vadd.f32 %v1105, %v1145
    %v1193 = vadd.f32 %v1106, %v1147
    %v1194 = vadd.f32 %v1107, %v1186
    %v1195 = vadd.f32 %v1108, %v1188
    %v1196 = vmul.f32 %v1192, 0.5
    %v1197 = vtanh.pop %v1196
    %v1198 = vmul.f32 %v1197, 0.5
    %v1199 = vadd.f32 %v1198, 0.5
    %v1200 = vmul.f32 %v1193, 0.5
    %v1201 = vtanh.pop %v1200
    %v1202 = vmul.f32 %v1201, 0.5
    %v1203 = vadd.f32 %v1202, 0.5
    %v1204 = vtanh.pop %v1194
    %v1205 = vmul.f32 %v1195, 0.5
    %v1206 = vtanh.pop %v1205
    %v1207 = vmul.f32 %v1206, 0.5
    %v1208 = vadd.f32 %v1207, 0.5
    %v1209 = vmul.f32 %v1203, %v1102
    %v1210 = vmul.f32 %v1199, %v1204
    %v1211 = vadd.f32 %v1209, %v1210
    %v1212 = vtanh.pop %v1211
    %v1213 = vmul.f32 %v1208, %v1212
    %v1214 = vld [vmem:[#allocation2 + $0x80] sm:$0xff]
    %v1215 = vld [vmem:[#allocation2 + $0x88] sm:$0xff]
    %v1216 = vld [vmem:[#allocation2 + $0x90] sm:$0xff]
    %v1217 = vld [vmem:[#allocation2 + $0x98] sm:$0xff]
    %v1218 = vpack.c.bf16 %v1213, %v1213
    %1219 = vmatprep.subr.bf16.mxu0 %v720
    %1220 = vmatpush1.bf16.msra.mxu0 %v719
    %1221 = vmatprep.subr.bf16.mxu0 %v724
    %1222 = vmatpush1.bf16.msra.mxu0 %v723
    %1223 = vmatprep.subr.bf16.mxu0 %v728
    %1224 = vmatpush1.bf16.msra.mxu0 %v727
    %1225 = vmatprep.subr.bf16.mxu0 %v732
    %1226 = vmatpush1.bf16.msra.mxu0 %v731
    %1227 = vmatprep.subr.bf16.mxu0 %v736
    %1228 = vmatpush1.bf16.msra.mxu0 %v735
    %1229 = vmatprep.subr.bf16.mxu0 %v740
    %1230 = vmatpush1.bf16.msra.mxu0 %v739
    %1231 = vmatprep.subr.bf16.mxu0 %v744
    %1232 = vmatpush1.bf16.msra.mxu0 %v743
    %1233 = vmatprep.subr.bf16.mxu0 %v748
    %1234 = vmatpush1.bf16.msra.mxu0 %v747
    %1235 = vmatprep.subr.bf16.mxu0 0
    %1236 = vmatpush1.bf16.msra.mxu0 0
    %1237 = vmatprep.subr.bf16.mxu0 0
    %1238 = vmatpush1.bf16.msra.mxu0 0
    %1239 = vmatprep.subr.bf16.mxu0 0
    %1240 = vmatpush1.bf16.msra.mxu0 0
    %1241 = vmatprep.subr.bf16.mxu0 0
    %1242 = vmatpush1.bf16.msra.mxu0 0
    %1243 = vmatprep.subr.bf16.mxu0 0
    %1244 = vmatpush1.bf16.msra.mxu0 0
    %1245 = vmatprep.subr.bf16.mxu0 0
    %1246 = vmatpush1.bf16.msra.mxu0 0
    %1247 = vmatprep.subr.bf16.mxu0 0
    %1248 = vmatpush1.bf16.msra.mxu0 0
    %1249 = vmatprep.subr.bf16.mxu0 0
    %1250 = vmatpush1.bf16.msra.mxu0 0
    %1251 = vmatprep.mubr.bf16.mxu0 0
    %1252 = vmatmul.mubr.bf16.gmra.mrb[0].mxu0 %v1218
    %v1253 = vpop.f32.mrb[0].mxu0
    %v1254 = vadd.f32 0.0, %v1253
    %v1255 = vpop.f32.mrb[0].mxu0
    %v1256 = vadd.f32 0.0, %v1255
    %v1257 = vpop.f32.mrb[0].mxu0
    %v1258 = vpop.f32.mrb[0].mxu0
    %1259 = vdwg.mxu0
    %1260 = vmatprep.subr.bf16.mxu0 %v722
    %1261 = vmatpush1.bf16.msra.mxu0 %v721
    %1262 = vmatprep.subr.bf16.mxu0 %v726
    %1263 = vmatpush1.bf16.msra.mxu0 %v725
    %1264 = vmatprep.subr.bf16.mxu0 %v730
    %1265 = vmatpush1.bf16.msra.mxu0 %v729
    %1266 = vmatprep.subr.bf16.mxu0 %v734
    %1267 = vmatpush1.bf16.msra.mxu0 %v733
    %1268 = vmatprep.subr.bf16.mxu0 %v738
    %1269 = vmatpush1.bf16.msra.mxu0 %v737
    %1270 = vmatprep.subr.bf16.mxu0 %v742
    %1271 = vmatpush1.bf16.msra.mxu0 %v741
    %1272 = vmatprep.subr.bf16.mxu0 %v746
    %1273 = vmatpush1.bf16.msra.mxu0 %v745
    %1274 = vmatprep.subr.bf16.mxu0 %v750
    %1275 = vmatpush1.bf16.msra.mxu0 %v749
    %1276 = vmatprep.subr.bf16.mxu0 0
    %1277 = vmatpush1.bf16.msra.mxu0 0
    %1278 = vmatprep.subr.bf16.mxu0 0
    %1279 = vmatpush1.bf16.msra.mxu0 0
    %1280 = vmatprep.subr.bf16.mxu0 0
    %1281 = vmatpush1.bf16.msra.mxu0 0
    %1282 = vmatprep.subr.bf16.mxu0 0
    %1283 = vmatpush1.bf16.msra.mxu0 0
    %1284 = vmatprep.subr.bf16.mxu0 0
    %1285 = vmatpush1.bf16.msra.mxu0 0
    %1286 = vmatprep.subr.bf16.mxu0 0
    %1287 = vmatpush1.bf16.msra.mxu0 0
    %1288 = vmatprep.subr.bf16.mxu0 0
    %1289 = vmatpush1.bf16.msra.mxu0 0
    %1290 = vmatprep.subr.bf16.mxu0 0
    %1291 = vmatpush1.bf16.msra.mxu0 0
    %1292 = vmatprep.mubr.bf16.mxu0 0
    %1293 = vmatmul.mubr.bf16.gmra.mrb[0].mxu0 %v1218
    %v1294 = vpop.f32.mrb[0].mxu0
    %v1295 = vadd.f32 0.0, %v1294
    %v1296 = vpop.f32.mrb[0].mxu0
    %v1297 = vadd.f32 0.0, %v1296
    %v1298 = vpop.f32.mrb[0].mxu0
    %v1299 = vpop.f32.mrb[0].mxu0
    %1300 = vdwg.mxu0
    %v1301 = vadd.f32 %v1214, %v1254
    %v1302 = vadd.f32 %v1215, %v1256
    %v1303 = vadd.f32 %v1216, %v1295
    %v1304 = vadd.f32 %v1217, %v1297
    %v1305 = vmul.f32 %v1301, 0.5
    %v1306 = vtanh.pop %v1305
    %v1307 = vmul.f32 %v1306, 0.5
    %v1308 = vadd.f32 %v1307, 0.5
    %v1309 = vmul.f32 %v1302, 0.5
    %v1310 = vtanh.pop %v1309
    %v1311 = vmul.f32 %v1310, 0.5
    %v1312 = vadd.f32 %v1311, 0.5
    %v1313 = vtanh.pop %v1303
    %v1314 = vmul.f32 %v1304, 0.5
    %v1315 = vtanh.pop %v1314
    %v1316 = vmul.f32 %v1315, 0.5
    %v1317 = vadd.f32 %v1316, 0.5
    %v1318 = vmul.f32 %v1312, %v1211
    %v1319 = vmul.f32 %v1308, %v1313
    %v1320 = vadd.f32 %v1318, %v1319
    %v1321 = vtanh.pop %v1320
    %v1322 = vmul.f32 %v1317, %v1321
    %v1323 = vld [vmem:[#allocation2 + $0xa0] sm:$0xff]
    %v1324 = vld [vmem:[#allocation2 + $0xa8] sm:$0xff]
    %v1325 = vld [vmem:[#allocation2 + $0xb0] sm:$0xff]
    %v1326 = vld [vmem:[#allocation2 + $0xb8] sm:$0xff]
    %v1327 = vpack.c.bf16 %v1322, %v1322
    %1328 = vmatprep.subr.bf16.mxu0 %v720
    %1329 = vmatpush1.bf16.msra.mxu0 %v719
    %1330 = vmatprep.subr.bf16.mxu0 %v724
    %1331 = vmatpush1.bf16.msra.mxu0 %v723
    %1332 = vmatprep.subr.bf16.mxu0 %v728
    %1333 = vmatpush1.bf16.msra.mxu0 %v727
    %1334 = vmatprep.subr.bf16.mxu0 %v732
    %1335 = vmatpush1.bf16.msra.mxu0 %v731
    %1336 = vmatprep.subr.bf16.mxu0 %v736
    %1337 = vmatpush1.bf16.msra.mxu0 %v735
    %1338 = vmatprep.subr.bf16.mxu0 %v740
    %1339 = vmatpush1.bf16.msra.mxu0 %v739
    %1340 = vmatprep.subr.bf16.mxu0 %v744
    %1341 = vmatpush1.bf16.msra.mxu0 %v743
    %1342 = vmatprep.subr.bf16.mxu0 %v748
    %1343 = vmatpush1.bf16.msra.mxu0 %v747
    %1344 = vmatprep.subr.bf16.mxu0 0
    %1345 = vmatpush1.bf16.msra.mxu0 0
    %1346 = vmatprep.subr.bf16.mxu0 0
    %1347 = vmatpush1.bf16.msra.mxu0 0
    %1348 = vmatprep.subr.bf16.mxu0 0
    %1349 = vmatpush1.bf16.msra.mxu0 0
    %1350 = vmatprep.subr.bf16.mxu0 0
    %1351 = vmatpush1.bf16.msra.mxu0 0
    %1352 = vmatprep.subr.bf16.mxu0 0
    %1353 = vmatpush1.bf16.msra.mxu0 0
    %1354 = vmatprep.subr.bf16.mxu0 0
    %1355 = vmatpush1.bf16.msra.mxu0 0
    %1356 = vmatprep.subr.bf16.mxu0 0
    %1357 = vmatpush1.bf16.msra.mxu0 0
    %1358 = vmatprep.subr.bf16.mxu0 0
    %1359 = vmatpush1.bf16.msra.mxu0 0
    %1360 = vmatprep.mubr.bf16.mxu0 0
    %1361 = vmatmul.mubr.bf16.gmra.mrb[0].mxu0 %v1327
    %v1362 = vpop.f32.mrb[0].mxu0
    %v1363 = vadd.f32 0.0, %v1362
    %v1364 = vpop.f32.mrb[0].mxu0
    %v1365 = vadd.f32 0.0, %v1364
    %v1366 = vpop.f32.mrb[0].mxu0
    %v1367 = vpop.f32.mrb[0].mxu0
    %1368 = vdwg.mxu0
    %1369 = vmatprep.subr.bf16.mxu0 %v722
    %1370 = vmatpush1.bf16.msra.mxu0 %v721
    %1371 = vmatprep.subr.bf16.mxu0 %v726
    %1372 = vmatpush1.bf16.msra.mxu0 %v725
    %1373 = vmatprep.subr.bf16.mxu0 %v730
    %1374 = vmatpush1.bf16.msra.mxu0 %v729
    %1375 = vmatprep.subr.bf16.mxu0 %v734
    %1376 = vmatpush1.bf16.msra.mxu0 %v733
    %1377 = vmatprep.subr.bf16.mxu0 %v738
    %1378 = vmatpush1.bf16.msra.mxu0 %v737
    %1379 = vmatprep.subr.bf16.mxu0 %v742
    %1380 = vmatpush1.bf16.msra.mxu0 %v741
    %1381 = vmatprep.subr.bf16.mxu0 %v746
    %1382 = vmatpush1.bf16.msra.mxu0 %v745
    %1383 = vmatprep.subr.bf16.mxu0 %v750
    %1384 = vmatpush1.bf16.msra.mxu0 %v749
    %1385 = vmatprep.subr.bf16.mxu0 0
    %1386 = vmatpush1.bf16.msra.mxu0 0
    %1387 = vmatprep.subr.bf16.mxu0 0
    %1388 = vmatpush1.bf16.msra.mxu0 0
    %1389 = vmatprep.subr.bf16.mxu0 0
    %1390 = vmatpush1.bf16.msra.mxu0 0
    %1391 = vmatprep.subr.bf16.mxu0 0
    %1392 = vmatpush1.bf16.msra.mxu0 0
    %1393 = vmatprep.subr.bf16.mxu0 0
    %1394 = vmatpush1.bf16.msra.mxu0 0
    %1395 = vmatprep.subr.bf16.mxu0 0
    %1396 = vmatpush1.bf16.msra.mxu0 0
    %1397 = vmatprep.subr.bf16.mxu0 0
    %1398 = vmatpush1.bf16.msra.mxu0 0
    %1399 = vmatprep.subr.bf16.mxu0 0
    %1400 = vmatpush1.bf16.msra.mxu0 0
    %1401 = vmatprep.mubr.bf16.mxu0 0
    %1402 = vmatmul.mubr.bf16.gmra.mrb[0].mxu0 %v1327
    %v1403 = vpop.f32.mrb[0].mxu0
    %v1404 = vadd.f32 0.0, %v1403
    %v1405 = vpop.f32.mrb[0].mxu0
    %v1406 = vadd.f32 0.0, %v1405
    %v1407 = vpop.f32.mrb[0].mxu0
    %v1408 = vpop.f32.mrb[0].mxu0
    %1409 = vdwg.mxu0
    %v1410 = vadd.f32 %v1323, %v1363
    %v1411 = vadd.f32 %v1324, %v1365
    %v1412 = vadd.f32 %v1325, %v1404
    %v1413 = vadd.f32 %v1326, %v1406
    %v1414 = vmul.f32 %v1410, 0.5
    %v1415 = vtanh.pop %v1414
    %v1416 = vmul.f32 %v1415, 0.5
    %v1417 = vadd.f32 %v1416, 0.5
    %v1418 = vmul.f32 %v1411, 0.5
    %v1419 = vtanh.pop %v1418
    %v1420 = vmul.f32 %v1419, 0.5
    %v1421 = vadd.f32 %v1420, 0.5
    %v1422 = vtanh.pop %v1412
    %v1423 = vmul.f32 %v1413, 0.5
    %v1424 = vtanh.pop %v1423
    %v1425 = vmul.f32 %v1424, 0.5
    %v1426 = vadd.f32 %v1425, 0.5
    %v1427 = vmul.f32 %v1421, %v1320
    %v1428 = vmul.f32 %v1417, %v1422
    %v1429 = vadd.f32 %v1427, %v1428
    %v1430 = vtanh.pop %v1429
    %v1431 = vmul.f32 %v1426, %v1430
    %v1432 = vld [vmem:[#allocation2 + $0xc0] sm:$0xff]
    %v1433 = vld [vmem:[#allocation2 + $0xc8] sm:$0xff]
    %v1434 = vld [vmem:[#allocation2 + $0xd0] sm:$0xff]
    %v1435 = vld [vmem:[#allocation2 + $0xd8] sm:$0xff]
    %v1436 = vpack.c.bf16 %v1431, %v1431
    %1437 = vmatprep.subr.bf16.mxu0 %v720
    %1438 = vmatpush1.bf16.msra.mxu0 %v719
    %1439 = vmatprep.subr.bf16.mxu0 %v724
    %1440 = vmatpush1.bf16.msra.mxu0 %v723
    %1441 = vmatprep.subr.bf16.mxu0 %v728
    %1442 = vmatpush1.bf16.msra.mxu0 %v727
    %1443 = vmatprep.subr.bf16.mxu0 %v732
    %1444 = vmatpush1.bf16.msra.mxu0 %v731
    %1445 = vmatprep.subr.bf16.mxu0 %v736
    %1446 = vmatpush1.bf16.msra.mxu0 %v735
    %1447 = vmatprep.subr.bf16.mxu0 %v740
    %1448 = vmatpush1.bf16.msra.mxu0 %v739
    %1449 = vmatprep.subr.bf16.mxu0 %v744
    %1450 = vmatpush1.bf16.msra.mxu0 %v743
    %1451 = vmatprep.subr.bf16.mxu0 %v748
    %1452 = vmatpush1.bf16.msra.mxu0 %v747
    %1453 = vmatprep.subr.bf16.mxu0 0
    %1454 = vmatpush1.bf16.msra.mxu0 0
    %1455 = vmatprep.subr.bf16.mxu0 0
    %1456 = vmatpush1.bf16.msra.mxu0 0
    %1457 = vmatprep.subr.bf16.mxu0 0
    %1458 = vmatpush1.bf16.msra.mxu0 0
    %1459 = vmatprep.subr.bf16.mxu0 0
    %1460 = vmatpush1.bf16.msra.mxu0 0
    %1461 = vmatprep.subr.bf16.mxu0 0
    %1462 = vmatpush1.bf16.msra.mxu0 0
    %1463 = vmatprep.subr.bf16.mxu0 0
    %1464 = vmatpush1.bf16.msra.mxu0 0
    %1465 = vmatprep.subr.bf16.mxu0 0
    %1466 = vmatpush1.bf16.msra.mxu0 0
    %1467 = vmatprep.subr.bf16.mxu0 0
    %1468 = vmatpush1.bf16.msra.mxu0 0
    %1469 = vmatprep.mubr.bf16.mxu0 0
    %1470 = vmatmul.mubr.bf16.gmra.mrb[0].mxu0 %v1436
    %v1471 = vpop.f32.mrb[0].mxu0
    %v1472 = vadd.f32 0.0, %v1471
    %v1473 = vpop.f32.mrb[0].mxu0
    %v1474 = vadd.f32 0.0, %v1473
    %v1475 = vpop.f32.mrb[0].mxu0
    %v1476 = vpop.f32.mrb[0].mxu0
    %1477 = vdwg.mxu0
    %1478 = vmatprep.subr.bf16.mxu0 %v722
    %1479 = vmatpush1.bf16.msra.mxu0 %v721
    %1480 = vmatprep.subr.bf16.mxu0 %v726
    %1481 = vmatpush1.bf16.msra.mxu0 %v725
    %1482 = vmatprep.subr.bf16.mxu0 %v730
    %1483 = vmatpush1.bf16.msra.mxu0 %v729
    %1484 = vmatprep.subr.bf16.mxu0 %v734
    %1485 = vmatpush1.bf16.msra.mxu0 %v733
    %1486 = vmatprep.subr.bf16.mxu0 %v738
    %1487 = vmatpush1.bf16.msra.mxu0 %v737
    %1488 = vmatprep.subr.bf16.mxu0 %v742
    %1489 = vmatpush1.bf16.msra.mxu0 %v741
    %1490 = vmatprep.subr.bf16.mxu0 %v746
    %1491 = vmatpush1.bf16.msra.mxu0 %v745
    %1492 = vmatprep.subr.bf16.mxu0 %v750
    %1493 = vmatpush1.bf16.msra.mxu0 %v749
    %1494 = vmatprep.subr.bf16.mxu0 0
    %1495 = vmatpush1.bf16.msra.mxu0 0
    %1496 = vmatprep.subr.bf16.mxu0 0
    %1497 = vmatpush1.bf16.msra.mxu0 0
    %1498 = vmatprep.subr.bf16.mxu0 0
    %1499 = vmatpush1.bf16.msra.mxu0 0
    %1500 = vmatprep.subr.bf16.mxu0 0
    %1501 = vmatpush1.bf16.msra.mxu0 0
    %1502 = vmatprep.subr.bf16.mxu0 0
    %1503 = vmatpush1.bf16.msra.mxu0 0
    %1504 = vmatprep.subr.bf16.mxu0 0
    %1505 = vmatpush1.bf16.msra.mxu0 0
    %1506 = vmatprep.subr.bf16.mxu0 0
    %1507 = vmatpush1.bf16.msra.mxu0 0
    %1508 = vmatprep.subr.bf16.mxu0 0
    %1509 = vmatpush1.bf16.msra.mxu0 0
    %1510 = vmatprep.mubr.bf16.mxu0 0
    %1511 = vmatmul.mubr.bf16.gmra.mrb[0].mxu0 %v1436
    %v1512 = vpop.f32.mrb[0].mxu0
    %v1513 = vadd.f32 0.0, %v1512
    %v1514 = vpop.f32.mrb[0].mxu0
    %v1515 = vadd.f32 0.0, %v1514
    %v1516 = vpop.f32.mrb[0].mxu0
    %v1517 = vpop.f32.mrb[0].mxu0
    %1518 = vdwg.mxu0
    %v1519 = vadd.f32 %v1432, %v1472
    %v1520 = vadd.f32 %v1433, %v1474
    %v1521 = vadd.f32 %v1434, %v1513
    %v1522 = vadd.f32 %v1435, %v1515
    %v1523 = vmul.f32 %v1519, 0.5
    %v1524 = vtanh.pop %v1523
    %v1525 = vmul.f32 %v1524, 0.5
    %v1526 = vadd.f32 %v1525, 0.5
    %v1527 = vmul.f32 %v1520, 0.5
    %v1528 = vtanh.pop %v1527
    %v1529 = vmul.f32 %v1528, 0.5
    %v1530 = vadd.f32 %v1529, 0.5
    %v1531 = vtanh.pop %v1521
    %v1532 = vmul.f32 %v1522, 0.5
    %v1533 = vtanh.pop %v1532
    %v1534 = vmul.f32 %v1533, 0.5
    %v1535 = vadd.f32 %v1534, 0.5
    %v1536 = vmul.f32 %v1530, %v1429
    %v1537 = vmul.f32 %v1526, %v1531
    %v1538 = vadd.f32 %v1536, %v1537
    %v1539 = vtanh.pop %v1538
    %v1540 = vmul.f32 %v1535, %v1539
    %v1541 = vld [vmem:[#allocation2 + $0xe0] sm:$0xff]
    %v1542 = vld [vmem:[#allocation2 + $0xe8] sm:$0xff]
    %v1543 = vld [vmem:[#allocation2 + $0xf0] sm:$0xff]
    %v1544 = vld [vmem:[#allocation2 + $0xf8] sm:$0xff]
    %v1545 = vpack.c.bf16 %v1540, %v1540
    %1546 = vmatprep.subr.bf16.mxu0 %v720
    %1547 = vmatpush1.bf16.msra.mxu0 %v719
    %1548 = vmatprep.subr.bf16.mxu0 %v724
    %1549 = vmatpush1.bf16.msra.mxu0 %v723
    %1550 = vmatprep.subr.bf16.mxu0 %v728
    %1551 = vmatpush1.bf16.msra.mxu0 %v727
    %1552 = vmatprep.subr.bf16.mxu0 %v732
    %1553 = vmatpush1.bf16.msra.mxu0 %v731
    %1554 = vmatprep.subr.bf16.mxu0 %v736
    %1555 = vmatpush1.bf16.msra.mxu0 %v735
    %1556 = vmatprep.subr.bf16.mxu0 %v740
    %1557 = vmatpush1.bf16.msra.mxu0 %v739
    %1558 = vmatprep.subr.bf16.mxu0 %v744
    %1559 = vmatpush1.bf16.msra.mxu0 %v743
    %1560 = vmatprep.subr.bf16.mxu0 %v748
    %1561 = vmatpush1.bf16.msra.mxu0 %v747
    %1562 = vmatprep.subr.bf16.mxu0 0
    %1563 = vmatpush1.bf16.msra.mxu0 0
    %1564 = vmatprep.subr.bf16.mxu0 0
    %1565 = vmatpush1.bf16.msra.mxu0 0
    %1566 = vmatprep.subr.bf16.mxu0 0
    %1567 = vmatpush1.bf16.msra.mxu0 0
    %1568 = vmatprep.subr.bf16.mxu0 0
    %1569 = vmatpush1.bf16.msra.mxu0 0
    %1570 = vmatprep.subr.bf16.mxu0 0
    %1571 = vmatpush1.bf16.msra.mxu0 0
    %1572 = vmatprep.subr.bf16.mxu0 0
    %1573 = vmatpush1.bf16.msra.mxu0 0
    %1574 = vmatprep.subr.bf16.mxu0 0
    %1575 = vmatpush1.bf16.msra.mxu0 0
    %1576 = vmatprep.subr.bf16.mxu0 0
    %1577 = vmatpush1.bf16.msra.mxu0 0
    %1578 = vmatprep.mubr.bf16.mxu0 0
    %1579 = vmatmul.mubr.bf16.gmra.mrb[0].mxu0 %v1545
    %v1580 = vpop.f32.mrb[0].mxu0
    %v1581 = vadd.f32 0.0, %v1580
    %v1582 = vpop.f32.mrb[0].mxu0
    %v1583 = vadd.f32 0.0, %v1582
    %v1584 = vpop.f32.mrb[0].mxu0
    %v1585 = vpop.f32.mrb[0].mxu0
    %1586 = vdwg.mxu0
    %1587 = vmatprep.subr.bf16.mxu0 %v722
    %1588 = vmatpush1.bf16.msra.mxu0 %v721
    %1589 = vmatprep.subr.bf16.mxu0 %v726
    %1590 = vmatpush1.bf16.msra.mxu0 %v725
    %1591 = vmatprep.subr.bf16.mxu0 %v730
    %1592 = vmatpush1.bf16.msra.mxu0 %v729
    %1593 = vmatprep.subr.bf16.mxu0 %v734
    %1594 = vmatpush1.bf16.msra.mxu0 %v733
    %1595 = vmatprep.subr.bf16.mxu0 %v738
    %1596 = vmatpush1.bf16.msra.mxu0 %v737
    %1597 = vmatprep.subr.bf16.mxu0 %v742
    %1598 = vmatpush1.bf16.msra.mxu0 %v741
    %1599 = vmatprep.subr.bf16.mxu0 %v746
    %1600 = vmatpush1.bf16.msra.mxu0 %v745
    %1601 = vmatprep.subr.bf16.mxu0 %v750
    %1602 = vmatpush1.bf16.msra.mxu0 %v749
    %1603 = vmatprep.subr.bf16.mxu0 0
    %1604 = vmatpush1.bf16.msra.mxu0 0
    %1605 = vmatprep.subr.bf16.mxu0 0
    %1606 = vmatpush1.bf16.msra.mxu0 0
    %1607 = vmatprep.subr.bf16.mxu0 0
    %1608 = vmatpush1.bf16.msra.mxu0 0
    %1609 = vmatprep.subr.bf16.mxu0 0
    %1610 = vmatpush1.bf16.msra.mxu0 0
    %1611 = vmatprep.subr.bf16.mxu0 0
    %1612 = vmatpush1.bf16.msra.mxu0 0
    %1613 = vmatprep.subr.bf16.mxu0 0
    %1614 = vmatpush1.bf16.msra.mxu0 0
    %1615 = vmatprep.subr.bf16.mxu0 0
    %1616 = vmatpush1.bf16.msra.mxu0 0
    %1617 = vmatprep.subr.bf16.mxu0 0
    %1618 = vmatpush1.bf16.msra.mxu0 0
    %1619 = vmatprep.mubr.bf16.mxu0 0
    %1620 = vmatmul.mubr.bf16.gmra.mrb[0].mxu0 %v1545
    %v1621 = vpop.f32.mrb[0].mxu0
    %v1622 = vadd.f32 0.0, %v1621
    %v1623 = vpop.f32.mrb[0].mxu0
    %v1624 = vadd.f32 0.0, %v1623
    %v1625 = vpop.f32.mrb[0].mxu0
    %v1626 = vpop.f32.mrb[0].mxu0
    %1627 = vdwg.mxu0
    %v1628 = vadd.f32 %v1541, %v1581
    %v1629 = vadd.f32 %v1542, %v1583
    %v1630 = vadd.f32 %v1543, %v1622
    %v1631 = vadd.f32 %v1544, %v1624
    %v1632 = vmul.f32 %v1628, 0.5
    %v1633 = vtanh.pop %v1632
    %v1634 = vmul.f32 %v1633, 0.5
    %v1635 = vadd.f32 %v1634, 0.5
    %v1636 = vmul.f32 %v1629, 0.5
    %v1637 = vtanh.pop %v1636
    %v1638 = vmul.f32 %v1637, 0.5
    %v1639 = vadd.f32 %v1638, 0.5
    %v1640 = vtanh.pop %v1630
    %v1641 = vmul.f32 %v1631, 0.5
    %v1642 = vtanh.pop %v1641
    %v1643 = vmul.f32 %v1642, 0.5
    %v1644 = vadd.f32 %v1643, 0.5
    %v1645 = vmul.f32 %v1639, %v1538
    %v1646 = vmul.f32 %v1635, %v1640
    %v1647 = vadd.f32 %v1645, %v1646
    %v1648 = vtanh.pop %v1647
    %v1649 = vmul.f32 %v1644, %v1648
    %v1650 = vpack.c.bf16 %v1649, %v1649
    %v1651 = vld [vmem:[#allocation10] sm:$0xff]
    %v1652 = vld [vmem:[#allocation10 + $0x8] sm:$0xff]
    %v1653 = vld [vmem:[#allocation10 + $0x10] sm:$0xff]
    %v1654 = vld [vmem:[#allocation10 + $0x18] sm:$0xff]
    %v1655 = vld [vmem:[#allocation10 + $0x20] sm:$0xff]
    %v1656 = vld [vmem:[#allocation10 + $0x28] sm:$0xff]
    %v1657 = vld [vmem:[#allocation10 + $0x30] sm:$0xff]
    %v1658 = vld [vmem:[#allocation10 + $0x38] sm:$0xff]
    %v1659 = vld [vmem:[#allocation10 + $0x40] sm:$0xff]
    %v1660 = vld [vmem:[#allocation10 + $0x48] sm:$0xff]
    %v1661 = vld [vmem:[#allocation10 + $0x50] sm:$0xff]
    %v1662 = vld [vmem:[#allocation10 + $0x58] sm:$0xff]
    %v1663 = vld [vmem:[#allocation10 + $0x60] sm:$0xff]
    %v1664 = vld [vmem:[#allocation10 + $0x68] sm:$0xff]
    %v1665 = vld [vmem:[#allocation10 + $0x70] sm:$0xff]
    %v1666 = vld [vmem:[#allocation10 + $0x78] sm:$0xff]
    %v1667 = vld [vmem:[#allocation10 + $0x80] sm:$0xff]
    %v1668 = vld [vmem:[#allocation10 + $0x88] sm:$0xff]
    %v1669 = vld [vmem:[#allocation10 + $0x90] sm:$0xff]
    %v1670 = vld [vmem:[#allocation10 + $0x98] sm:$0xff]
    %v1671 = vld [vmem:[#allocation10 + $0xa0] sm:$0xff]
    %v1672 = vld [vmem:[#allocation10 + $0xa8] sm:$0xff]
    %v1673 = vld [vmem:[#allocation10 + $0xb0] sm:$0xff]
    %v1674 = vld [vmem:[#allocation10 + $0xb8] sm:$0xff]
    %v1675 = vld [vmem:[#allocation10 + $0xc0] sm:$0xff]
    %v1676 = vld [vmem:[#allocation10 + $0xc8] sm:$0xff]
    %v1677 = vld [vmem:[#allocation10 + $0xd0] sm:$0xff]
    %v1678 = vld [vmem:[#allocation10 + $0xd8] sm:$0xff]
    %v1679 = vld [vmem:[#allocation10 + $0xe0] sm:$0xff]
    %v1680 = vld [vmem:[#allocation10 + $0xe8] sm:$0xff]
    %v1681 = vld [vmem:[#allocation10 + $0xf0] sm:$0xff]
    %v1682 = vld [vmem:[#allocation10 + $0xf8] sm:$0xff]
    %v1715 = vunpack.c.l.b16 %v1651
    %v1716 = vunpack.c.h.b16 %v1651
    %v1717 = vunpack.c.l.b16 %v1652
    %v1718 = vunpack.c.h.b16 %v1652
    %v1719 = vunpack.c.l.b16 %v1653
    %v1720 = vunpack.c.h.b16 %v1653
    %v1721 = vunpack.c.l.b16 %v1654
    %v1722 = vunpack.c.h.b16 %v1654
    %v1723 = vunpack.c.l.b16 %v1655
    %v1724 = vunpack.c.h.b16 %v1655
    %v1725 = vunpack.c.l.b16 %v1656
    %v1726 = vunpack.c.h.b16 %v1656
    %v1727 = vunpack.c.l.b16 %v1657
    %v1728 = vunpack.c.h.b16 %v1657
    %v1729 = vunpack.c.l.b16 %v1658
    %v1730 = vunpack.c.h.b16 %v1658
    %v1731 = vunpack.c.l.b16 %v1659
    %v1732 = vunpack.c.h.b16 %v1659
    %v1733 = vunpack.c.l.b16 %v1660
    %v1734 = vunpack.c.h.b16 %v1660
    %v1735 = vunpack.c.l.b16 %v1661
    %v1736 = vunpack.c.h.b16 %v1661
    %v1737 = vunpack.c.l.b16 %v1662
    %v1738 = vunpack.c.h.b16 %v1662
    %v1739 = vunpack.c.l.b16 %v1663
    %v1740 = vunpack.c.h.b16 %v1663
    %v1741 = vunpack.c.l.b16 %v1664
    %v1742 = vunpack.c.h.b16 %v1664
    %v1743 = vunpack.c.l.b16 %v1665
    %v1744 = vunpack.c.h.b16 %v1665
    %v1745 = vunpack.c.l.b16 %v1666
    %v1746 = vunpack.c.h.b16 %v1666
    %v1747 = vunpack.c.l.b16 %v1667
    %v1748 = vunpack.c.h.b16 %v1667
    %v1749 = vunpack.c.l.b16 %v1668
    %v1750 = vunpack.c.h.b16 %v1668
    %v1751 = vunpack.c.l.b16 %v1669
    %v1752 = vunpack.c.h.b16 %v1669
    %v1753 = vunpack.c.l.b16 %v1670
    %v1754 = vunpack.c.h.b16 %v1670
    %v1755 = vunpack.c.l.b16 %v1671
    %v1756 = vunpack.c.h.b16 %v1671
    %v1757 = vunpack.c.l.b16 %v1672
    %v1758 = vunpack.c.h.b16 %v1672
    %v1759 = vunpack.c.l.b16 %v1673
    %v1760 = vunpack.c.h.b16 %v1673
    %v1761 = vunpack.c.l.b16 %v1674
    %v1762 = vunpack.c.h.b16 %v1674
    %v1763 = vunpack.c.l.b16 %v1675
    %v1764 = vunpack.c.h.b16 %v1675
    %v1765 = vunpack.c.l.b16 %v1676
    %v1766 = vunpack.c.h.b16 %v1676
    %v1767 = vunpack.c.l.b16 %v1677
    %v1768 = vunpack.c.h.b16 %v1677
    %v1769 = vunpack.c.l.b16 %v1678
    %v1770 = vunpack.c.h.b16 %v1678
    %v1771 = vunpack.c.l.b16 %v1679
    %v1772 = vunpack.c.h.b16 %v1679
    %v1773 = vunpack.c.l.b16 %v1680
    %v1774 = vunpack.c.h.b16 %v1680
    %v1775 = vunpack.c.l.b16 %v1681
    %v1776 = vunpack.c.h.b16 %v1681
    %v1777 = vunpack.c.l.b16 %v1682
    %v1778 = vunpack.c.h.b16 %v1682
    %v1779 = vpack.c.b16 %v1719, %v1715
    %v1780 = vpack.c.b16 %v1720, %v1716
    %v1781 = vpack.c.b16 %v1721, %v1717
    %v1782 = vpack.c.b16 %v1722, %v1718
    %v1783 = vpack.c.b16 %v1727, %v1723
    %v1784 = vpack.c.b16 %v1728, %v1724
    %v1785 = vpack.c.b16 %v1729, %v1725
    %v1786 = vpack.c.b16 %v1730, %v1726
    %v1787 = vpack.c.b16 %v1735, %v1731
    %v1788 = vpack.c.b16 %v1736, %v1732
    %v1789 = vpack.c.b16 %v1737, %v1733
    %v1790 = vpack.c.b16 %v1738, %v1734
    %v1791 = vpack.c.b16 %v1743, %v1739
    %v1792 = vpack.c.b16 %v1744, %v1740
    %v1793 = vpack.c.b16 %v1745, %v1741
    %v1794 = vpack.c.b16 %v1746, %v1742
    %v1795 = vpack.c.b16 %v1751, %v1747
    %v1796 = vpack.c.b16 %v1752, %v1748
    %v1797 = vpack.c.b16 %v1753, %v1749
    %v1798 = vpack.c.b16 %v1754, %v1750
    %v1799 = vpack.c.b16 %v1759, %v1755
    %v1800 = vpack.c.b16 %v1760, %v1756
    %v1801 = vpack.c.b16 %v1761, %v1757
    %v1802 = vpack.c.b16 %v1762, %v1758
    %v1803 = vpack.c.b16 %v1767, %v1763
    %v1804 = vpack.c.b16 %v1768, %v1764
    %v1805 = vpack.c.b16 %v1769, %v1765
    %v1806 = vpack.c.b16 %v1770, %v1766
    %v1807 = vpack.c.b16 %v1775, %v1771
    %v1808 = vpack.c.b16 %v1776, %v1772
    %v1809 = vpack.c.b16 %v1777, %v1773
    %v1810 = vpack.c.b16 %v1778, %v1774
    %1843 = vmatprep.subr.bf16.mxu0 %v1780
    %1844 = vmatpush1.bf16.msra.mxu0 %v1779
    %1845 = vmatprep.subr.bf16.mxu0 %v1784
    %1846 = vmatpush1.bf16.msra.mxu0 %v1783
    %1847 = vmatprep.subr.bf16.mxu0 %v1788
    %1848 = vmatpush1.bf16.msra.mxu0 %v1787
    %1849 = vmatprep.subr.bf16.mxu0 %v1792
    %1850 = vmatpush1.bf16.msra.mxu0 %v1791
    %1851 = vmatprep.subr.bf16.mxu0 %v1796
    %1852 = vmatpush1.bf16.msra.mxu0 %v1795
    %1853 = vmatprep.subr.bf16.mxu0 %v1800
    %1854 = vmatpush1.bf16.msra.mxu0 %v1799
    %1855 = vmatprep.subr.bf16.mxu0 %v1804
    %1856 = vmatpush1.bf16.msra.mxu0 %v1803
    %1857 = vmatprep.subr.bf16.mxu0 %v1808
    %1858 = vmatpush1.bf16.msra.mxu0 %v1807
    %1859 = vmatprep.subr.bf16.mxu0 0
    %1860 = vmatpush1.bf16.msra.mxu0 0
    %1861 = vmatprep.subr.bf16.mxu0 0
    %1862 = vmatpush1.bf16.msra.mxu0 0
    %1863 = vmatprep.subr.bf16.mxu0 0
    %1864 = vmatpush1.bf16.msra.mxu0 0
    %1865 = vmatprep.subr.bf16.mxu0 0
    %1866 = vmatpush1.bf16.msra.mxu0 0
    %1867 = vmatprep.subr.bf16.mxu0 0
    %1868 = vmatpush1.bf16.msra.mxu0 0
    %1869 = vmatprep.subr.bf16.mxu0 0
    %1870 = vmatpush1.bf16.msra.mxu0 0
    %1871 = vmatprep.subr.bf16.mxu0 0
    %1872 = vmatpush1.bf16.msra.mxu0 0
    %1873 = vmatprep.subr.bf16.mxu0 0
    %1874 = vmatpush1.bf16.msra.mxu0 0
    %1875 = vmatprep.mubr.bf16.mxu0 0
    %1876 = vmatmul.mubr.bf16.gmra.mrb[0].mxu0 %v1650
    %v1877 = vpop.f32.mrb[0].mxu0
    %v1878 = vadd.f32 %v548, %v1877
    %v1879 = vpop.f32.mrb[0].mxu0
    %v1880 = vadd.f32 %v552, %v1879
    %v1881 = vpop.f32.mrb[0].mxu0
    %v1882 = vpop.f32.mrb[0].mxu0
    %1883 = vdwg.mxu0
    %1884 = vmatprep.subr.bf16.mxu0 %v1782
    %1885 = vmatpush1.bf16.msra.mxu0 %v1781
    %1886 = vmatprep.subr.bf16.mxu0 %v1786
    %1887 = vmatpush1.bf16.msra.mxu0 %v1785
    %1888 = vmatprep.subr.bf16.mxu0 %v1790
    %1889 = vmatpush1.bf16.msra.mxu0 %v1789
    %1890 = vmatprep.subr.bf16.mxu0 %v1794
    %1891 = vmatpush1.bf16.msra.mxu0 %v1793
    %1892 = vmatprep.subr.bf16.mxu0 %v1798
    %1893 = vmatpush1.bf16.msra.mxu0 %v1797
    %1894 = vmatprep.subr.bf16.mxu0 %v1802
    %1895 = vmatpush1.bf16.msra.mxu0 %v1801
    %1896 = vmatprep.subr.bf16.mxu0 %v1806
    %1897 = vmatpush1.bf16.msra.mxu0 %v1805
    %1898 = vmatprep.subr.bf16.mxu0 %v1810
    %1899 = vmatpush1.bf16.msra.mxu0 %v1809
    %1900 = vmatprep.subr.bf16.mxu0 0
    %1901 = vmatpush1.bf16.msra.mxu0 0
    %1902 = vmatprep.subr.bf16.mxu0 0
    %1903 = vmatpush1.bf16.msra.mxu0 0
    %1904 = vmatprep.subr.bf16.mxu0 0
    %1905 = vmatpush1.bf16.msra.mxu0 0
    %1906 = vmatprep.subr.bf16.mxu0 0
    %1907 = vmatpush1.bf16.msra.mxu0 0
    %1908 = vmatprep.subr.bf16.mxu0 0
    %1909 = vmatpush1.bf16.msra.mxu0 0
    %1910 = vmatprep.subr.bf16.mxu0 0
    %1911 = vmatpush1.bf16.msra.mxu0 0
    %1912 = vmatprep.subr.bf16.mxu0 0
    %1913 = vmatpush1.bf16.msra.mxu0 0
    %1914 = vmatprep.subr.bf16.mxu0 0
    %1915 = vmatpush1.bf16.msra.mxu0 0
    %1916 = vmatprep.mubr.bf16.mxu0 0
    %1917 = vmatmul.mubr.bf16.gmra.mrb[0].mxu0 %v1650
    %v1918 = vpop.f32.mrb[0].mxu0
    %v1919 = vadd.f32 %v556, %v1918
    %v1920 = vpop.f32.mrb[0].mxu0
    %v1921 = vadd.f32 %v560, %v1920
    %v1922 = vpop.f32.mrb[0].mxu0
    %v1923 = vpop.f32.mrb[0].mxu0
    %1924 = vdwg.mxu0
    %v1925 = vmul.f32 %v1878, 0.5
    %v1926 = vtanh.pop %v1925
    %v1927 = vmul.f32 %v1926, 0.5
    %v1928 = vadd.f32 %v1927, 0.5
    %v1929 = vmul.f32 %v1880, 0.5
    %v1930 = vtanh.pop %v1929
    %v1931 = vmul.f32 %v1930, 0.5
    %v1932 = vadd.f32 %v1931, 0.5
    %v1933 = vtanh.pop %v1919
    %v1934 = vmul.f32 %v1921, 0.5
    %v1935 = vtanh.pop %v1934
    %v1936 = vmul.f32 %v1935, 0.5
    %v1937 = vadd.f32 %v1936, 0.5
    %v1938 = vmul.f32 %v1932, %v1647
    %v1939 = vmul.f32 %v1928, %v1933
    %v1940 = vadd.f32 %v1938, %v1939
    %v1941 = vtanh.pop %v1940
    %v1942 = vmul.f32 %v1937, %v1941
    %1943 = vst [vmem:[#allocation3 + $0x38] sm:$0xff] %v1942
    %v1944 = vpack.c.bf16 %v1942, %v1942
    %v1945 = vld [vmem:[#allocation12] sm:$0xff]
    %v1946 = vld [vmem:[#allocation12 + $0x8] sm:$0xff]
    %v1947 = vld [vmem:[#allocation12 + $0x10] sm:$0xff]
    %v1948 = vld [vmem:[#allocation12 + $0x18] sm:$0xff]
    %v1949 = vld [vmem:[#allocation12 + $0x20] sm:$0xff]
    %v1950 = vld [vmem:[#allocation12 + $0x28] sm:$0xff]
    %v1951 = vld [vmem:[#allocation12 + $0x30] sm:$0xff]
    %v1952 = vld [vmem:[#allocation12 + $0x38] sm:$0xff]
    %v1953 = vld [vmem:[#allocation12 + $0x40] sm:$0xff]
    %v1954 = vld [vmem:[#allocation12 + $0x48] sm:$0xff]
    %v1955 = vld [vmem:[#allocation12 + $0x50] sm:$0xff]
    %v1956 = vld [vmem:[#allocation12 + $0x58] sm:$0xff]
    %v1957 = vld [vmem:[#allocation12 + $0x60] sm:$0xff]
    %v1958 = vld [vmem:[#allocation12 + $0x68] sm:$0xff]
    %v1959 = vld [vmem:[#allocation12 + $0x70] sm:$0xff]
    %v1960 = vld [vmem:[#allocation12 + $0x78] sm:$0xff]
    %v1961 = vld [vmem:[#allocation12 + $0x80] sm:$0xff]
    %v1962 = vld [vmem:[#allocation12 + $0x88] sm:$0xff]
    %v1963 = vld [vmem:[#allocation12 + $0x90] sm:$0xff]
    %v1964 = vld [vmem:[#allocation12 + $0x98] sm:$0xff]
    %v1965 = vld [vmem:[#allocation12 + $0xa0] sm:$0xff]
    %v1966 = vld [vmem:[#allocation12 + $0xa8] sm:$0xff]
    %v1967 = vld [vmem:[#allocation12 + $0xb0] sm:$0xff]
    %v1968 = vld [vmem:[#allocation12 + $0xb8] sm:$0xff]
    %v1969 = vld [vmem:[#allocation12 + $0xc0] sm:$0xff]
    %v1970 = vld [vmem:[#allocation12 + $0xc8] sm:$0xff]
    %v1971 = vld [vmem:[#allocation12 + $0xd0] sm:$0xff]
    %v1972 = vld [vmem:[#allocation12 + $0xd8] sm:$0xff]
    %v1973 = vld [vmem:[#allocation12 + $0xe0] sm:$0xff]
    %v1974 = vld [vmem:[#allocation12 + $0xe8] sm:$0xff]
    %v1975 = vld [vmem:[#allocation12 + $0xf0] sm:$0xff]
    %v1976 = vld [vmem:[#allocation12 + $0xf8] sm:$0xff]
    %v2009 = vunpack.c.l.b16 %v1945
    %v2010 = vunpack.c.h.b16 %v1945
    %v2011 = vunpack.c.l.b16 %v1946
    %v2012 = vunpack.c.h.b16 %v1946
    %v2013 = vunpack.c.l.b16 %v1947
    %v2014 = vunpack.c.h.b16 %v1947
    %v2015 = vunpack.c.l.b16 %v1948
    %v2016 = vunpack.c.h.b16 %v1948
    %v2017 = vunpack.c.l.b16 %v1949
    %v2018 = vunpack.c.h.b16 %v1949
    %v2019 = vunpack.c.l.b16 %v1950
    %v2020 = vunpack.c.h.b16 %v1950
    %v2021 = vunpack.c.l.b16 %v1951
    %v2022 = vunpack.c.h.b16 %v1951
    %v2023 = vunpack.c.l.b16 %v1952
    %v2024 = vunpack.c.h.b16 %v1952
    %v2025 = vunpack.c.l.b16 %v1953
    %v2026 = vunpack.c.h.b16 %v1953
    %v2027 = vunpack.c.l.b16 %v1954
    %v2028 = vunpack.c.h.b16 %v1954
    %v2029 = vunpack.c.l.b16 %v1955
    %v2030 = vunpack.c.h.b16 %v1955
    %v2031 = vunpack.c.l.b16 %v1956
    %v2032 = vunpack.c.h.b16 %v1956
    %v2033 = vunpack.c.l.b16 %v1957
    %v2034 = vunpack.c.h.b16 %v1957
    %v2035 = vunpack.c.l.b16 %v1958
    %v2036 = vunpack.c.h.b16 %v1958
    %v2037 = vunpack.c.l.b16 %v1959
    %v2038 = vunpack.c.h.b16 %v1959
    %v2039 = vunpack.c.l.b16 %v1960
    %v2040 = vunpack.c.h.b16 %v1960
    %v2041 = vunpack.c.l.b16 %v1961
    %v2042 = vunpack.c.h.b16 %v1961
    %v2043 = vunpack.c.l.b16 %v1962
    %v2044 = vunpack.c.h.b16 %v1962
    %v2045 = vunpack.c.l.b16 %v1963
    %v2046 = vunpack.c.h.b16 %v1963
    %v2047 = vunpack.c.l.b16 %v1964
    %v2048 = vunpack.c.h.b16 %v1964
    %v2049 = vunpack.c.l.b16 %v1965
    %v2050 = vunpack.c.h.b16 %v1965
    %v2051 = vunpack.c.l.b16 %v1966
    %v2052 = vunpack.c.h.b16 %v1966
    %v2053 = vunpack.c.l.b16 %v1967
    %v2054 = vunpack.c.h.b16 %v1967
    %v2055 = vunpack.c.l.b16 %v1968
    %v2056 = vunpack.c.h.b16 %v1968
    %v2057 = vunpack.c.l.b16 %v1969
    %v2058 = vunpack.c.h.b16 %v1969
    %v2059 = vunpack.c.l.b16 %v1970
    %v2060 = vunpack.c.h.b16 %v1970
    %v2061 = vunpack.c.l.b16 %v1971
    %v2062 = vunpack.c.h.b16 %v1971
    %v2063 = vunpack.c.l.b16 %v1972
    %v2064 = vunpack.c.h.b16 %v1972
    %v2065 = vunpack.c.l.b16 %v1973
    %v2066 = vunpack.c.h.b16 %v1973
    %v2067 = vunpack.c.l.b16 %v1974
    %v2068 = vunpack.c.h.b16 %v1974
    %v2069 = vunpack.c.l.b16 %v1975
    %v2070 = vunpack.c.h.b16 %v1975
    %v2071 = vunpack.c.l.b16 %v1976
    %v2072 = vunpack.c.h.b16 %v1976
    %v2073 = vpack.c.b16 %v2013, %v2009
    %v2074 = vpack.c.b16 %v2014, %v2010
    %v2075 = vpack.c.b16 %v2015, %v2011
    %v2076 = vpack.c.b16 %v2016, %v2012
    %v2077 = vpack.c.b16 %v2021, %v2017
    %v2078 = vpack.c.b16 %v2022, %v2018
    %v2079 = vpack.c.b16 %v2023, %v2019
    %v2080 = vpack.c.b16 %v2024, %v2020
    %v2081 = vpack.c.b16 %v2029, %v2025
    %v2082 = vpack.c.b16 %v2030, %v2026
    %v2083 = vpack.c.b16 %v2031, %v2027
    %v2084 = vpack.c.b16 %v2032, %v2028
    %v2085 = vpack.c.b16 %v2037, %v2033
    %v2086 = vpack.c.b16 %v2038, %v2034
    %v2087 = vpack.c.b16 %v2039, %v2035
    %v2088 = vpack.c.b16 %v2040, %v2036
    %v2089 = vpack.c.b16 %v2045, %v2041
    %v2090 = vpack.c.b16 %v2046, %v2042
    %v2091 = vpack.c.b16 %v2047, %v2043
    %v2092 = vpack.c.b16 %v2048, %v2044
    %v2093 = vpack.c.b16 %v2053, %v2049
    %v2094 = vpack.c.b16 %v2054, %v2050
    %v2095 = vpack.c.b16 %v2055, %v2051
    %v2096 = vpack.c.b16 %v2056, %v2052
    %v2097 = vpack.c.b16 %v2061, %v2057
    %v2098 = vpack.c.b16 %v2062, %v2058
    %v2099 = vpack.c.b16 %v2063, %v2059
    %v2100 = vpack.c.b16 %v2064, %v2060
    %v2101 = vpack.c.b16 %v2069, %v2065
    %v2102 = vpack.c.b16 %v2070, %v2066
    %v2103 = vpack.c.b16 %v2071, %v2067
    %v2104 = vpack.c.b16 %v2072, %v2068
    %2137 = vmatprep.subr.bf16.mxu0 %v2074
    %2138 = vmatpush1.bf16.msra.mxu0 %v2073
    %2139 = vmatprep.subr.bf16.mxu0 %v2078
    %2140 = vmatpush1.bf16.msra.mxu0 %v2077
    %2141 = vmatprep.subr.bf16.mxu0 %v2082
    %2142 = vmatpush1.bf16.msra.mxu0 %v2081
    %2143 = vmatprep.subr.bf16.mxu0 %v2086
    %2144 = vmatpush1.bf16.msra.mxu0 %v2085
    %2145 = vmatprep.subr.bf16.mxu0 %v2090
    %2146 = vmatpush1.bf16.msra.mxu0 %v2089
    %2147 = vmatprep.subr.bf16.mxu0 %v2094
    %2148 = vmatpush1.bf16.msra.mxu0 %v2093
    %2149 = vmatprep.subr.bf16.mxu0 %v2098
    %2150 = vmatpush1.bf16.msra.mxu0 %v2097
    %2151 = vmatprep.subr.bf16.mxu0 %v2102
    %2152 = vmatpush1.bf16.msra.mxu0 %v2101
    %2153 = vmatprep.subr.bf16.mxu0 0
    %2154 = vmatpush1.bf16.msra.mxu0 0
    %2155 = vmatprep.subr.bf16.mxu0 0
    %2156 = vmatpush1.bf16.msra.mxu0 0
    %2157 = vmatprep.subr.bf16.mxu0 0
    %2158 = vmatpush1.bf16.msra.mxu0 0
    %2159 = vmatprep.subr.bf16.mxu0 0
    %2160 = vmatpush1.bf16.msra.mxu0 0
    %2161 = vmatprep.subr.bf16.mxu0 0
    %2162 = vmatpush1.bf16.msra.mxu0 0
    %2163 = vmatprep.subr.bf16.mxu0 0
    %2164 = vmatpush1.bf16.msra.mxu0 0
    %2165 = vmatprep.subr.bf16.mxu0 0
    %2166 = vmatpush1.bf16.msra.mxu0 0
    %2167 = vmatprep.subr.bf16.mxu0 0
    %2168 = vmatpush1.bf16.msra.mxu0 0
    %2169 = vmatprep.mubr.bf16.mxu0 0
    %2170 = vmatmul.mubr.bf16.gmra.mrb[0].mxu0 %v1944
    %v2171 = vpop.f32.mrb[0].mxu0
    %v2172 = vadd.f32 %v570, %v2171
    %v2173 = vpop.f32.mrb[0].mxu0
    %v2174 = vadd.f32 %v574, %v2173
    %v2175 = vpop.f32.mrb[0].mxu0
    %v2176 = vpop.f32.mrb[0].mxu0
    %2177 = vdwg.mxu0
    %2178 = vmatprep.subr.bf16.mxu0 %v2076
    %2179 = vmatpush1.bf16.msra.mxu0 %v2075
    %2180 = vmatprep.subr.bf16.mxu0 %v2080
    %2181 = vmatpush1.bf16.msra.mxu0 %v2079
    %2182 = vmatprep.subr.bf16.mxu0 %v2084
    %2183 = vmatpush1.bf16.msra.mxu0 %v2083
    %2184 = vmatprep.subr.bf16.mxu0 %v2088
    %2185 = vmatpush1.bf16.msra.mxu0 %v2087
    %2186 = vmatprep.subr.bf16.mxu0 %v2092
    %2187 = vmatpush1.bf16.msra.mxu0 %v2091
    %2188 = vmatprep.subr.bf16.mxu0 %v2096
    %2189 = vmatpush1.bf16.msra.mxu0 %v2095
    %2190 = vmatprep.subr.bf16.mxu0 %v2100
    %2191 = vmatpush1.bf16.msra.mxu0 %v2099
    %2192 = vmatprep.subr.bf16.mxu0 %v2104
    %2193 = vmatpush1.bf16.msra.mxu0 %v2103
    %2194 = vmatprep.subr.bf16.mxu0 0
    %2195 = vmatpush1.bf16.msra.mxu0 0
    %2196 = vmatprep.subr.bf16.mxu0 0
    %2197 = vmatpush1.bf16.msra.mxu0 0
    %2198 = vmatprep.subr.bf16.mxu0 0
    %2199 = vmatpush1.bf16.msra.mxu0 0
    %2200 = vmatprep.subr.bf16.mxu0 0
    %2201 = vmatpush1.bf16.msra.mxu0 0
    %2202 = vmatprep.subr.bf16.mxu0 0
    %2203 = vmatpush1.bf16.msra.mxu0 0
    %2204 = vmatprep.subr.bf16.mxu0 0
    %2205 = vmatpush1.bf16.msra.mxu0 0
    %2206 = vmatprep.subr.bf16.mxu0 0
    %2207 = vmatpush1.bf16.msra.mxu0 0
    %2208 = vmatprep.subr.bf16.mxu0 0
    %2209 = vmatpush1.bf16.msra.mxu0 0
    %2210 = vmatprep.mubr.bf16.mxu0 0
    %2211 = vmatmul.mubr.bf16.gmra.mrb[0].mxu0 %v1944
    %v2212 = vpop.f32.mrb[0].mxu0
    %v2213 = vadd.f32 %v578, %v2212
    %v2214 = vpop.f32.mrb[0].mxu0
    %v2215 = vadd.f32 %v582, %v2214
    %v2216 = vpop.f32.mrb[0].mxu0
    %v2217 = vpop.f32.mrb[0].mxu0
    %2218 = vdwg.mxu0
    %v2219 = vmul.f32 %v2172, 0.5
    %v2220 = vtanh.pop %v2219
    %v2221 = vmul.f32 %v2220, 0.5
    %v2222 = vadd.f32 %v2221, 0.5
    %v2223 = vmul.f32 %v2174, 0.5
    %v2224 = vtanh.pop %v2223
    %v2225 = vmul.f32 %v2224, 0.5
    %v2226 = vadd.f32 %v2225, 0.5
    %v2227 = vtanh.pop %v2213
    %v2228 = vmul.f32 %v2215, 0.5
    %v2229 = vtanh.pop %v2228
    %v2230 = vmul.f32 %v2229, 0.5
    %v2231 = vadd.f32 %v2230, 0.5
    %v2232 = vmul.f32 %v2226, %v1940
    %v2233 = vmul.f32 %v2222, %v2227
    %v2234 = vadd.f32 %v2232, %v2233
    %v2235 = vtanh.pop %v2234
    %v2236 = vmul.f32 %v2231, %v2235
    %2237 = vst [vmem:[#allocation3 + $0x30] sm:$0xff] %v2236
    %v2238 = vpack.c.bf16 %v2236, %v2236
    %v2239 = vld [vmem:[#allocation12] sm:$0xff]
    %v2240 = vld [vmem:[#allocation12 + $0x8] sm:$0xff]
    %v2241 = vld [vmem:[#allocation12 + $0x10] sm:$0xff]
    %v2242 = vld [vmem:[#allocation12 + $0x18] sm:$0xff]
    %v2243 = vld [vmem:[#allocation12 + $0x20] sm:$0xff]
    %v2244 = vld [vmem:[#allocation12 + $0x28] sm:$0xff]
    %v2245 = vld [vmem:[#allocation12 + $0x30] sm:$0xff]
    %v2246 = vld [vmem:[#allocation12 + $0x38] sm:$0xff]
    %v2247 = vld [vmem:[#allocation12 + $0x40] sm:$0xff]
    %v2248 = vld [vmem:[#allocation12 + $0x48] sm:$0xff]
    %v2249 = vld [vmem:[#allocation12 + $0x50] sm:$0xff]
    %v2250 = vld [vmem:[#allocation12 + $0x58] sm:$0xff]
    %v2251 = vld [vmem:[#allocation12 + $0x60] sm:$0xff]
    %v2252 = vld [vmem:[#allocation12 + $0x68] sm:$0xff]
    %v2253 = vld [vmem:[#allocation12 + $0x70] sm:$0xff]
    %v2254 = vld [vmem:[#allocation12 + $0x78] sm:$0xff]
    %v2255 = vld [vmem:[#allocation12 + $0x80] sm:$0xff]
    %v2256 = vld [vmem:[#allocation12 + $0x88] sm:$0xff]
    %v2257 = vld [vmem:[#allocation12 + $0x90] sm:$0xff]
    %v2258 = vld [vmem:[#allocation12 + $0x98] sm:$0xff]
    %v2259 = vld [vmem:[#allocation12 + $0xa0] sm:$0xff]
    %v2260 = vld [vmem:[#allocation12 + $0xa8] sm:$0xff]
    %v2261 = vld [vmem:[#allocation12 + $0xb0] sm:$0xff]
    %v2262 = vld [vmem:[#allocation12 + $0xb8] sm:$0xff]
    %v2263 = vld [vmem:[#allocation12 + $0xc0] sm:$0xff]
    %v2264 = vld [vmem:[#allocation12 + $0xc8] sm:$0xff]
    %v2265 = vld [vmem:[#allocation12 + $0xd0] sm:$0xff]
    %v2266 = vld [vmem:[#allocation12 + $0xd8] sm:$0xff]
    %v2267 = vld [vmem:[#allocation12 + $0xe0] sm:$0xff]
    %v2268 = vld [vmem:[#allocation12 + $0xe8] sm:$0xff]
    %v2269 = vld [vmem:[#allocation12 + $0xf0] sm:$0xff]
    %v2270 = vld [vmem:[#allocation12 + $0xf8] sm:$0xff]
    %v2303 = vunpack.c.l.b16 %v2239
    %v2304 = vunpack.c.h.b16 %v2239
    %v2305 = vunpack.c.l.b16 %v2240
    %v2306 = vunpack.c.h.b16 %v2240
    %v2307 = vunpack.c.l.b16 %v2241
    %v2308 = vunpack.c.h.b16 %v2241
    %v2309 = vunpack.c.l.b16 %v2242
    %v2310 = vunpack.c.h.b16 %v2242
    %v2311 = vunpack.c.l.b16 %v2243
    %v2312 = vunpack.c.h.b16 %v2243
    %v2313 = vunpack.c.l.b16 %v2244
    %v2314 = vunpack.c.h.b16 %v2244
    %v2315 = vunpack.c.l.b16 %v2245
    %v2316 = vunpack.c.h.b16 %v2245
    %v2317 = vunpack.c.l.b16 %v2246
    %v2318 = vunpack.c.h.b16 %v2246
    %v2319 = vunpack.c.l.b16 %v2247
    %v2320 = vunpack.c.h.b16 %v2247
    %v2321 = vunpack.c.l.b16 %v2248
    %v2322 = vunpack.c.h.b16 %v2248
    %v2323 = vunpack.c.l.b16 %v2249
    %v2324 = vunpack.c.h.b16 %v2249
    %v2325 = vunpack.c.l.b16 %v2250
    %v2326 = vunpack.c.h.b16 %v2250
    %v2327 = vunpack.c.l.b16 %v2251
    %v2328 = vunpack.c.h.b16 %v2251
    %v2329 = vunpack.c.l.b16 %v2252
    %v2330 = vunpack.c.h.b16 %v2252
    %v2331 = vunpack.c.l.b16 %v2253
    %v2332 = vunpack.c.h.b16 %v2253
    %v2333 = vunpack.c.l.b16 %v2254
    %v2334 = vunpack.c.h.b16 %v2254
    %v2335 = vunpack.c.l.b16 %v2255
    %v2336 = vunpack.c.h.b16 %v2255
    %v2337 = vunpack.c.l.b16 %v2256
    %v2338 = vunpack.c.h.b16 %v2256
    %v2339 = vunpack.c.l.b16 %v2257
    %v2340 = vunpack.c.h.b16 %v2257
    %v2341 = vunpack.c.l.b16 %v2258
    %v2342 = vunpack.c.h.b16 %v2258
    %v2343 = vunpack.c.l.b16 %v2259
    %v2344 = vunpack.c.h.b16 %v2259
    %v2345 = vunpack.c.l.b16 %v2260
    %v2346 = vunpack.c.h.b16 %v2260
    %v2347 = vunpack.c.l.b16 %v2261
    %v2348 = vunpack.c.h.b16 %v2261
    %v2349 = vunpack.c.l.b16 %v2262
    %v2350 = vunpack.c.h.b16 %v2262
    %v2351 = vunpack.c.l.b16 %v2263
    %v2352 = vunpack.c.h.b16 %v2263
    %v2353 = vunpack.c.l.b16 %v2264
    %v2354 = vunpack.c.h.b16 %v2264
    %v2355 = vunpack.c.l.b16 %v2265
    %v2356 = vunpack.c.h.b16 %v2265
    %v2357 = vunpack.c.l.b16 %v2266
    %v2358 = vunpack.c.h.b16 %v2266
    %v2359 = vunpack.c.l.b16 %v2267
    %v2360 = vunpack.c.h.b16 %v2267
    %v2361 = vunpack.c.l.b16 %v2268
    %v2362 = vunpack.c.h.b16 %v2268
    %v2363 = vunpack.c.l.b16 %v2269
    %v2364 = vunpack.c.h.b16 %v2269
    %v2365 = vunpack.c.l.b16 %v2270
    %v2366 = vunpack.c.h.b16 %v2270
    %v2367 = vpack.c.b16 %v2307, %v2303
    %v2368 = vpack.c.b16 %v2308, %v2304
    %v2369 = vpack.c.b16 %v2309, %v2305
    %v2370 = vpack.c.b16 %v2310, %v2306
    %v2371 = vpack.c.b16 %v2315, %v2311
    %v2372 = vpack.c.b16 %v2316, %v2312
    %v2373 = vpack.c.b16 %v2317, %v2313
    %v2374 = vpack.c.b16 %v2318, %v2314
    %v2375 = vpack.c.b16 %v2323, %v2319
    %v2376 = vpack.c.b16 %v2324, %v2320
    %v2377 = vpack.c.b16 %v2325, %v2321
    %v2378 = vpack.c.b16 %v2326, %v2322
    %v2379 = vpack.c.b16 %v2331, %v2327
    %v2380 = vpack.c.b16 %v2332, %v2328
    %v2381 = vpack.c.b16 %v2333, %v2329
    %v2382 = vpack.c.b16 %v2334, %v2330
    %v2383 = vpack.c.b16 %v2339, %v2335
    %v2384 = vpack.c.b16 %v2340, %v2336
    %v2385 = vpack.c.b16 %v2341, %v2337
    %v2386 = vpack.c.b16 %v2342, %v2338
    %v2387 = vpack.c.b16 %v2347, %v2343
    %v2388 = vpack.c.b16 %v2348, %v2344
    %v2389 = vpack.c.b16 %v2349, %v2345
    %v2390 = vpack.c.b16 %v2350, %v2346
    %v2391 = vpack.c.b16 %v2355, %v2351
    %v2392 = vpack.c.b16 %v2356, %v2352
    %v2393 = vpack.c.b16 %v2357, %v2353
    %v2394 = vpack.c.b16 %v2358, %v2354
    %v2395 = vpack.c.b16 %v2363, %v2359
    %v2396 = vpack.c.b16 %v2364, %v2360
    %v2397 = vpack.c.b16 %v2365, %v2361
    %v2398 = vpack.c.b16 %v2366, %v2362
    %2431 = vmatprep.subr.bf16.mxu0 %v2368
    %2432 = vmatpush1.bf16.msra.mxu0 %v2367
    %2433 = vmatprep.subr.bf16.mxu0 %v2372
    %2434 = vmatpush1.bf16.msra.mxu0 %v2371
    %2435 = vmatprep.subr.bf16.mxu0 %v2376
    %2436 = vmatpush1.bf16.msra.mxu0 %v2375
    %2437 = vmatprep.subr.bf16.mxu0 %v2380
    %2438 = vmatpush1.bf16.msra.mxu0 %v2379
    %2439 = vmatprep.subr.bf16.mxu0 %v2384
    %2440 = vmatpush1.bf16.msra.mxu0 %v2383
    %2441 = vmatprep.subr.bf16.mxu0 %v2388
    %2442 = vmatpush1.bf16.msra.mxu0 %v2387
    %2443 = vmatprep.subr.bf16.mxu0 %v2392
    %2444 = vmatpush1.bf16.msra.mxu0 %v2391
    %2445 = vmatprep.subr.bf16.mxu0 %v2396
    %2446 = vmatpush1.bf16.msra.mxu0 %v2395
    %2447 = vmatprep.subr.bf16.mxu0 0
    %2448 = vmatpush1.bf16.msra.mxu0 0
    %2449 = vmatprep.subr.bf16.mxu0 0
    %2450 = vmatpush1.bf16.msra.mxu0 0
    %2451 = vmatprep.subr.bf16.mxu0 0
    %2452 = vmatpush1.bf16.msra.mxu0 0
    %2453 = vmatprep.subr.bf16.mxu0 0
    %2454 = vmatpush1.bf16.msra.mxu0 0
    %2455 = vmatprep.subr.bf16.mxu0 0
    %2456 = vmatpush1.bf16.msra.mxu0 0
    %2457 = vmatprep.subr.bf16.mxu0 0
    %2458 = vmatpush1.bf16.msra.mxu0 0
    %2459 = vmatprep.subr.bf16.mxu0 0
    %2460 = vmatpush1.bf16.msra.mxu0 0
    %2461 = vmatprep.subr.bf16.mxu0 0
    %2462 = vmatpush1.bf16.msra.mxu0 0
    %2463 = vmatprep.mubr.bf16.mxu0 0
    %2464 = vmatmul.mubr.bf16.gmra.mrb[0].mxu0 %v2238
    %v2465 = vpop.f32.mrb[0].mxu0
    %v2466 = vadd.f32 %v570, %v2465
    %v2467 = vpop.f32.mrb[0].mxu0
    %v2468 = vadd.f32 %v574, %v2467
    %v2469 = vpop.f32.mrb[0].mxu0
    %v2470 = vpop.f32.mrb[0].mxu0
    %2471 = vdwg.mxu0
    %2472 = vmatprep.subr.bf16.mxu0 %v2370
    %2473 = vmatpush1.bf16.msra.mxu0 %v2369
    %2474 = vmatprep.subr.bf16.mxu0 %v2374
    %2475 = vmatpush1.bf16.msra.mxu0 %v2373
    %2476 = vmatprep.subr.bf16.mxu0 %v2378
    %2477 = vmatpush1.bf16.msra.mxu0 %v2377
    %2478 = vmatprep.subr.bf16.mxu0 %v2382
    %2479 = vmatpush1.bf16.msra.mxu0 %v2381
    %2480 = vmatprep.subr.bf16.mxu0 %v2386
    %2481 = vmatpush1.bf16.msra.mxu0 %v2385
    %2482 = vmatprep.subr.bf16.mxu0 %v2390
    %2483 = vmatpush1.bf16.msra.mxu0 %v2389
    %2484 = vmatprep.subr.bf16.mxu0 %v2394
    %2485 = vmatpush1.bf16.msra.mxu0 %v2393
    %2486 = vmatprep.subr.bf16.mxu0 %v2398
    %2487 = vmatpush1.bf16.msra.mxu0 %v2397
    %2488 = vmatprep.subr.bf16.mxu0 0
    %2489 = vmatpush1.bf16.msra.mxu0 0
    %2490 = vmatprep.subr.bf16.mxu0 0
    %2491 = vmatpush1.bf16.msra.mxu0 0
    %2492 = vmatprep.subr.bf16.mxu0 0
    %2493 = vmatpush1.bf16.msra.mxu0 0
    %2494 = vmatprep.subr.bf16.mxu0 0
    %2495 = vmatpush1.bf16.msra.mxu0 0
    %2496 = vmatprep.subr.bf16.mxu0 0
    %2497 = vmatpush1.bf16.msra.mxu0 0
    %2498 = vmatprep.subr.bf16.mxu0 0
    %2499 = vmatpush1.bf16.msra.mxu0 0
    %2500 = vmatprep.subr.bf16.mxu0 0
    %2501 = vmatpush1.bf16.msra.mxu0 0
    %2502 = vmatprep.subr.bf16.mxu0 0
    %2503 = vmatpush1.bf16.msra.mxu0 0
    %2504 = vmatprep.mubr.bf16.mxu0 0
    %2505 = vmatmul.mubr.bf16.gmra.mrb[0].mxu0 %v2238
    %v2506 = vpop.f32.mrb[0].mxu0
    %v2507 = vadd.f32 %v578, %v2506
    %v2508 = vpop.f32.mrb[0].mxu0
    %v2509 = vadd.f32 %v582, %v2508
    %v2510 = vpop.f32.mrb[0].mxu0
    %v2511 = vpop.f32.mrb[0].mxu0
    %2512 = vdwg.mxu0
    %v2513 = vmul.f32 %v2466, 0.5
    %v2514 = vtanh.pop %v2513
    %v2515 = vmul.f32 %v2514, 0.5
    %v2516 = vadd.f32 %v2515, 0.5
    %v2517 = vmul.f32 %v2468, 0.5
    %v2518 = vtanh.pop %v2517
    %v2519 = vmul.f32 %v2518, 0.5
    %v2520 = vadd.f32 %v2519, 0.5
    %v2521 = vtanh.pop %v2507
    %v2522 = vmul.f32 %v2509, 0.5
    %v2523 = vtanh.pop %v2522
    %v2524 = vmul.f32 %v2523, 0.5
    %v2525 = vadd.f32 %v2524, 0.5
    %v2526 = vmul.f32 %v2520, %v2234
    %v2527 = vmul.f32 %v2516, %v2521
    %v2528 = vadd.f32 %v2526, %v2527
    %v2529 = vtanh.pop %v2528
    %v2530 = vmul.f32 %v2525, %v2529
    %2531 = vst [vmem:[#allocation3 + $0x28] sm:$0xff] %v2530
    %v2532 = vpack.c.bf16 %v2530, %v2530
    %v2533 = vld [vmem:[#allocation12] sm:$0xff]
    %v2534 = vld [vmem:[#allocation12 + $0x8] sm:$0xff]
    %v2535 = vld [vmem:[#allocation12 + $0x10] sm:$0xff]
    %v2536 = vld [vmem:[#allocation12 + $0x18] sm:$0xff]
    %v2537 = vld [vmem:[#allocation12 + $0x20] sm:$0xff]
    %v2538 = vld [vmem:[#allocation12 + $0x28] sm:$0xff]
    %v2539 = vld [vmem:[#allocation12 + $0x30] sm:$0xff]
    %v2540 = vld [vmem:[#allocation12 + $0x38] sm:$0xff]
    %v2541 = vld [vmem:[#allocation12 + $0x40] sm:$0xff]
    %v2542 = vld [vmem:[#allocation12 + $0x48] sm:$0xff]
    %v2543 = vld [vmem:[#allocation12 + $0x50] sm:$0xff]
    %v2544 = vld [vmem:[#allocation12 + $0x58] sm:$0xff]
    %v2545 = vld [vmem:[#allocation12 + $0x60] sm:$0xff]
    %v2546 = vld [vmem:[#allocation12 + $0x68] sm:$0xff]
    %v2547 = vld [vmem:[#allocation12 + $0x70] sm:$0xff]
    %v2548 = vld [vmem:[#allocation12 + $0x78] sm:$0xff]
    %v2549 = vld [vmem:[#allocation12 + $0x80] sm:$0xff]
    %v2550 = vld [vmem:[#allocation12 + $0x88] sm:$0xff]
    %v2551 = vld [vmem:[#allocation12 + $0x90] sm:$0xff]
    %v2552 = vld [vmem:[#allocation12 + $0x98] sm:$0xff]
    %v2553 = vld [vmem:[#allocation12 + $0xa0] sm:$0xff]
    %v2554 = vld [vmem:[#allocation12 + $0xa8] sm:$0xff]
    %v2555 = vld [vmem:[#allocation12 + $0xb0] sm:$0xff]
    %v2556 = vld [vmem:[#allocation12 + $0xb8] sm:$0xff]
    %v2557 = vld [vmem:[#allocation12 + $0xc0] sm:$0xff]
    %v2558 = vld [vmem:[#allocation12 + $0xc8] sm:$0xff]
    %v2559 = vld [vmem:[#allocation12 + $0xd0] sm:$0xff]
    %v2560 = vld [vmem:[#allocation12 + $0xd8] sm:$0xff]
    %v2561 = vld [vmem:[#allocation12 + $0xe0] sm:$0xff]
    %v2562 = vld [vmem:[#allocation12 + $0xe8] sm:$0xff]
    %v2563 = vld [vmem:[#allocation12 + $0xf0] sm:$0xff]
    %v2564 = vld [vmem:[#allocation12 + $0xf8] sm:$0xff]
    %v2597 = vunpack.c.l.b16 %v2533
    %v2598 = vunpack.c.h.b16 %v2533
    %v2599 = vunpack.c.l.b16 %v2534
    %v2600 = vunpack.c.h.b16 %v2534
    %v2601 = vunpack.c.l.b16 %v2535
    %v2602 = vunpack.c.h.b16 %v2535
    %v2603 = vunpack.c.l.b16 %v2536
    %v2604 = vunpack.c.h.b16 %v2536
    %v2605 = vunpack.c.l.b16 %v2537
    %v2606 = vunpack.c.h.b16 %v2537
    %v2607 = vunpack.c.l.b16 %v2538
    %v2608 = vunpack.c.h.b16 %v2538
    %v2609 = vunpack.c.l.b16 %v2539
    %v2610 = vunpack.c.h.b16 %v2539
    %v2611 = vunpack.c.l.b16 %v2540
    %v2612 = vunpack.c.h.b16 %v2540
    %v2613 = vunpack.c.l.b16 %v2541
    %v2614 = vunpack.c.h.b16 %v2541
    %v2615 = vunpack.c.l.b16 %v2542
    %v2616 = vunpack.c.h.b16 %v2542
    %v2617 = vunpack.c.l.b16 %v2543
    %v2618 = vunpack.c.h.b16 %v2543
    %v2619 = vunpack.c.l.b16 %v2544
    %v2620 = vunpack.c.h.b16 %v2544
    %v2621 = vunpack.c.l.b16 %v2545
    %v2622 = vunpack.c.h.b16 %v2545
    %v2623 = vunpack.c.l.b16 %v2546
    %v2624 = vunpack.c.h.b16 %v2546
    %v2625 = vunpack.c.l.b16 %v2547
    %v2626 = vunpack.c.h.b16 %v2547
    %v2627 = vunpack.c.l.b16 %v2548
    %v2628 = vunpack.c.h.b16 %v2548
    %v2629 = vunpack.c.l.b16 %v2549
    %v2630 = vunpack.c.h.b16 %v2549
    %v2631 = vunpack.c.l.b16 %v2550
    %v2632 = vunpack.c.h.b16 %v2550
    %v2633 = vunpack.c.l.b16 %v2551
    %v2634 = vunpack.c.h.b16 %v2551
    %v2635 = vunpack.c.l.b16 %v2552
    %v2636 = vunpack.c.h.b16 %v2552
    %v2637 = vunpack.c.l.b16 %v2553
    %v2638 = vunpack.c.h.b16 %v2553
    %v2639 = vunpack.c.l.b16 %v2554
    %v2640 = vunpack.c.h.b16 %v2554
    %v2641 = vunpack.c.l.b16 %v2555
    %v2642 = vunpack.c.h.b16 %v2555
    %v2643 = vunpack.c.l.b16 %v2556
    %v2644 = vunpack.c.h.b16 %v2556
    %v2645 = vunpack.c.l.b16 %v2557
    %v2646 = vunpack.c.h.b16 %v2557
    %v2647 = vunpack.c.l.b16 %v2558
    %v2648 = vunpack.c.h.b16 %v2558
    %v2649 = vunpack.c.l.b16 %v2559
    %v2650 = vunpack.c.h.b16 %v2559
    %v2651 = vunpack.c.l.b16 %v2560
    %v2652 = vunpack.c.h.b16 %v2560
    %v2653 = vunpack.c.l.b16 %v2561
    %v2654 = vunpack.c.h.b16 %v2561
    %v2655 = vunpack.c.l.b16 %v2562
    %v2656 = vunpack.c.h.b16 %v2562
    %v2657 = vunpack.c.l.b16 %v2563
    %v2658 = vunpack.c.h.b16 %v2563
    %v2659 = vunpack.c.l.b16 %v2564
    %v2660 = vunpack.c.h.b16 %v2564
    %v2661 = vpack.c.b16 %v2601, %v2597
    %v2662 = vpack.c.b16 %v2602, %v2598
    %v2663 = vpack.c.b16 %v2603, %v2599
    %v2664 = vpack.c.b16 %v2604, %v2600
    %v2665 = vpack.c.b16 %v2609, %v2605
    %v2666 = vpack.c.b16 %v2610, %v2606
    %v2667 = vpack.c.b16 %v2611, %v2607
    %v2668 = vpack.c.b16 %v2612, %v2608
    %v2669 = vpack.c.b16 %v2617, %v2613
    %v2670 = vpack.c.b16 %v2618, %v2614
    %v2671 = vpack.c.b16 %v2619, %v2615
    %v2672 = vpack.c.b16 %v2620, %v2616
    %v2673 = vpack.c.b16 %v2625, %v2621
    %v2674 = vpack.c.b16 %v2626, %v2622
    %v2675 = vpack.c.b16 %v2627, %v2623
    %v2676 = vpack.c.b16 %v2628, %v2624
    %v2677 = vpack.c.b16 %v2633, %v2629
    %v2678 = vpack.c.b16 %v2634, %v2630
    %v2679 = vpack.c.b16 %v2635, %v2631
    %v2680 = vpack.c.b16 %v2636, %v2632
    %v2681 = vpack.c.b16 %v2641, %v2637
    %v2682 = vpack.c.b16 %v2642, %v2638
    %v2683 = vpack.c.b16 %v2643, %v2639
    %v2684 = vpack.c.b16 %v2644, %v2640
    %v2685 = vpack.c.b16 %v2649, %v2645
    %v2686 = vpack.c.b16 %v2650, %v2646
    %v2687 = vpack.c.b16 %v2651, %v2647
    %v2688 = vpack.c.b16 %v2652, %v2648
    %v2689 = vpack.c.b16 %v2657, %v2653
    %v2690 = vpack.c.b16 %v2658, %v2654
    %v2691 = vpack.c.b16 %v2659, %v2655
    %v2692 = vpack.c.b16 %v2660, %v2656
    %2725 = vmatprep.subr.bf16.mxu0 %v2662
    %2726 = vmatpush1.bf16.msra.mxu0 %v2661
    %2727 = vmatprep.subr.bf16.mxu0 %v2666
    %2728 = vmatpush1.bf16.msra.mxu0 %v2665
    %2729 = vmatprep.subr.bf16.mxu0 %v2670
    %2730 = vmatpush1.bf16.msra.mxu0 %v2669
    %2731 = vmatprep.subr.bf16.mxu0 %v2674
    %2732 = vmatpush1.bf16.msra.mxu0 %v2673
    %2733 = vmatprep.subr.bf16.mxu0 %v2678
    %2734 = vmatpush1.bf16.msra.mxu0 %v2677
    %2735 = vmatprep.subr.bf16.mxu0 %v2682
    %2736 = vmatpush1.bf16.msra.mxu0 %v2681
    %2737 = vmatprep.subr.bf16.mxu0 %v2686
    %2738 = vmatpush1.bf16.msra.mxu0 %v2685
    %2739 = vmatprep.subr.bf16.mxu0 %v2690
    %2740 = vmatpush1.bf16.msra.mxu0 %v2689
    %2741 = vmatprep.subr.bf16.mxu0 0
    %2742 = vmatpush1.bf16.msra.mxu0 0
    %2743 = vmatprep.subr.bf16.mxu0 0
    %2744 = vmatpush1.bf16.msra.mxu0 0
    %2745 = vmatprep.subr.bf16.mxu0 0
    %2746 = vmatpush1.bf16.msra.mxu0 0
    %2747 = vmatprep.subr.bf16.mxu0 0
    %2748 = vmatpush1.bf16.msra.mxu0 0
    %2749 = vmatprep.subr.bf16.mxu0 0
    %2750 = vmatpush1.bf16.msra.mxu0 0
    %2751 = vmatprep.subr.bf16.mxu0 0
    %2752 = vmatpush1.bf16.msra.mxu0 0
    %2753 = vmatprep.subr.bf16.mxu0 0
    %2754 = vmatpush1.bf16.msra.mxu0 0
    %2755 = vmatprep.subr.bf16.mxu0 0
    %2756 = vmatpush1.bf16.msra.mxu0 0
    %2757 = vmatprep.mubr.bf16.mxu0 0
    %2758 = vmatmul.mubr.bf16.gmra.mrb[0].mxu0 %v2532
    %v2759 = vpop.f32.mrb[0].mxu0
    %v2760 = vadd.f32 %v570, %v2759
    %v2761 = vpop.f32.mrb[0].mxu0
    %v2762 = vadd.f32 %v574, %v2761
    %v2763 = vpop.f32.mrb[0].mxu0
    %v2764 = vpop.f32.mrb[0].mxu0
    %2765 = vdwg.mxu0
    %2766 = vmatprep.subr.bf16.mxu0 %v2664
    %2767 = vmatpush1.bf16.msra.mxu0 %v2663
    %2768 = vmatprep.subr.bf16.mxu0 %v2668
    %2769 = vmatpush1.bf16.msra.mxu0 %v2667
    %2770 = vmatprep.subr.bf16.mxu0 %v2672
    %2771 = vmatpush1.bf16.msra.mxu0 %v2671
    %2772 = vmatprep.subr.bf16.mxu0 %v2676
    %2773 = vmatpush1.bf16.msra.mxu0 %v2675
    %2774 = vmatprep.subr.bf16.mxu0 %v2680
    %2775 = vmatpush1.bf16.msra.mxu0 %v2679
    %2776 = vmatprep.subr.bf16.mxu0 %v2684
    %2777 = vmatpush1.bf16.msra.mxu0 %v2683
    %2778 = vmatprep.subr.bf16.mxu0 %v2688
    %2779 = vmatpush1.bf16.msra.mxu0 %v2687
    %2780 = vmatprep.subr.bf16.mxu0 %v2692
    %2781 = vmatpush1.bf16.msra.mxu0 %v2691
    %2782 = vmatprep.subr.bf16.mxu0 0
    %2783 = vmatpush1.bf16.msra.mxu0 0
    %2784 = vmatprep.subr.bf16.mxu0 0
    %2785 = vmatpush1.bf16.msra.mxu0 0
    %2786 = vmatprep.subr.bf16.mxu0 0
    %2787 = vmatpush1.bf16.msra.mxu0 0
    %2788 = vmatprep.subr.bf16.mxu0 0
    %2789 = vmatpush1.bf16.msra.mxu0 0
    %2790 = vmatprep.subr.bf16.mxu0 0
    %2791 = vmatpush1.bf16.msra.mxu0 0
    %2792 = vmatprep.subr.bf16.mxu0 0
    %2793 = vmatpush1.bf16.msra.mxu0 0
    %2794 = vmatprep.subr.bf16.mxu0 0
    %2795 = vmatpush1.bf16.msra.mxu0 0
    %2796 = vmatprep.subr.bf16.mxu0 0
    %2797 = vmatpush1.bf16.msra.mxu0 0
    %2798 = vmatprep.mubr.bf16.mxu0 0
    %2799 = vmatmul.mubr.bf16.gmra.mrb[0].mxu0 %v2532
    %v2800 = vpop.f32.mrb[0].mxu0
    %v2801 = vadd.f32 %v578, %v2800
    %v2802 = vpop.f32.mrb[0].mxu0
    %v2803 = vadd.f32 %v582, %v2802
    %v2804 = vpop.f32.mrb[0].mxu0
    %v2805 = vpop.f32.mrb[0].mxu0
    %2806 = vdwg.mxu0
    %v2807 = vmul.f32 %v2760, 0.5
    %v2808 = vtanh.pop %v2807
    %v2809 = vmul.f32 %v2808, 0.5
    %v2810 = vadd.f32 %v2809, 0.5
    %v2811 = vmul.f32 %v2762, 0.5
    %v2812 = vtanh.pop %v2811
    %v2813 = vmul.f32 %v2812, 0.5
    %v2814 = vadd.f32 %v2813, 0.5
    %v2815 = vtanh.pop %v2801
    %v2816 = vmul.f32 %v2803, 0.5
    %v2817 = vtanh.pop %v2816
    %v2818 = vmul.f32 %v2817, 0.5
    %v2819 = vadd.f32 %v2818, 0.5
    %v2820 = vmul.f32 %v2814, %v2528
    %v2821 = vmul.f32 %v2810, %v2815
    %v2822 = vadd.f32 %v2820, %v2821
    %v2823 = vtanh.pop %v2822
    %v2824 = vmul.f32 %v2819, %v2823
    %2825 = vst [vmem:[#allocation3 + $0x20] sm:$0xff] %v2824
    %v2826 = vpack.c.bf16 %v2824, %v2824
    %v2827 = vld [vmem:[#allocation12] sm:$0xff]
    %v2828 = vld [vmem:[#allocation12 + $0x8] sm:$0xff]
    %v2829 = vld [vmem:[#allocation12 + $0x10] sm:$0xff]
    %v2830 = vld [vmem:[#allocation12 + $0x18] sm:$0xff]
    %v2831 = vld [vmem:[#allocation12 + $0x20] sm:$0xff]
    %v2832 = vld [vmem:[#allocation12 + $0x28] sm:$0xff]
    %v2833 = vld [vmem:[#allocation12 + $0x30] sm:$0xff]
    %v2834 = vld [vmem:[#allocation12 + $0x38] sm:$0xff]
    %v2835 = vld [vmem:[#allocation12 + $0x40] sm:$0xff]
    %v2836 = vld [vmem:[#allocation12 + $0x48] sm:$0xff]
    %v2837 = vld [vmem:[#allocation12 + $0x50] sm:$0xff]
    %v2838 = vld [vmem:[#allocation12 + $0x58] sm:$0xff]
    %v2839 = vld [vmem:[#allocation12 + $0x60] sm:$0xff]
    %v2840 = vld [vmem:[#allocation12 + $0x68] sm:$0xff]
    %v2841 = vld [vmem:[#allocation12 + $0x70] sm:$0xff]
    %v2842 = vld [vmem:[#allocation12 + $0x78] sm:$0xff]
    %v2843 = vld [vmem:[#allocation12 + $0x80] sm:$0xff]
    %v2844 = vld [vmem:[#allocation12 + $0x88] sm:$0xff]
    %v2845 = vld [vmem:[#allocation12 + $0x90] sm:$0xff]
    %v2846 = vld [vmem:[#allocation12 + $0x98] sm:$0xff]
    %v2847 = vld [vmem:[#allocation12 + $0xa0] sm:$0xff]
    %v2848 = vld [vmem:[#allocation12 + $0xa8] sm:$0xff]
    %v2849 = vld [vmem:[#allocation12 + $0xb0] sm:$0xff]
    %v2850 = vld [vmem:[#allocation12 + $0xb8] sm:$0xff]
    %v2851 = vld [vmem:[#allocation12 + $0xc0] sm:$0xff]
    %v2852 = vld [vmem:[#allocation12 + $0xc8] sm:$0xff]
    %v2853 = vld [vmem:[#allocation12 + $0xd0] sm:$0xff]
    %v2854 = vld [vmem:[#allocation12 + $0xd8] sm:$0xff]
    %v2855 = vld [vmem:[#allocation12 + $0xe0] sm:$0xff]
    %v2856 = vld [vmem:[#allocation12 + $0xe8] sm:$0xff]
    %v2857 = vld [vmem:[#allocation12 + $0xf0] sm:$0xff]
    %v2858 = vld [vmem:[#allocation12 + $0xf8] sm:$0xff]
    %v2891 = vunpack.c.l.b16 %v2827
    %v2892 = vunpack.c.h.b16 %v2827
    %v2893 = vunpack.c.l.b16 %v2828
    %v2894 = vunpack.c.h.b16 %v2828
    %v2895 = vunpack.c.l.b16 %v2829
    %v2896 = vunpack.c.h.b16 %v2829
    %v2897 = vunpack.c.l.b16 %v2830
    %v2898 = vunpack.c.h.b16 %v2830
    %v2899 = vunpack.c.l.b16 %v2831
    %v2900 = vunpack.c.h.b16 %v2831
    %v2901 = vunpack.c.l.b16 %v2832
    %v2902 = vunpack.c.h.b16 %v2832
    %v2903 = vunpack.c.l.b16 %v2833
    %v2904 = vunpack.c.h.b16 %v2833
    %v2905 = vunpack.c.l.b16 %v2834
    %v2906 = vunpack.c.h.b16 %v2834
    %v2907 = vunpack.c.l.b16 %v2835
    %v2908 = vunpack.c.h.b16 %v2835
    %v2909 = vunpack.c.l.b16 %v2836
    %v2910 = vunpack.c.h.b16 %v2836
    %v2911 = vunpack.c.l.b16 %v2837
    %v2912 = vunpack.c.h.b16 %v2837
    %v2913 = vunpack.c.l.b16 %v2838
    %v2914 = vunpack.c.h.b16 %v2838
    %v2915 = vunpack.c.l.b16 %v2839
    %v2916 = vunpack.c.h.b16 %v2839
    %v2917 = vunpack.c.l.b16 %v2840
    %v2918 = vunpack.c.h.b16 %v2840
    %v2919 = vunpack.c.l.b16 %v2841
    %v2920 = vunpack.c.h.b16 %v2841
    %v2921 = vunpack.c.l.b16 %v2842
    %v2922 = vunpack.c.h.b16 %v2842
    %v2923 = vunpack.c.l.b16 %v2843
    %v2924 = vunpack.c.h.b16 %v2843
    %v2925 = vunpack.c.l.b16 %v2844
    %v2926 = vunpack.c.h.b16 %v2844
    %v2927 = vunpack.c.l.b16 %v2845
    %v2928 = vunpack.c.h.b16 %v2845
    %v2929 = vunpack.c.l.b16 %v2846
    %v2930 = vunpack.c.h.b16 %v2846
    %v2931 = vunpack.c.l.b16 %v2847
    %v2932 = vunpack.c.h.b16 %v2847
    %v2933 = vunpack.c.l.b16 %v2848
    %v2934 = vunpack.c.h.b16 %v2848
    %v2935 = vunpack.c.l.b16 %v2849
    %v2936 = vunpack.c.h.b16 %v2849
    %v2937 = vunpack.c.l.b16 %v2850
    %v2938 = vunpack.c.h.b16 %v2850
    %v2939 = vunpack.c.l.b16 %v2851
    %v2940 = vunpack.c.h.b16 %v2851
    %v2941 = vunpack.c.l.b16 %v2852
    %v2942 = vunpack.c.h.b16 %v2852
    %v2943 = vunpack.c.l.b16 %v2853
    %v2944 = vunpack.c.h.b16 %v2853
    %v2945 = vunpack.c.l.b16 %v2854
    %v2946 = vunpack.c.h.b16 %v2854
    %v2947 = vunpack.c.l.b16 %v2855
    %v2948 = vunpack.c.h.b16 %v2855
    %v2949 = vunpack.c.l.b16 %v2856
    %v2950 = vunpack.c.h.b16 %v2856
    %v2951 = vunpack.c.l.b16 %v2857
    %v2952 = vunpack.c.h.b16 %v2857
    %v2953 = vunpack.c.l.b16 %v2858
    %v2954 = vunpack.c.h.b16 %v2858
    %v2955 = vpack.c.b16 %v2895, %v2891
    %v2956 = vpack.c.b16 %v2896, %v2892
    %v2957 = vpack.c.b16 %v2897, %v2893
    %v2958 = vpack.c.b16 %v2898, %v2894
    %v2959 = vpack.c.b16 %v2903, %v2899
    %v2960 = vpack.c.b16 %v2904, %v2900
    %v2961 = vpack.c.b16 %v2905, %v2901
    %v2962 = vpack.c.b16 %v2906, %v2902
    %v2963 = vpack.c.b16 %v2911, %v2907
    %v2964 = vpack.c.b16 %v2912, %v2908
    %v2965 = vpack.c.b16 %v2913, %v2909
    %v2966 = vpack.c.b16 %v2914, %v2910
    %v2967 = vpack.c.b16 %v2919, %v2915
    %v2968 = vpack.c.b16 %v2920, %v2916
    %v2969 = vpack.c.b16 %v2921, %v2917
    %v2970 = vpack.c.b16 %v2922, %v2918
    %v2971 = vpack.c.b16 %v2927, %v2923
    %v2972 = vpack.c.b16 %v2928, %v2924
    %v2973 = vpack.c.b16 %v2929, %v2925
    %v2974 = vpack.c.b16 %v2930, %v2926
    %v2975 = vpack.c.b16 %v2935, %v2931
    %v2976 = vpack.c.b16 %v2936, %v2932
    %v2977 = vpack.c.b16 %v2937, %v2933
    %v2978 = vpack.c.b16 %v2938, %v2934
    %v2979 = vpack.c.b16 %v2943, %v2939
    %v2980 = vpack.c.b16 %v2944, %v2940
    %v2981 = vpack.c.b16 %v2945, %v2941
    %v2982 = vpack.c.b16 %v2946, %v2942
    %v2983 = vpack.c.b16 %v2951, %v2947
    %v2984 = vpack.c.b16 %v2952, %v2948
    %v2985 = vpack.c.b16 %v2953, %v2949
    %v2986 = vpack.c.b16 %v2954, %v2950
    %3019 = vmatprep.subr.bf16.mxu0 %v2956
    %3020 = vmatpush1.bf16.msra.mxu0 %v2955
    %3021 = vmatprep.subr.bf16.mxu0 %v2960
    %3022 = vmatpush1.bf16.msra.mxu0 %v2959
    %3023 = vmatprep.subr.bf16.mxu0 %v2964
    %3024 = vmatpush1.bf16.msra.mxu0 %v2963
    %3025 = vmatprep.subr.bf16.mxu0 %v2968
    %3026 = vmatpush1.bf16.msra.mxu0 %v2967
    %3027 = vmatprep.subr.bf16.mxu0 %v2972
    %3028 = vmatpush1.bf16.msra.mxu0 %v2971
    %3029 = vmatprep.subr.bf16.mxu0 %v2976
    %3030 = vmatpush1.bf16.msra.mxu0 %v2975
    %3031 = vmatprep.subr.bf16.mxu0 %v2980
    %3032 = vmatpush1.bf16.msra.mxu0 %v2979
    %3033 = vmatprep.subr.bf16.mxu0 %v2984
    %3034 = vmatpush1.bf16.msra.mxu0 %v2983
    %3035 = vmatprep.subr.bf16.mxu0 0
    %3036 = vmatpush1.bf16.msra.mxu0 0
    %3037 = vmatprep.subr.bf16.mxu0 0
    %3038 = vmatpush1.bf16.msra.mxu0 0
    %3039 = vmatprep.subr.bf16.mxu0 0
    %3040 = vmatpush1.bf16.msra.mxu0 0
    %3041 = vmatprep.subr.bf16.mxu0 0
    %3042 = vmatpush1.bf16.msra.mxu0 0
    %3043 = vmatprep.subr.bf16.mxu0 0
    %3044 = vmatpush1.bf16.msra.mxu0 0
    %3045 = vmatprep.subr.bf16.mxu0 0
    %3046 = vmatpush1.bf16.msra.mxu0 0
    %3047 = vmatprep.subr.bf16.mxu0 0
    %3048 = vmatpush1.bf16.msra.mxu0 0
    %3049 = vmatprep.subr.bf16.mxu0 0
    %3050 = vmatpush1.bf16.msra.mxu0 0
    %3051 = vmatprep.mubr.bf16.mxu0 0
    %3052 = vmatmul.mubr.bf16.gmra.mrb[0].mxu0 %v2826
    %v3053 = vpop.f32.mrb[0].mxu0
    %v3054 = vadd.f32 %v570, %v3053
    %v3055 = vpop.f32.mrb[0].mxu0
    %v3056 = vadd.f32 %v574, %v3055
    %v3057 = vpop.f32.mrb[0].mxu0
    %v3058 = vpop.f32.mrb[0].mxu0
    %3059 = vdwg.mxu0
    %3060 = vmatprep.subr.bf16.mxu0 %v2958
    %3061 = vmatpush1.bf16.msra.mxu0 %v2957
    %3062 = vmatprep.subr.bf16.mxu0 %v2962
    %3063 = vmatpush1.bf16.msra.mxu0 %v2961
    %3064 = vmatprep.subr.bf16.mxu0 %v2966
    %3065 = vmatpush1.bf16.msra.mxu0 %v2965
    %3066 = vmatprep.subr.bf16.mxu0 %v2970
    %3067 = vmatpush1.bf16.msra.mxu0 %v2969
    %3068 = vmatprep.subr.bf16.mxu0 %v2974
    %3069 = vmatpush1.bf16.msra.mxu0 %v2973
    %3070 = vmatprep.subr.bf16.mxu0 %v2978
    %3071 = vmatpush1.bf16.msra.mxu0 %v2977
    %3072 = vmatprep.subr.bf16.mxu0 %v2982
    %3073 = vmatpush1.bf16.msra.mxu0 %v2981
    %3074 = vmatprep.subr.bf16.mxu0 %v2986
    %3075 = vmatpush1.bf16.msra.mxu0 %v2985
    %3076 = vmatprep.subr.bf16.mxu0 0
    %3077 = vmatpush1.bf16.msra.mxu0 0
    %3078 = vmatprep.subr.bf16.mxu0 0
    %3079 = vmatpush1.bf16.msra.mxu0 0
    %3080 = vmatprep.subr.bf16.mxu0 0
    %3081 = vmatpush1.bf16.msra.mxu0 0
    %3082 = vmatprep.subr.bf16.mxu0 0
    %3083 = vmatpush1.bf16.msra.mxu0 0
    %3084 = vmatprep.subr.bf16.mxu0 0
    %3085 = vmatpush1.bf16.msra.mxu0 0
    %3086 = vmatprep.subr.bf16.mxu0 0
    %3087 = vmatpush1.bf16.msra.mxu0 0
    %3088 = vmatprep.subr.bf16.mxu0 0
    %3089 = vmatpush1.bf16.msra.mxu0 0
    %3090 = vmatprep.subr.bf16.mxu0 0
    %3091 = vmatpush1.bf16.msra.mxu0 0
    %3092 = vmatprep.mubr.bf16.mxu0 0
    %3093 = vmatmul.mubr.bf16.gmra.mrb[0].mxu0 %v2826
    %v3094 = vpop.f32.mrb[0].mxu0
    %v3095 = vadd.f32 %v578, %v3094
    %v3096 = vpop.f32.mrb[0].mxu0
    %v3097 = vadd.f32 %v582, %v3096
    %v3098 = vpop.f32.mrb[0].mxu0
    %v3099 = vpop.f32.mrb[0].mxu0
    %3100 = vdwg.mxu0
    %v3101 = vmul.f32 %v3054, 0.5
    %v3102 = vtanh.pop %v3101
    %v3103 = vmul.f32 %v3102, 0.5
    %v3104 = vadd.f32 %v3103, 0.5
    %v3105 = vmul.f32 %v3056, 0.5
    %v3106 = vtanh.pop %v3105
    %v3107 = vmul.f32 %v3106, 0.5
    %v3108 = vadd.f32 %v3107, 0.5
    %v3109 = vtanh.pop %v3095
    %v3110 = vmul.f32 %v3097, 0.5
    %v3111 = vtanh.pop %v3110
    %v3112 = vmul.f32 %v3111, 0.5
    %v3113 = vadd.f32 %v3112, 0.5
    %v3114 = vmul.f32 %v3108, %v2822
    %v3115 = vmul.f32 %v3104, %v3109
    %v3116 = vadd.f32 %v3114, %v3115
    %v3117 = vtanh.pop %v3116
    %v3118 = vmul.f32 %v3113, %v3117
    %3119 = vst [vmem:[#allocation3 + $0x18] sm:$0xff] %v3118
    %v3120 = vpack.c.bf16 %v3118, %v3118
    %v3121 = vld [vmem:[#allocation12] sm:$0xff]
    %v3122 = vld [vmem:[#allocation12 + $0x8] sm:$0xff]
    %v3123 = vld [vmem:[#allocation12 + $0x10] sm:$0xff]
    %v3124 = vld [vmem:[#allocation12 + $0x18] sm:$0xff]
    %v3125 = vld [vmem:[#allocation12 + $0x20] sm:$0xff]
    %v3126 = vld [vmem:[#allocation12 + $0x28] sm:$0xff]
    %v3127 = vld [vmem:[#allocation12 + $0x30] sm:$0xff]
    %v3128 = vld [vmem:[#allocation12 + $0x38] sm:$0xff]
    %v3129 = vld [vmem:[#allocation12 + $0x40] sm:$0xff]
    %v3130 = vld [vmem:[#allocation12 + $0x48] sm:$0xff]
    %v3131 = vld [vmem:[#allocation12 + $0x50] sm:$0xff]
    %v3132 = vld [vmem:[#allocation12 + $0x58] sm:$0xff]
    %v3133 = vld [vmem:[#allocation12 + $0x60] sm:$0xff]
    %v3134 = vld [vmem:[#allocation12 + $0x68] sm:$0xff]
    %v3135 = vld [vmem:[#allocation12 + $0x70] sm:$0xff]
    %v3136 = vld [vmem:[#allocation12 + $0x78] sm:$0xff]
    %v3137 = vld [vmem:[#allocation12 + $0x80] sm:$0xff]
    %v3138 = vld [vmem:[#allocation12 + $0x88] sm:$0xff]
    %v3139 = vld [vmem:[#allocation12 + $0x90] sm:$0xff]
    %v3140 = vld [vmem:[#allocation12 + $0x98] sm:$0xff]
    %v3141 = vld [vmem:[#allocation12 + $0xa0] sm:$0xff]
    %v3142 = vld [vmem:[#allocation12 + $0xa8] sm:$0xff]
    %v3143 = vld [vmem:[#allocation12 + $0xb0] sm:$0xff]
    %v3144 = vld [vmem:[#allocation12 + $0xb8] sm:$0xff]
    %v3145 = vld [vmem:[#allocation12 + $0xc0] sm:$0xff]
    %v3146 = vld [vmem:[#allocation12 + $0xc8] sm:$0xff]
    %v3147 = vld [vmem:[#allocation12 + $0xd0] sm:$0xff]
    %v3148 = vld [vmem:[#allocation12 + $0xd8] sm:$0xff]
    %v3149 = vld [vmem:[#allocation12 + $0xe0] sm:$0xff]
    %v3150 = vld [vmem:[#allocation12 + $0xe8] sm:$0xff]
    %v3151 = vld [vmem:[#allocation12 + $0xf0] sm:$0xff]
    %v3152 = vld [vmem:[#allocation12 + $0xf8] sm:$0xff]
    %v3185 = vunpack.c.l.b16 %v3121
    %v3186 = vunpack.c.h.b16 %v3121
    %v3187 = vunpack.c.l.b16 %v3122
    %v3188 = vunpack.c.h.b16 %v3122
    %v3189 = vunpack.c.l.b16 %v3123
    %v3190 = vunpack.c.h.b16 %v3123
    %v3191 = vunpack.c.l.b16 %v3124
    %v3192 = vunpack.c.h.b16 %v3124
    %v3193 = vunpack.c.l.b16 %v3125
    %v3194 = vunpack.c.h.b16 %v3125
    %v3195 = vunpack.c.l.b16 %v3126
    %v3196 = vunpack.c.h.b16 %v3126
    %v3197 = vunpack.c.l.b16 %v3127
    %v3198 = vunpack.c.h.b16 %v3127
    %v3199 = vunpack.c.l.b16 %v3128
    %v3200 = vunpack.c.h.b16 %v3128
    %v3201 = vunpack.c.l.b16 %v3129
    %v3202 = vunpack.c.h.b16 %v3129
    %v3203 = vunpack.c.l.b16 %v3130
    %v3204 = vunpack.c.h.b16 %v3130
    %v3205 = vunpack.c.l.b16 %v3131
    %v3206 = vunpack.c.h.b16 %v3131
    %v3207 = vunpack.c.l.b16 %v3132
    %v3208 = vunpack.c.h.b16 %v3132
    %v3209 = vunpack.c.l.b16 %v3133
    %v3210 = vunpack.c.h.b16 %v3133
    %v3211 = vunpack.c.l.b16 %v3134
    %v3212 = vunpack.c.h.b16 %v3134
    %v3213 = vunpack.c.l.b16 %v3135
    %v3214 = vunpack.c.h.b16 %v3135
    %v3215 = vunpack.c.l.b16 %v3136
    %v3216 = vunpack.c.h.b16 %v3136
    %v3217 = vunpack.c.l.b16 %v3137
    %v3218 = vunpack.c.h.b16 %v3137
    %v3219 = vunpack.c.l.b16 %v3138
    %v3220 = vunpack.c.h.b16 %v3138
    %v3221 = vunpack.c.l.b16 %v3139
    %v3222 = vunpack.c.h.b16 %v3139
    %v3223 = vunpack.c.l.b16 %v3140
    %v3224 = vunpack.c.h.b16 %v3140
    %v3225 = vunpack.c.l.b16 %v3141
    %v3226 = vunpack.c.h.b16 %v3141
    %v3227 = vunpack.c.l.b16 %v3142
    %v3228 = vunpack.c.h.b16 %v3142
    %v3229 = vunpack.c.l.b16 %v3143
    %v3230 = vunpack.c.h.b16 %v3143
    %v3231 = vunpack.c.l.b16 %v3144
    %v3232 = vunpack.c.h.b16 %v3144
    %v3233 = vunpack.c.l.b16 %v3145
    %v3234 = vunpack.c.h.b16 %v3145
    %v3235 = vunpack.c.l.b16 %v3146
    %v3236 = vunpack.c.h.b16 %v3146
    %v3237 = vunpack.c.l.b16 %v3147
    %v3238 = vunpack.c.h.b16 %v3147
    %v3239 = vunpack.c.l.b16 %v3148
    %v3240 = vunpack.c.h.b16 %v3148
    %v3241 = vunpack.c.l.b16 %v3149
    %v3242 = vunpack.c.h.b16 %v3149
    %v3243 = vunpack.c.l.b16 %v3150
    %v3244 = vunpack.c.h.b16 %v3150
    %v3245 = vunpack.c.l.b16 %v3151
    %v3246 = vunpack.c.h.b16 %v3151
    %v3247 = vunpack.c.l.b16 %v3152
    %v3248 = vunpack.c.h.b16 %v3152
    %v3249 = vpack.c.b16 %v3189, %v3185
    %v3250 = vpack.c.b16 %v3190, %v3186
    %v3251 = vpack.c.b16 %v3191, %v3187
    %v3252 = vpack.c.b16 %v3192, %v3188
    %v3253 = vpack.c.b16 %v3197, %v3193
    %v3254 = vpack.c.b16 %v3198, %v3194
    %v3255 = vpack.c.b16 %v3199, %v3195
    %v3256 = vpack.c.b16 %v3200, %v3196
    %v3257 = vpack.c.b16 %v3205, %v3201
    %v3258 = vpack.c.b16 %v3206, %v3202
    %v3259 = vpack.c.b16 %v3207, %v3203
    %v3260 = vpack.c.b16 %v3208, %v3204
    %v3261 = vpack.c.b16 %v3213, %v3209
    %v3262 = vpack.c.b16 %v3214, %v3210
    %v3263 = vpack.c.b16 %v3215, %v3211
    %v3264 = vpack.c.b16 %v3216, %v3212
    %v3265 = vpack.c.b16 %v3221, %v3217
    %v3266 = vpack.c.b16 %v3222, %v3218
    %v3267 = vpack.c.b16 %v3223, %v3219
    %v3268 = vpack.c.b16 %v3224, %v3220
    %v3269 = vpack.c.b16 %v3229, %v3225
    %v3270 = vpack.c.b16 %v3230, %v3226
    %v3271 = vpack.c.b16 %v3231, %v3227
    %v3272 = vpack.c.b16 %v3232, %v3228
    %v3273 = vpack.c.b16 %v3237, %v3233
    %v3274 = vpack.c.b16 %v3238, %v3234
    %v3275 = vpack.c.b16 %v3239, %v3235
    %v3276 = vpack.c.b16 %v3240, %v3236
    %v3277 = vpack.c.b16 %v3245, %v3241
    %v3278 = vpack.c.b16 %v3246, %v3242
    %v3279 = vpack.c.b16 %v3247, %v3243
    %v3280 = vpack.c.b16 %v3248, %v3244
    %3313 = vmatprep.subr.bf16.mxu0 %v3250
    %3314 = vmatpush1.bf16.msra.mxu0 %v3249
    %3315 = vmatprep.subr.bf16.mxu0 %v3254
    %3316 = vmatpush1.bf16.msra.mxu0 %v3253
    %3317 = vmatprep.subr.bf16.mxu0 %v3258
    %3318 = vmatpush1.bf16.msra.mxu0 %v3257
    %3319 = vmatprep.subr.bf16.mxu0 %v3262
    %3320 = vmatpush1.bf16.msra.mxu0 %v3261
    %3321 = vmatprep.subr.bf16.mxu0 %v3266
    %3322 = vmatpush1.bf16.msra.mxu0 %v3265
    %3323 = vmatprep.subr.bf16.mxu0 %v3270
    %3324 = vmatpush1.bf16.msra.mxu0 %v3269
    %3325 = vmatprep.subr.bf16.mxu0 %v3274
    %3326 = vmatpush1.bf16.msra.mxu0 %v3273
    %3327 = vmatprep.subr.bf16.mxu0 %v3278
    %3328 = vmatpush1.bf16.msra.mxu0 %v3277
    %3329 = vmatprep.subr.bf16.mxu0 0
    %3330 = vmatpush1.bf16.msra.mxu0 0
    %3331 = vmatprep.subr.bf16.mxu0 0
    %3332 = vmatpush1.bf16.msra.mxu0 0
    %3333 = vmatprep.subr.bf16.mxu0 0
    %3334 = vmatpush1.bf16.msra.mxu0 0
    %3335 = vmatprep.subr.bf16.mxu0 0
    %3336 = vmatpush1.bf16.msra.mxu0 0
    %3337 = vmatprep.subr.bf16.mxu0 0
    %3338 = vmatpush1.bf16.msra.mxu0 0
    %3339 = vmatprep.subr.bf16.mxu0 0
    %3340 = vmatpush1.bf16.msra.mxu0 0
    %3341 = vmatprep.subr.bf16.mxu0 0
    %3342 = vmatpush1.bf16.msra.mxu0 0
    %3343 = vmatprep.subr.bf16.mxu0 0
    %3344 = vmatpush1.bf16.msra.mxu0 0
    %3345 = vmatprep.mubr.bf16.mxu0 0
    %3346 = vmatmul.mubr.bf16.gmra.mrb[0].mxu0 %v3120
    %v3347 = vpop.f32.mrb[0].mxu0
    %v3348 = vadd.f32 %v570, %v3347
    %v3349 = vpop.f32.mrb[0].mxu0
    %v3350 = vadd.f32 %v574, %v3349
    %v3351 = vpop.f32.mrb[0].mxu0
    %v3352 = vpop.f32.mrb[0].mxu0
    %3353 = vdwg.mxu0
    %3354 = vmatprep.subr.bf16.mxu0 %v3252
    %3355 = vmatpush1.bf16.msra.mxu0 %v3251
    %3356 = vmatprep.subr.bf16.mxu0 %v3256
    %3357 = vmatpush1.bf16.msra.mxu0 %v3255
    %3358 = vmatprep.subr.bf16.mxu0 %v3260
    %3359 = vmatpush1.bf16.msra.mxu0 %v3259
    %3360 = vmatprep.subr.bf16.mxu0 %v3264
    %3361 = vmatpush1.bf16.msra.mxu0 %v3263
    %3362 = vmatprep.subr.bf16.mxu0 %v3268
    %3363 = vmatpush1.bf16.msra.mxu0 %v3267
    %3364 = vmatprep.subr.bf16.mxu0 %v3272
    %3365 = vmatpush1.bf16.msra.mxu0 %v3271
    %3366 = vmatprep.subr.bf16.mxu0 %v3276
    %3367 = vmatpush1.bf16.msra.mxu0 %v3275
    %3368 = vmatprep.subr.bf16.mxu0 %v3280
    %3369 = vmatpush1.bf16.msra.mxu0 %v3279
    %3370 = vmatprep.subr.bf16.mxu0 0
    %3371 = vmatpush1.bf16.msra.mxu0 0
    %3372 = vmatprep.subr.bf16.mxu0 0
    %3373 = vmatpush1.bf16.msra.mxu0 0
    %3374 = vmatprep.subr.bf16.mxu0 0
    %3375 = vmatpush1.bf16.msra.mxu0 0
    %3376 = vmatprep.subr.bf16.mxu0 0
    %3377 = vmatpush1.bf16.msra.mxu0 0
    %3378 = vmatprep.subr.bf16.mxu0 0
    %3379 = vmatpush1.bf16.msra.mxu0 0
    %3380 = vmatprep.subr.bf16.mxu0 0
    %3381 = vmatpush1.bf16.msra.mxu0 0
    %3382 = vmatprep.subr.bf16.mxu0 0
    %3383 = vmatpush1.bf16.msra.mxu0 0
    %3384 = vmatprep.subr.bf16.mxu0 0
    %3385 = vmatpush1.bf16.msra.mxu0 0
    %3386 = vmatprep.mubr.bf16.mxu0 0
    %3387 = vmatmul.mubr.bf16.gmra.mrb[0].mxu0 %v3120
    %v3388 = vpop.f32.mrb[0].mxu0
    %v3389 = vadd.f32 %v578, %v3388
    %v3390 = vpop.f32.mrb[0].mxu0
    %v3391 = vadd.f32 %v582, %v3390
    %v3392 = vpop.f32.mrb[0].mxu0
    %v3393 = vpop.f32.mrb[0].mxu0
    %3394 = vdwg.mxu0
    %v3395 = vmul.f32 %v3348, 0.5
    %v3396 = vtanh.pop %v3395
    %v3397 = vmul.f32 %v3396, 0.5
    %v3398 = vadd.f32 %v3397, 0.5
    %v3399 = vmul.f32 %v3350, 0.5
    %v3400 = vtanh.pop %v3399
    %v3401 = vmul.f32 %v3400, 0.5
    %v3402 = vadd.f32 %v3401, 0.5
    %v3403 = vtanh.pop %v3389
    %v3404 = vmul.f32 %v3391, 0.5
    %v3405 = vtanh.pop %v3404
    %v3406 = vmul.f32 %v3405, 0.5
    %v3407 = vadd.f32 %v3406, 0.5
    %v3408 = vmul.f32 %v3402, %v3116
    %v3409 = vmul.f32 %v3398, %v3403
    %v3410 = vadd.f32 %v3408, %v3409
    %v3411 = vtanh.pop %v3410
    %v3412 = vmul.f32 %v3407, %v3411
    %3413 = vst [vmem:[#allocation3 + $0x10] sm:$0xff] %v3412
    %v3414 = vpack.c.bf16 %v3412, %v3412
    %v3415 = vld [vmem:[#allocation12] sm:$0xff]
    %v3416 = vld [vmem:[#allocation12 + $0x8] sm:$0xff]
    %v3417 = vld [vmem:[#allocation12 + $0x10] sm:$0xff]
    %v3418 = vld [vmem:[#allocation12 + $0x18] sm:$0xff]
    %v3419 = vld [vmem:[#allocation12 + $0x20] sm:$0xff]
    %v3420 = vld [vmem:[#allocation12 + $0x28] sm:$0xff]
    %v3421 = vld [vmem:[#allocation12 + $0x30] sm:$0xff]
    %v3422 = vld [vmem:[#allocation12 + $0x38] sm:$0xff]
    %v3423 = vld [vmem:[#allocation12 + $0x40] sm:$0xff]
    %v3424 = vld [vmem:[#allocation12 + $0x48] sm:$0xff]
    %v3425 = vld [vmem:[#allocation12 + $0x50] sm:$0xff]
    %v3426 = vld [vmem:[#allocation12 + $0x58] sm:$0xff]
    %v3427 = vld [vmem:[#allocation12 + $0x60] sm:$0xff]
    %v3428 = vld [vmem:[#allocation12 + $0x68] sm:$0xff]
    %v3429 = vld [vmem:[#allocation12 + $0x70] sm:$0xff]
    %v3430 = vld [vmem:[#allocation12 + $0x78] sm:$0xff]
    %v3431 = vld [vmem:[#allocation12 + $0x80] sm:$0xff]
    %v3432 = vld [vmem:[#allocation12 + $0x88] sm:$0xff]
    %v3433 = vld [vmem:[#allocation12 + $0x90] sm:$0xff]
    %v3434 = vld [vmem:[#allocation12 + $0x98] sm:$0xff]
    %v3435 = vld [vmem:[#allocation12 + $0xa0] sm:$0xff]
    %v3436 = vld [vmem:[#allocation12 + $0xa8] sm:$0xff]
    %v3437 = vld [vmem:[#allocation12 + $0xb0] sm:$0xff]
    %v3438 = vld [vmem:[#allocation12 + $0xb8] sm:$0xff]
    %v3439 = vld [vmem:[#allocation12 + $0xc0] sm:$0xff]
    %v3440 = vld [vmem:[#allocation12 + $0xc8] sm:$0xff]
    %v3441 = vld [vmem:[#allocation12 + $0xd0] sm:$0xff]
    %v3442 = vld [vmem:[#allocation12 + $0xd8] sm:$0xff]
    %v3443 = vld [vmem:[#allocation12 + $0xe0] sm:$0xff]
    %v3444 = vld [vmem:[#allocation12 + $0xe8] sm:$0xff]
    %v3445 = vld [vmem:[#allocation12 + $0xf0] sm:$0xff]
    %v3446 = vld [vmem:[#allocation12 + $0xf8] sm:$0xff]
    %v3479 = vunpack.c.l.b16 %v3415
    %v3480 = vunpack.c.h.b16 %v3415
    %v3481 = vunpack.c.l.b16 %v3416
    %v3482 = vunpack.c.h.b16 %v3416
    %v3483 = vunpack.c.l.b16 %v3417
    %v3484 = vunpack.c.h.b16 %v3417
    %v3485 = vunpack.c.l.b16 %v3418
    %v3486 = vunpack.c.h.b16 %v3418
    %v3487 = vunpack.c.l.b16 %v3419
    %v3488 = vunpack.c.h.b16 %v3419
    %v3489 = vunpack.c.l.b16 %v3420
    %v3490 = vunpack.c.h.b16 %v3420
    %v3491 = vunpack.c.l.b16 %v3421
    %v3492 = vunpack.c.h.b16 %v3421
    %v3493 = vunpack.c.l.b16 %v3422
    %v3494 = vunpack.c.h.b16 %v3422
    %v3495 = vunpack.c.l.b16 %v3423
    %v3496 = vunpack.c.h.b16 %v3423
    %v3497 = vunpack.c.l.b16 %v3424
    %v3498 = vunpack.c.h.b16 %v3424
    %v3499 = vunpack.c.l.b16 %v3425
    %v3500 = vunpack.c.h.b16 %v3425
    %v3501 = vunpack.c.l.b16 %v3426
    %v3502 = vunpack.c.h.b16 %v3426
    %v3503 = vunpack.c.l.b16 %v3427
    %v3504 = vunpack.c.h.b16 %v3427
    %v3505 = vunpack.c.l.b16 %v3428
    %v3506 = vunpack.c.h.b16 %v3428
    %v3507 = vunpack.c.l.b16 %v3429
    %v3508 = vunpack.c.h.b16 %v3429
    %v3509 = vunpack.c.l.b16 %v3430
    %v3510 = vunpack.c.h.b16 %v3430
    %v3511 = vunpack.c.l.b16 %v3431
    %v3512 = vunpack.c.h.b16 %v3431
    %v3513 = vunpack.c.l.b16 %v3432
    %v3514 = vunpack.c.h.b16 %v3432
    %v3515 = vunpack.c.l.b16 %v3433
    %v3516 = vunpack.c.h.b16 %v3433
    %v3517 = vunpack.c.l.b16 %v3434
    %v3518 = vunpack.c.h.b16 %v3434
    %v3519 = vunpack.c.l.b16 %v3435
    %v3520 = vunpack.c.h.b16 %v3435
    %v3521 = vunpack.c.l.b16 %v3436
    %v3522 = vunpack.c.h.b16 %v3436
    %v3523 = vunpack.c.l.b16 %v3437
    %v3524 = vunpack.c.h.b16 %v3437
    %v3525 = vunpack.c.l.b16 %v3438
    %v3526 = vunpack.c.h.b16 %v3438
    %v3527 = vunpack.c.l.b16 %v3439
    %v3528 = vunpack.c.h.b16 %v3439
    %v3529 = vunpack.c.l.b16 %v3440
    %v3530 = vunpack.c.h.b16 %v3440
    %v3531 = vunpack.c.l.b16 %v3441
    %v3532 = vunpack.c.h.b16 %v3441
    %v3533 = vunpack.c.l.b16 %v3442
    %v3534 = vunpack.c.h.b16 %v3442
    %v3535 = vunpack.c.l.b16 %v3443
    %v3536 = vunpack.c.h.b16 %v3443
    %v3537 = vunpack.c.l.b16 %v3444
    %v3538 = vunpack.c.h.b16 %v3444
    %v3539 = vunpack.c.l.b16 %v3445
    %v3540 = vunpack.c.h.b16 %v3445
    %v3541 = vunpack.c.l.b16 %v3446
    %v3542 = vunpack.c.h.b16 %v3446
    %v3543 = vpack.c.b16 %v3483, %v3479
    %v3544 = vpack.c.b16 %v3484, %v3480
    %v3545 = vpack.c.b16 %v3485, %v3481
    %v3546 = vpack.c.b16 %v3486, %v3482
    %v3547 = vpack.c.b16 %v3491, %v3487
    %v3548 = vpack.c.b16 %v3492, %v3488
    %v3549 = vpack.c.b16 %v3493, %v3489
    %v3550 = vpack.c.b16 %v3494, %v3490
    %v3551 = vpack.c.b16 %v3499, %v3495
    %v3552 = vpack.c.b16 %v3500, %v3496
    %v3553 = vpack.c.b16 %v3501, %v3497
    %v3554 = vpack.c.b16 %v3502, %v3498
    %v3555 = vpack.c.b16 %v3507, %v3503
    %v3556 = vpack.c.b16 %v3508, %v3504
    %v3557 = vpack.c.b16 %v3509, %v3505
    %v3558 = vpack.c.b16 %v3510, %v3506
    %v3559 = vpack.c.b16 %v3515, %v3511
    %v3560 = vpack.c.b16 %v3516, %v3512
    %v3561 = vpack.c.b16 %v3517, %v3513
    %v3562 = vpack.c.b16 %v3518, %v3514
    %v3563 = vpack.c.b16 %v3523, %v3519
    %v3564 = vpack.c.b16 %v3524, %v3520
    %v3565 = vpack.c.b16 %v3525, %v3521
    %v3566 = vpack.c.b16 %v3526, %v3522
    %v3567 = vpack.c.b16 %v3531, %v3527
    %v3568 = vpack.c.b16 %v3532, %v3528
    %v3569 = vpack.c.b16 %v3533, %v3529
    %v3570 = vpack.c.b16 %v3534, %v3530
    %v3571 = vpack.c.b16 %v3539, %v3535
    %v3572 = vpack.c.b16 %v3540, %v3536
    %v3573 = vpack.c.b16 %v3541, %v3537
    %v3574 = vpack.c.b16 %v3542, %v3538
    %3607 = vmatprep.subr.bf16.mxu0 %v3544
    %3608 = vmatpush1.bf16.msra.mxu0 %v3543
    %3609 = vmatprep.subr.bf16.mxu0 %v3548
    %3610 = vmatpush1.bf16.msra.mxu0 %v3547
    %3611 = vmatprep.subr.bf16.mxu0 %v3552
    %3612 = vmatpush1.bf16.msra.mxu0 %v3551
    %3613 = vmatprep.subr.bf16.mxu0 %v3556
    %3614 = vmatpush1.bf16.msra.mxu0 %v3555
    %3615 = vmatprep.subr.bf16.mxu0 %v3560
    %3616 = vmatpush1.bf16.msra.mxu0 %v3559
    %3617 = vmatprep.subr.bf16.mxu0 %v3564
    %3618 = vmatpush1.bf16.msra.mxu0 %v3563
    %3619 = vmatprep.subr.bf16.mxu0 %v3568
    %3620 = vmatpush1.bf16.msra.mxu0 %v3567
    %3621 = vmatprep.subr.bf16.mxu0 %v3572
    %3622 = vmatpush1.bf16.msra.mxu0 %v3571
    %3623 = vmatprep.subr.bf16.mxu0 0
    %3624 = vmatpush1.bf16.msra.mxu0 0
    %3625 = vmatprep.subr.bf16.mxu0 0
    %3626 = vmatpush1.bf16.msra.mxu0 0
    %3627 = vmatprep.subr.bf16.mxu0 0
    %3628 = vmatpush1.bf16.msra.mxu0 0
    %3629 = vmatprep.subr.bf16.mxu0 0
    %3630 = vmatpush1.bf16.msra.mxu0 0
    %3631 = vmatprep.subr.bf16.mxu0 0
    %3632 = vmatpush1.bf16.msra.mxu0 0
    %3633 = vmatprep.subr.bf16.mxu0 0
    %3634 = vmatpush1.bf16.msra.mxu0 0
    %3635 = vmatprep.subr.bf16.mxu0 0
    %3636 = vmatpush1.bf16.msra.mxu0 0
    %3637 = vmatprep.subr.bf16.mxu0 0
    %3638 = vmatpush1.bf16.msra.mxu0 0
    %3639 = vmatprep.mubr.bf16.mxu0 0
    %3640 = vmatmul.mubr.bf16.gmra.mrb[0].mxu0 %v3414
    %v3641 = vpop.f32.mrb[0].mxu0
    %v3642 = vadd.f32 %v570, %v3641
    %v3643 = vpop.f32.mrb[0].mxu0
    %v3644 = vadd.f32 %v574, %v3643
    %v3645 = vpop.f32.mrb[0].mxu0
    %v3646 = vpop.f32.mrb[0].mxu0
    %3647 = vdwg.mxu0
    %3648 = vmatprep.subr.bf16.mxu0 %v3546
    %3649 = vmatpush1.bf16.msra.mxu0 %v3545
    %3650 = vmatprep.subr.bf16.mxu0 %v3550
    %3651 = vmatpush1.bf16.msra.mxu0 %v3549
    %3652 = vmatprep.subr.bf16.mxu0 %v3554
    %3653 = vmatpush1.bf16.msra.mxu0 %v3553
    %3654 = vmatprep.subr.bf16.mxu0 %v3558
    %3655 = vmatpush1.bf16.msra.mxu0 %v3557
    %3656 = vmatprep.subr.bf16.mxu0 %v3562
    %3657 = vmatpush1.bf16.msra.mxu0 %v3561
    %3658 = vmatprep.subr.bf16.mxu0 %v3566
    %3659 = vmatpush1.bf16.msra.mxu0 %v3565
    %3660 = vmatprep.subr.bf16.mxu0 %v3570
    %3661 = vmatpush1.bf16.msra.mxu0 %v3569
    %3662 = vmatprep.subr.bf16.mxu0 %v3574
    %3663 = vmatpush1.bf16.msra.mxu0 %v3573
    %3664 = vmatprep.subr.bf16.mxu0 0
    %3665 = vmatpush1.bf16.msra.mxu0 0
    %3666 = vmatprep.subr.bf16.mxu0 0
    %3667 = vmatpush1.bf16.msra.mxu0 0
    %3668 = vmatprep.subr.bf16.mxu0 0
    %3669 = vmatpush1.bf16.msra.mxu0 0
    %3670 = vmatprep.subr.bf16.mxu0 0
    %3671 = vmatpush1.bf16.msra.mxu0 0
    %3672 = vmatprep.subr.bf16.mxu0 0
    %3673 = vmatpush1.bf16.msra.mxu0 0
    %3674 = vmatprep.subr.bf16.mxu0 0
    %3675 = vmatpush1.bf16.msra.mxu0 0
    %3676 = vmatprep.subr.bf16.mxu0 0
    %3677 = vmatpush1.bf16.msra.mxu0 0
    %3678 = vmatprep.subr.bf16.mxu0 0
    %3679 = vmatpush1.bf16.msra.mxu0 0
    %3680 = vmatprep.mubr.bf16.mxu0 0
    %3681 = vmatmul.mubr.bf16.gmra.mrb[0].mxu0 %v3414
    %v3682 = vpop.f32.mrb[0].mxu0
    %v3683 = vadd.f32 %v578, %v3682
    %v3684 = vpop.f32.mrb[0].mxu0
    %v3685 = vadd.f32 %v582, %v3684
    %v3686 = vpop.f32.mrb[0].mxu0
    %v3687 = vpop.f32.mrb[0].mxu0
    %3688 = vdwg.mxu0
    %v3689 = vmul.f32 %v3642, 0.5
    %v3690 = vtanh.pop %v3689
    %v3691 = vmul.f32 %v3690, 0.5
    %v3692 = vadd.f32 %v3691, 0.5
    %v3693 = vmul.f32 %v3644, 0.5
    %v3694 = vtanh.pop %v3693
    %v3695 = vmul.f32 %v3694, 0.5
    %v3696 = vadd.f32 %v3695, 0.5
    %v3697 = vtanh.pop %v3683
    %v3698 = vmul.f32 %v3685, 0.5
    %v3699 = vtanh.pop %v3698
    %v3700 = vmul.f32 %v3699, 0.5
    %v3701 = vadd.f32 %v3700, 0.5
    %v3702 = vmul.f32 %v3696, %v3410
    %v3703 = vmul.f32 %v3692, %v3697
    %v3704 = vadd.f32 %v3702, %v3703
    %v3705 = vtanh.pop %v3704
    %v3706 = vmul.f32 %v3701, %v3705
    %3707 = vst [vmem:[#allocation3 + $0x8] sm:$0xff] %v3706
    %v3708 = vpack.c.bf16 %v3706, %v3706
    %v3709 = vld [vmem:[#allocation12] sm:$0xff]
    %v3710 = vld [vmem:[#allocation12 + $0x8] sm:$0xff]
    %v3711 = vld [vmem:[#allocation12 + $0x10] sm:$0xff]
    %v3712 = vld [vmem:[#allocation12 + $0x18] sm:$0xff]
    %v3713 = vld [vmem:[#allocation12 + $0x20] sm:$0xff]
    %v3714 = vld [vmem:[#allocation12 + $0x28] sm:$0xff]
    %v3715 = vld [vmem:[#allocation12 + $0x30] sm:$0xff]
    %v3716 = vld [vmem:[#allocation12 + $0x38] sm:$0xff]
    %v3717 = vld [vmem:[#allocation12 + $0x40] sm:$0xff]
    %v3718 = vld [vmem:[#allocation12 + $0x48] sm:$0xff]
    %v3719 = vld [vmem:[#allocation12 + $0x50] sm:$0xff]
    %v3720 = vld [vmem:[#allocation12 + $0x58] sm:$0xff]
    %v3721 = vld [vmem:[#allocation12 + $0x60] sm:$0xff]
    %v3722 = vld [vmem:[#allocation12 + $0x68] sm:$0xff]
    %v3723 = vld [vmem:[#allocation12 + $0x70] sm:$0xff]
    %v3724 = vld [vmem:[#allocation12 + $0x78] sm:$0xff]
    %v3725 = vld [vmem:[#allocation12 + $0x80] sm:$0xff]
    %v3726 = vld [vmem:[#allocation12 + $0x88] sm:$0xff]
    %v3727 = vld [vmem:[#allocation12 + $0x90] sm:$0xff]
    %v3728 = vld [vmem:[#allocation12 + $0x98] sm:$0xff]
    %v3729 = vld [vmem:[#allocation12 + $0xa0] sm:$0xff]
    %v3730 = vld [vmem:[#allocation12 + $0xa8] sm:$0xff]
    %v3731 = vld [vmem:[#allocation12 + $0xb0] sm:$0xff]
    %v3732 = vld [vmem:[#allocation12 + $0xb8] sm:$0xff]
    %v3733 = vld [vmem:[#allocation12 + $0xc0] sm:$0xff]
    %v3734 = vld [vmem:[#allocation12 + $0xc8] sm:$0xff]
    %v3735 = vld [vmem:[#allocation12 + $0xd0] sm:$0xff]
    %v3736 = vld [vmem:[#allocation12 + $0xd8] sm:$0xff]
    %v3737 = vld [vmem:[#allocation12 + $0xe0] sm:$0xff]
    %v3738 = vld [vmem:[#allocation12 + $0xe8] sm:$0xff]
    %v3739 = vld [vmem:[#allocation12 + $0xf0] sm:$0xff]
    %v3740 = vld [vmem:[#allocation12 + $0xf8] sm:$0xff]
    %v3773 = vunpack.c.l.b16 %v3709
    %v3774 = vunpack.c.h.b16 %v3709
    %v3775 = vunpack.c.l.b16 %v3710
    %v3776 = vunpack.c.h.b16 %v3710
    %v3777 = vunpack.c.l.b16 %v3711
    %v3778 = vunpack.c.h.b16 %v3711
    %v3779 = vunpack.c.l.b16 %v3712
    %v3780 = vunpack.c.h.b16 %v3712
    %v3781 = vunpack.c.l.b16 %v3713
    %v3782 = vunpack.c.h.b16 %v3713
    %v3783 = vunpack.c.l.b16 %v3714
    %v3784 = vunpack.c.h.b16 %v3714
    %v3785 = vunpack.c.l.b16 %v3715
    %v3786 = vunpack.c.h.b16 %v3715
    %v3787 = vunpack.c.l.b16 %v3716
    %v3788 = vunpack.c.h.b16 %v3716
    %v3789 = vunpack.c.l.b16 %v3717
    %v3790 = vunpack.c.h.b16 %v3717
    %v3791 = vunpack.c.l.b16 %v3718
    %v3792 = vunpack.c.h.b16 %v3718
    %v3793 = vunpack.c.l.b16 %v3719
    %v3794 = vunpack.c.h.b16 %v3719
    %v3795 = vunpack.c.l.b16 %v3720
    %v3796 = vunpack.c.h.b16 %v3720
    %v3797 = vunpack.c.l.b16 %v3721
    %v3798 = vunpack.c.h.b16 %v3721
    %v3799 = vunpack.c.l.b16 %v3722
    %v3800 = vunpack.c.h.b16 %v3722
    %v3801 = vunpack.c.l.b16 %v3723
    %v3802 = vunpack.c.h.b16 %v3723
    %v3803 = vunpack.c.l.b16 %v3724
    %v3804 = vunpack.c.h.b16 %v3724
    %v3805 = vunpack.c.l.b16 %v3725
    %v3806 = vunpack.c.h.b16 %v3725
    %v3807 = vunpack.c.l.b16 %v3726
    %v3808 = vunpack.c.h.b16 %v3726
    %v3809 = vunpack.c.l.b16 %v3727
    %v3810 = vunpack.c.h.b16 %v3727
    %v3811 = vunpack.c.l.b16 %v3728
    %v3812 = vunpack.c.h.b16 %v3728
    %v3813 = vunpack.c.l.b16 %v3729
    %v3814 = vunpack.c.h.b16 %v3729
    %v3815 = vunpack.c.l.b16 %v3730
    %v3816 = vunpack.c.h.b16 %v3730
    %v3817 = vunpack.c.l.b16 %v3731
    %v3818 = vunpack.c.h.b16 %v3731
    %v3819 = vunpack.c.l.b16 %v3732
    %v3820 = vunpack.c.h.b16 %v3732
    %v3821 = vunpack.c.l.b16 %v3733
    %v3822 = vunpack.c.h.b16 %v3733
    %v3823 = vunpack.c.l.b16 %v3734
    %v3824 = vunpack.c.h.b16 %v3734
    %v3825 = vunpack.c.l.b16 %v3735
    %v3826 = vunpack.c.h.b16 %v3735
    %v3827 = vunpack.c.l.b16 %v3736
    %v3828 = vunpack.c.h.b16 %v3736
    %v3829 = vunpack.c.l.b16 %v3737
    %v3830 = vunpack.c.h.b16 %v3737
    %v3831 = vunpack.c.l.b16 %v3738
    %v3832 = vunpack.c.h.b16 %v3738
    %v3833 = vunpack.c.l.b16 %v3739
    %v3834 = vunpack.c.h.b16 %v3739
    %v3835 = vunpack.c.l.b16 %v3740
    %v3836 = vunpack.c.h.b16 %v3740
    %v3837 = vpack.c.b16 %v3777, %v3773
    %v3838 = vpack.c.b16 %v3778, %v3774
    %v3839 = vpack.c.b16 %v3779, %v3775
    %v3840 = vpack.c.b16 %v3780, %v3776
    %v3841 = vpack.c.b16 %v3785, %v3781
    %v3842 = vpack.c.b16 %v3786, %v3782
    %v3843 = vpack.c.b16 %v3787, %v3783
    %v3844 = vpack.c.b16 %v3788, %v3784
    %v3845 = vpack.c.b16 %v3793, %v3789
    %v3846 = vpack.c.b16 %v3794, %v3790
    %v3847 = vpack.c.b16 %v3795, %v3791
    %v3848 = vpack.c.b16 %v3796, %v3792
    %v3849 = vpack.c.b16 %v3801, %v3797
    %v3850 = vpack.c.b16 %v3802, %v3798
    %v3851 = vpack.c.b16 %v3803, %v3799
    %v3852 = vpack.c.b16 %v3804, %v3800
    %v3853 = vpack.c.b16 %v3809, %v3805
    %v3854 = vpack.c.b16 %v3810, %v3806
    %v3855 = vpack.c.b16 %v3811, %v3807
    %v3856 = vpack.c.b16 %v3812, %v3808
    %v3857 = vpack.c.b16 %v3817, %v3813
    %v3858 = vpack.c.b16 %v3818, %v3814
    %v3859 = vpack.c.b16 %v3819, %v3815
    %v3860 = vpack.c.b16 %v3820, %v3816
    %v3861 = vpack.c.b16 %v3825, %v3821
    %v3862 = vpack.c.b16 %v3826, %v3822
    %v3863 = vpack.c.b16 %v3827, %v3823
    %v3864 = vpack.c.b16 %v3828, %v3824
    %v3865 = vpack.c.b16 %v3833, %v3829
    %v3866 = vpack.c.b16 %v3834, %v3830
    %v3867 = vpack.c.b16 %v3835, %v3831
    %v3868 = vpack.c.b16 %v3836, %v3832
    %3901 = vmatprep.subr.bf16.mxu0 %v3838
    %3902 = vmatpush1.bf16.msra.mxu0 %v3837
    %3903 = vmatprep.subr.bf16.mxu0 %v3842
    %3904 = vmatpush1.bf16.msra.mxu0 %v3841
    %3905 = vmatprep.subr.bf16.mxu0 %v3846
    %3906 = vmatpush1.bf16.msra.mxu0 %v3845
    %3907 = vmatprep.subr.bf16.mxu0 %v3850
    %3908 = vmatpush1.bf16.msra.mxu0 %v3849
    %3909 = vmatprep.subr.bf16.mxu0 %v3854
    %3910 = vmatpush1.bf16.msra.mxu0 %v3853
    %3911 = vmatprep.subr.bf16.mxu0 %v3858
    %3912 = vmatpush1.bf16.msra.mxu0 %v3857
    %3913 = vmatprep.subr.bf16.mxu0 %v3862
    %3914 = vmatpush1.bf16.msra.mxu0 %v3861
    %3915 = vmatprep.subr.bf16.mxu0 %v3866
    %3916 = vmatpush1.bf16.msra.mxu0 %v3865
    %3917 = vmatprep.subr.bf16.mxu0 0
    %3918 = vmatpush1.bf16.msra.mxu0 0
    %3919 = vmatprep.subr.bf16.mxu0 0
    %3920 = vmatpush1.bf16.msra.mxu0 0
    %3921 = vmatprep.subr.bf16.mxu0 0
    %3922 = vmatpush1.bf16.msra.mxu0 0
    %3923 = vmatprep.subr.bf16.mxu0 0
    %3924 = vmatpush1.bf16.msra.mxu0 0
    %3925 = vmatprep.subr.bf16.mxu0 0
    %3926 = vmatpush1.bf16.msra.mxu0 0
    %3927 = vmatprep.subr.bf16.mxu0 0
    %3928 = vmatpush1.bf16.msra.mxu0 0
    %3929 = vmatprep.subr.bf16.mxu0 0
    %3930 = vmatpush1.bf16.msra.mxu0 0
    %3931 = vmatprep.subr.bf16.mxu0 0
    %3932 = vmatpush1.bf16.msra.mxu0 0
    %3933 = vmatprep.mubr.bf16.mxu0 0
    %3934 = vmatmul.mubr.bf16.gmra.mrb[0].mxu0 %v3708
    %v3935 = vpop.f32.mrb[0].mxu0
    %v3936 = vadd.f32 %v570, %v3935
    %v3937 = vpop.f32.mrb[0].mxu0
    %v3938 = vadd.f32 %v574, %v3937
    %v3939 = vpop.f32.mrb[0].mxu0
    %v3940 = vpop.f32.mrb[0].mxu0
    %3941 = vdwg.mxu0
    %3942 = vmatprep.subr.bf16.mxu0 %v3840
    %3943 = vmatpush1.bf16.msra.mxu0 %v3839
    %3944 = vmatprep.subr.bf16.mxu0 %v3844
    %3945 = vmatpush1.bf16.msra.mxu0 %v3843
    %3946 = vmatprep.subr.bf16.mxu0 %v3848
    %3947 = vmatpush1.bf16.msra.mxu0 %v3847
    %3948 = vmatprep.subr.bf16.mxu0 %v3852
    %3949 = vmatpush1.bf16.msra.mxu0 %v3851
    %3950 = vmatprep.subr.bf16.mxu0 %v3856
    %3951 = vmatpush1.bf16.msra.mxu0 %v3855
    %3952 = vmatprep.subr.bf16.mxu0 %v3860
    %3953 = vmatpush1.bf16.msra.mxu0 %v3859
    %3954 = vmatprep.subr.bf16.mxu0 %v3864
    %3955 = vmatpush1.bf16.msra.mxu0 %v3863
    %3956 = vmatprep.subr.bf16.mxu0 %v3868
    %3957 = vmatpush1.bf16.msra.mxu0 %v3867
    %3958 = vmatprep.subr.bf16.mxu0 0
    %3959 = vmatpush1.bf16.msra.mxu0 0
    %3960 = vmatprep.subr.bf16.mxu0 0
    %3961 = vmatpush1.bf16.msra.mxu0 0
    %3962 = vmatprep.subr.bf16.mxu0 0
    %3963 = vmatpush1.bf16.msra.mxu0 0
    %3964 = vmatprep.subr.bf16.mxu0 0
    %3965 = vmatpush1.bf16.msra.mxu0 0
    %3966 = vmatprep.subr.bf16.mxu0 0
    %3967 = vmatpush1.bf16.msra.mxu0 0
    %3968 = vmatprep.subr.bf16.mxu0 0
    %3969 = vmatpush1.bf16.msra.mxu0 0
    %3970 = vmatprep.subr.bf16.mxu0 0
    %3971 = vmatpush1.bf16.msra.mxu0 0
    %3972 = vmatprep.subr.bf16.mxu0 0
    %3973 = vmatpush1.bf16.msra.mxu0 0
    %3974 = vmatprep.mubr.bf16.mxu0 0
    %3975 = vmatmul.mubr.bf16.gmra.mrb[0].mxu0 %v3708
    %v3976 = vpop.f32.mrb[0].mxu0
    %v3977 = vadd.f32 %v578, %v3976
    %v3978 = vpop.f32.mrb[0].mxu0
    %v3979 = vadd.f32 %v582, %v3978
    %v3980 = vpop.f32.mrb[0].mxu0
    %v3981 = vpop.f32.mrb[0].mxu0
    %3982 = vdwg.mxu0
    %v3983 = vmul.f32 %v3936, 0.5
    %v3984 = vtanh.pop %v3983
    %v3985 = vmul.f32 %v3984, 0.5
    %v3986 = vadd.f32 %v3985, 0.5
    %v3987 = vmul.f32 %v3938, 0.5
    %v3988 = vtanh.pop %v3987
    %v3989 = vmul.f32 %v3988, 0.5
    %v3990 = vadd.f32 %v3989, 0.5
    %v3991 = vtanh.pop %v3977
    %v3992 = vmul.f32 %v3979, 0.5
    %v3993 = vtanh.pop %v3992
    %v3994 = vmul.f32 %v3993, 0.5
    %v3995 = vadd.f32 %v3994, 0.5
    %v3996 = vmul.f32 %v3990, %v3704
    %v3997 = vmul.f32 %v3986, %v3991
    %v3998 = vadd.f32 %v3996, %v3997
    %v3999 = vtanh.pop %v3998
    %v4000 = vmul.f32 %v3995, %v3999
    %4001 = vst [vmem:[#allocation3] sm:$0xff] %v4000
    %v4002 = vld [vmem:[#allocation3] sm:$0xff]
    %v4003 = vld [vmem:[#allocation3 + $0x8] sm:$0xff]
    %v4004 = vld [vmem:[#allocation3 + $0x10] sm:$0xff]
    %v4005 = vld [vmem:[#allocation3 + $0x18] sm:$0xff]
    %v4006 = vld [vmem:[#allocation3 + $0x20] sm:$0xff]
    %v4007 = vld [vmem:[#allocation3 + $0x28] sm:$0xff]
    %v4008 = vld [vmem:[#allocation3 + $0x30] sm:$0xff]
    %v4009 = vld [vmem:[#allocation3 + $0x38] sm:$0xff]
    %v4010 = vpack.c.bf16 %v4003, %v4002
    %v4011 = vpack.c.bf16 %v4005, %v4004
    %v4012 = vpack.c.bf16 %v4007, %v4006
    %v4013 = vpack.c.bf16 %v4009, %v4008
    %v4014 = vld [vmem:[#allocation13] sm:$0xf]
    %v4015 = vld [vmem:[#allocation13 + $0x4] sm:$0xf]
    %v4016 = vld [vmem:[#allocation13 + $0x8] sm:$0xf]
    %v4017 = vld [vmem:[#allocation13 + $0xc] sm:$0xf]
    %v4018 = vld [vmem:[#allocation13 + $0x10] sm:$0xf]
    %v4019 = vld [vmem:[#allocation13 + $0x14] sm:$0xf]
    %v4020 = vld [vmem:[#allocation13 + $0x18] sm:$0xf]
    %v4021 = vld [vmem:[#allocation13 + $0x1c] sm:$0xf]
    %v4022 = vld [vmem:[#allocation13 + $0x20] sm:$0xf]
    %v4023 = vld [vmem:[#allocation13 + $0x24] sm:$0xf]
    %v4024 = vld [vmem:[#allocation13 + $0x28] sm:$0xf]
    %v4025 = vld [vmem:[#allocation13 + $0x2c] sm:$0xf]
    %v4026 = vld [vmem:[#allocation13 + $0x30] sm:$0xf]
    %v4027 = vld [vmem:[#allocation13 + $0x34] sm:$0xf]
    %v4028 = vld [vmem:[#allocation13 + $0x38] sm:$0xf]
    %v4029 = vld [vmem:[#allocation13 + $0x3c] sm:$0xf]
    %v4030 = vld [vmem:[%s9] sm:$0x1]
    %v4032 = vlaneseq
    %v4033 = vshrl.u32 %v4032, 7
    %v4034 = vsub.s32 0, %v4033
    %v4035 = vrot.slane %v4030, %v4034
    %v4053 = vunpack.c.l.b16 %v4014
    %v4054 = vunpack.c.l.b16 %v4015
    %v4055 = vunpack.c.l.b16 %v4016
    %v4056 = vunpack.c.l.b16 %v4017
    %v4057 = vunpack.c.l.b16 %v4018
    %v4058 = vunpack.c.l.b16 %v4019
    %v4059 = vunpack.c.l.b16 %v4020
    %v4060 = vunpack.c.l.b16 %v4021
    %v4061 = vunpack.c.l.b16 %v4022
    %v4062 = vunpack.c.l.b16 %v4023
    %v4063 = vunpack.c.l.b16 %v4024
    %v4064 = vunpack.c.l.b16 %v4025
    %v4065 = vunpack.c.l.b16 %v4026
    %v4066 = vunpack.c.l.b16 %v4027
    %v4067 = vunpack.c.l.b16 %v4028
    %v4068 = vunpack.c.l.b16 %v4029
    %v4069 = vpack.c.b16 %v4054, %v4053
    %v4070 = vpack.c.b16 %v4056, %v4055
    %v4071 = vpack.c.b16 %v4058, %v4057
    %v4072 = vpack.c.b16 %v4060, %v4059
    %v4073 = vpack.c.b16 %v4062, %v4061
    %v4074 = vpack.c.b16 %v4064, %v4063
    %v4075 = vpack.c.b16 %v4066, %v4065
    %v4076 = vpack.c.b16 %v4068, %v4067
    %4085 = vmatprep.subr.bf16.mxu0 0
    %4086 = vmatpush1.bf16.msra.mxu0 %v4069
    %4087 = vmatprep.subr.bf16.mxu0 0
    %4088 = vmatpush1.bf16.msra.mxu0 %v4070
    %4089 = vmatprep.subr.bf16.mxu0 0
    %4090 = vmatpush1.bf16.msra.mxu0 %v4071
    %4091 = vmatprep.subr.bf16.mxu0 0
    %4092 = vmatpush1.bf16.msra.mxu0 %v4072
    %4093 = vmatprep.subr.bf16.mxu0 0
    %4094 = vmatpush1.bf16.msra.mxu0 %v4073
    %4095 = vmatprep.subr.bf16.mxu0 0
    %4096 = vmatpush1.bf16.msra.mxu0 %v4074
    %4097 = vmatprep.subr.bf16.mxu0 0
    %4098 = vmatpush1.bf16.msra.mxu0 %v4075
    %4099 = vmatprep.subr.bf16.mxu0 0
    %4100 = vmatpush1.bf16.msra.mxu0 %v4076
    %4101 = vmatprep.subr.bf16.mxu0 0
    %4102 = vmatpush1.bf16.msra.mxu0 0
    %4103 = vmatprep.subr.bf16.mxu0 0
    %4104 = vmatpush1.bf16.msra.mxu0 0
    %4105 = vmatprep.subr.bf16.mxu0 0
    %4106 = vmatpush1.bf16.msra.mxu0 0
    %4107 = vmatprep.subr.bf16.mxu0 0
    %4108 = vmatpush1.bf16.msra.mxu0 0
    %4109 = vmatprep.subr.bf16.mxu0 0
    %4110 = vmatpush1.bf16.msra.mxu0 0
    %4111 = vmatprep.subr.bf16.mxu0 0
    %4112 = vmatpush1.bf16.msra.mxu0 0
    %4113 = vmatprep.subr.bf16.mxu0 0
    %4114 = vmatpush1.bf16.msra.mxu0 0
    %4115 = vmatprep.subr.bf16.mxu0 0
    %4116 = vmatpush1.bf16.msra.mxu0 0
    %4117 = vmatprep.mubr.bf16.mxu0 0
    %4118 = vmatmul.mubr.bf16.gmra.mrb[0].mxu0 %v4010
    %v4119 = vpop.f32.mrb[0].mxu0
    %v4120 = vadd.f32 %v4035, %v4119
    %v4121 = vpop.f32.mrb[0].mxu0
    %v4122 = vpop.f32.mrb[0].mxu0
    %v4123 = vadd.f32 %v4035, %v4122
    %v4124 = vpop.f32.mrb[0].mxu0
    %4125 = vmatprep.mubr.bf16.mxu0 0
    %4126 = vmatmul.mubr.bf16.gmra.mrb[0].mxu0 %v4011
    %v4127 = vpop.f32.mrb[0].mxu0
    %v4128 = vadd.f32 %v4035, %v4127
    %v4129 = vpop.f32.mrb[0].mxu0
    %v4130 = vpop.f32.mrb[0].mxu0
    %v4131 = vadd.f32 %v4035, %v4130
    %v4132 = vpop.f32.mrb[0].mxu0
    %4133 = vmatprep.mubr.bf16.mxu0 0
    %4134 = vmatmul.mubr.bf16.gmra.mrb[0].mxu0 %v4012
    %v4135 = vpop.f32.mrb[0].mxu0
    %v4136 = vadd.f32 %v4035, %v4135
    %v4137 = vpop.f32.mrb[0].mxu0
    %v4138 = vpop.f32.mrb[0].mxu0
    %v4139 = vadd.f32 %v4035, %v4138
    %v4140 = vpop.f32.mrb[0].mxu0
    %4141 = vmatprep.mubr.bf16.mxu0 0
    %4142 = vmatmul.mubr.bf16.gmra.mrb[0].mxu0 %v4013
    %v4143 = vpop.f32.mrb[0].mxu0
    %v4144 = vadd.f32 %v4035, %v4143
    %v4145 = vpop.f32.mrb[0].mxu0
    %v4146 = vpop.f32.mrb[0].mxu0
    %v4147 = vadd.f32 %v4035, %v4146
    %v4148 = vpop.f32.mrb[0].mxu0
    %4149 = vdwg.mxu0
    %4150 = vst [vmem:[#allocation15] sm:$0xff] %v4120
    %4151 = vst [vmem:[#allocation15 + $0x8] sm:$0xff] %v4123
    %4152 = vst [vmem:[#allocation15 + $0x10] sm:$0xff] %v4128
    %4153 = vst [vmem:[#allocation15 + $0x18] sm:$0xff] %v4131
    %4154 = vst [vmem:[#allocation15 + $0x20] sm:$0xff] %v4136
    %4155 = vst [vmem:[#allocation15 + $0x28] sm:$0xff] %v4139
    %4156 = vst [vmem:[#allocation15 + $0x30] sm:$0xff] %v4144
    %4157 = vst [vmem:[#allocation15 + $0x38] sm:$0xff] %v4147
    // Predicated region
    $region66: #{tpu_custom_call.1} parent=1 // pred_check
      _
    $region67: #{tpu_custom_call.1} parent=1 // pred_check_branch
      %4159 = sbr.rel (0) target = $region69
    $region68: #{tpu_custom_call.1} parent=1 // pred_region
      %s4161 = ssub.s32 1024, 1024
      %4162 = vsyncadd [#allocation6], %s4161
      %s4163 = sshll.u32 [#allocation15], 4
      %s4164 = int_to_ptr.vmem [resolvable:$true] %s4163
      %4169 = dma.vmem_to_hbm [thread:$0]  %s4164, 1024, %s10, [#allocation6], 128, 128, 8
    $region69: #{tpu_custom_call.1} parent=1 // pred_fallthru
      _
    // Predicated region
    $region70: #{tpu_custom_call.1} parent=1 // pred_check
      _
    $region71: #{tpu_custom_call.1} parent=1 // pred_check_branch
      %4171 = sbr.rel (0) target = $region73
    $region72: #{tpu_custom_call.1} parent=1 // pred_region
      %4172 = dma.done [#allocation6], 1024
    $region73: #{tpu_custom_call.1} parent=1 // pred_fallthru
      _
    %4173 = vsyncpa [#allocation5], 1
    %4174 = vsyncpa [#allocation8], 1
    %4175 = vsyncpa [#allocation11], 1
    %4176 = vsyncpa [#allocation14], 1
    %4177 = vsyncpa [#allocation6], 1

</llo_original>
